<compile_context>
chip_gen: v5e
topology: v5e:2x2
jax: 0.10.0
libtpu: 0.0.40
codegen_flags: <defaults>
</compile_context>

<pallas_src>
import math

import numpy as np
import jax
import jax.numpy as jnp
from jax import lax
from jax.experimental import pallas as pl
from jax.experimental.pallas import tpu as pltpu


# ----------------------------------------------------------------------------
# Fused kernel: rotation head + frequency-domain rotation, bt batches per step,
# all heavy ops batched across the bt tile.
# ----------------------------------------------------------------------------
def _make_fused_kernel(bt, hw):
    def kernel(x_ref, w1_ref, b1_ref, w2_ref, b2_ref, frq_ref, ms_ref, mw_ref,
               wf_ref, out_ref):
        C = w1_ref.shape[1]

        # ---- rotation-parameter head, batched over the whole bt tile -------
        x = x_ref[...]                                        # (C, bt*HW) f32
        if C <= 8:
            # Tiny contraction dim: conv1 as C broadcast-FMA sweeps on the VPU
            # (exact f32; avoids HIGHEST multi-pass MXU + result-FIFO latency,
            # VALU slots are otherwise idle in this kernel).
            h = w1_ref[:, 0:1] * x[0:1, :]
            for c in range(1, C):
                h = h + w1_ref[:, c:c + 1] * x[c:c + 1, :]
        else:
            h = jnp.dot(w1_ref[...], x, precision=lax.Precision.HIGHEST,
                        preferred_element_type=jnp.float32)
        h = jnp.maximum(h + b1_ref[...], 0.0)                 # BN folded + ReLU
        r = jnp.dot(w2_ref[...], h, precision=lax.Precision.HIGHEST,
                    preferred_element_type=jnp.float32) + b2_ref[...]
        # r: (4, bt*HW)

        # ---- per-batch softmax-weighted spatial mean (lane reductions) -----
        rv_cols = []
        for t in range(bt):
            rt = r[:, t * hw:(t + 1) * hw]                    # (4, HW)
            m = jnp.max(rt, axis=-1, keepdims=True)
            e = jnp.exp(rt - m)
            rv_cols.append(jnp.sum(rt * e, axis=-1, keepdims=True)
                           / jnp.sum(e, axis=-1, keepdims=True))
        rv = jnp.concatenate(rv_cols, axis=1)                 # (4, bt) rot_vecs

        # ---- batched Rodrigues column sums ---------------------------------
        kx = rv[0:1, :]
        ky = rv[1:2, :]
        kz = rv[2:3, :]
        ang = rv[3:4, :]
        inv_n = 1.0 / (jnp.sqrt(kx * kx + ky * ky + kz * kz) + 1e-8)
        tin = jnp.tanh(ang) * (math.pi / 4.0) * inv_n         # theta/|k|, (1,bt)
        # column sums of R = I + theta*K (phase only needs f'x+f'y+f'z)
        cx = 1.0 + tin * (kz - ky)
        cy = 1.0 + tin * (kx - kz)
        cz = 1.0 + tin * (ky - kx)

        # ---- batched phase: ONE cos + ONE sin per grid step ----------------
        fx = frq_ref[:, 0:1]                                  # (2K^3, 1)
        fy = frq_ref[:, 1:2]
        fz = frq_ref[:, 2:3]
        arg = (-2.0 * math.pi) * (fx * cx + fy * cy + fz * cz)   # (2K^3, bt)
        pr = jnp.cos(arg)
        pi_ = jnp.sin(arg)

        # ---- phase-scaled IDFT slab + ONE wide MXU matmul / wide store -----
        ms = ms_ref[...]                                      # (2K^3, K^3) bf16
        mw = mw_ref[...]
        # rows [0,K^3): cos*m_re - sin*m_im ; rows [K^3,2K^3): sin*m_re + cos*m_im
        mcols = [pr[:, t:t + 1] * ms + pi_[:, t:t + 1] * mw for t in range(bt)]
        mc = jnp.concatenate(mcols, axis=1)                   # (2K^3, bt*K^3) f32
        out_ref[0] = jnp.dot(wf_ref[...], mc.astype(jnp.bfloat16),
                             preferred_element_type=jnp.float32)
    return kernel


# ----------------------------------------------------------------------------
# Wrapper
# ----------------------------------------------------------------------------
def cross_d_conv_forward(x, params, *, max_batch_tile=32):
    B, C, H, W = x.shape
    O, Ig, K, _, _ = params["weights_3d"].shape
    Hm = params["w1"].shape[0]          # rotation-head hidden width (16)
    R4 = params["w2"].shape[0]          # rotation params (4)
    HW = H * W
    K3 = K * K * K

    # ---- batch-tile selection ----------------------------------------------
    # bt must divide B and stay <= max_batch_tile; prefer keeping the grid
    # length >= 2 so the ("parallel",) batch axis shards over v7x's two
    # TensorCores (v5e/v6e single-TC unaffected).
    divs = [d for d in range(1, min(B, max_batch_tile) + 1) if B % d == 0]
    two_core = [d for d in divs if B // d >= 2]
    bt = max(two_core) if two_core else max(divs)
    G = B // bt
    # x block must stay lane-aligned unless it covers the whole array.
    assert (bt * HW) % 128 == 0 or bt == B, (bt, HW)

    # ---- rotation-head operands: lane-dense (C, B*HW), BN folded into conv1
    x2 = jnp.transpose(x.reshape(B, C, HW).astype(jnp.float32),
                       (1, 0, 2)).reshape(C, B * HW)
    scale = params["bn_gamma"] / jnp.sqrt(params["bn_var"] + 1e-5)
    w1f = (params["w1"] * scale[:, None]).astype(jnp.float32)           # (16, C)
    b1f = ((params["b1"] - params["bn_mean"]) * scale
           + params["bn_beta"]).reshape(Hm, 1).astype(jnp.float32)
    w2 = params["w2"].astype(jnp.float32)                                # (4, 16)
    b2 = params["b2"].reshape(R4, 1).astype(jnp.float32)

    # ---- constant DFT/IDFT matrices & frequency grid (float64 numpy) -------
    idx = np.arange(K)
    tw = 2.0 * np.pi * np.outer(idx, idx) / K
    e_fwd = np.exp(-1j * tw)
    e_inv = np.exp(1j * tw)
    dft = np.einsum("xu,yv,wz->xyzuvw", e_fwd, e_fwd, e_fwd).reshape(K3, K3)
    idft = np.einsum("ux,vy,wz->uvwxyz", e_inv, e_inv, e_inv).reshape(K3, K3) / K3
    m_re = np.real(idft)
    m_im = np.imag(idft)
    # Batch-invariant operands of the final matmul in bf16 (default MXU path
    # truncates them anyway; halves VMEM/DMA and maps natively to v5e's MXU).
    m_stack = jnp.asarray(np.concatenate([m_re, m_im], axis=0), jnp.bfloat16)
    m_swap = jnp.asarray(np.concatenate([-m_im, m_re], axis=0), jnp.bfloat16)

    freq = np.fft.fftfreq(K)
    fxg, fyg, fzg = np.meshgrid(freq, freq, freq, indexing="ij")
    frq1 = np.stack([fxg.reshape(-1), fyg.reshape(-1), fzg.reshape(-1)], axis=1)
    frq2 = jnp.asarray(np.concatenate([frq1, frq1], axis=0), jnp.float32)  # (2K^3,3)

    # TODO(synk): torch.fft.fftn of the static 3D kernel = one-time parameter
    # preprocessing (no Pallas primitive); done as a HIGHEST-precision matmul.
    w3_flat = params["weights_3d"].astype(jnp.float32).reshape(O * Ig, K3)
    wf_re = jnp.dot(w3_flat, jnp.asarray(np.real(dft), jnp.float32),
                    precision=lax.Precision.HIGHEST)
    wf_im = jnp.dot(w3_flat, jnp.asarray(np.imag(dft), jnp.float32),
                    precision=lax.Precision.HIGHEST)
    wf_cat = jnp.concatenate([wf_re, -wf_im], axis=1).astype(jnp.bfloat16)  # (O*Ig,2K^3)

    # ---- explicit scoped-VMEM budget (v7x has only 64 MiB physical) --------
    def _rup(v, m):
        return (v + m - 1) // m * m
    x_blk = _rup(C, 8) * _rup(bt * HW, 128) * 4
    o_blk = _rup(O * Ig, 8) * _rup(bt * K3, 128) * 4
    vmem_limit = int(min(max(4 * (x_blk + o_blk) + (4 << 20), 16 << 20), 48 << 20))

    rotated = pl.pallas_call(
        _make_fused_kernel(bt, HW),
        out_shape=jax.ShapeDtypeStruct((G, O * Ig, bt * K3), jnp.float32),
        grid_spec=pltpu.PrefetchScalarGridSpec(
            num_scalar_prefetch=0,
            grid=(G,),
            in_specs=[
                pl.BlockSpec((C, bt * HW), lambda g: (0, g)),
                pl.BlockSpec((Hm, C), lambda g: (0, 0)),
                pl.BlockSpec((Hm, 1), lambda g: (0, 0)),
                pl.BlockSpec((R4, Hm), lambda g: (0, 0)),
                pl.BlockSpec((R4, 1), lambda g: (0, 0)),
                pl.BlockSpec((2 * K3, 3), lambda g: (0, 0)),
                pl.BlockSpec((2 * K3, K3), lambda g: (0, 0)),
                pl.BlockSpec((2 * K3, K3), lambda g: (0, 0)),
                pl.BlockSpec((O * Ig, 2 * K3), lambda g: (0, 0)),
            ],
            out_specs=pl.BlockSpec((1, O * Ig, bt * K3), lambda g: (g, 0, 0)),
        ),
        compiler_params=pltpu.CompilerParams(
            dimension_semantics=("parallel",),
            vmem_limit_bytes=vmem_limit),
    )(x2, w1f, b1f, w2, b2, frq2, m_stack, m_swap, wf_cat)

    # lane-dense (G, O*Ig, bt*K^3) slab -> (B, O, Ig, K, K, K)  (cheap on host)
    rotated = rotated.reshape(G, O * Ig, bt, K3)
    rotated = jnp.transpose(rotated, (0, 2, 1, 3))
    return rotated.reshape(B, O, Ig, K, K, K)


# ----------------------------------------------------------------------------
# Pure-numpy reference (mirrors the PyTorch module, eval-mode BN), float64
# ----------------------------------------------------------------------------
def reference_forward(x, params):
    x = np.asarray(x, np.float64)
    w1 = np.asarray(params["w1"], np.float64)
    b1 = np.asarray(params["b1"], np.float64)
    w2 = np.asarray(params["w2"], np.float64)
    b2 = np.asarray(params["b2"], np.float64)
    g = np.asarray(params["bn_gamma"], np.float64)
    bt = np.asarray(params["bn_beta"], np.float64)
    mu = np.asarray(params["bn_mean"], np.float64)
    var = np.asarray(params["bn_var"], np.float64)
    w3 = np.asarray(params["weights_3d"], np.float64)

    B, C, H, W = x.shape
    O, Ig, K, _, _ = w3.shape
    xp = x.reshape(B, C, H * W)
    h = np.einsum("oc,bcp->bop", w1, xp) + b1[None, :, None]
    h = (h - mu[None, :, None]) / np.sqrt(var[None, :, None] + 1e-5) * g[None, :, None] + bt[None, :, None]
    h = np.maximum(h, 0.0)
    r = np.einsum("oc,bcp->bop", w2, h) + b2[None, :, None]
    e = np.exp(r - r.max(axis=-1, keepdims=True))
    sw = e / e.sum(axis=-1, keepdims=True)
    rv = (r * sw).sum(axis=-1)
    k = rv[:, 0:3]
    angle = rv[:, 3:4]
    k = k / (np.linalg.norm(k, axis=1, keepdims=True) + 1e-8)
    angle = np.tanh(angle) * (np.pi / 4.0)

    wf = np.fft.fftn(w3, axes=(-3, -2, -1))
    freq = np.fft.fftfreq(K)
    fx, fy, fz = np.meshgrid(freq, freq, freq, indexing="ij")
    kx, ky, kz = k[:, 0], k[:, 1], k[:, 2]
    th = angle[:, 0]
    Ks = np.zeros((B, 3, 3))
    Ks[:, 0, 1] = -kz; Ks[:, 0, 2] = ky
    Ks[:, 1, 0] = kz;  Ks[:, 1, 2] = -kx
    Ks[:, 2, 0] = -ky; Ks[:, 2, 1] = kx
    R = np.eye(3)[None] + th[:, None, None] * Ks

    def bc(v):
        return v[:, None, None, None]

    fpx = fx[None] * bc(R[:, 0, 0]) + fy[None] * bc(R[:, 0, 1]) + fz[None] * bc(R[:, 0, 2])
    fpy = fx[None] * bc(R[:, 1, 0]) + fy[None] * bc(R[:, 1, 1]) + fz[None] * bc(R[:, 1, 2])
    fpz = fx[None] * bc(R[:, 2, 0]) + fy[None] * bc(R[:, 2, 1]) + fz[None] * bc(R[:, 2, 2])
    phase = np.exp(-2j * np.pi * (fpx + fpy + fpz))[:, None, None]
    rot = np.fft.ifftn(wf[None] * phase, axes=(-3, -2, -1)).real
    return rot


if __name__ == "__main__":
    key = jax.random.PRNGKey(0)
    keys = jax.random.split(key, 6)
    B, Cin, H, W = 2, 4, 16, 16
    Cout, K = 8, 3
    fan_out = Cout * K ** 3  # kaiming_normal_(mode='fan_out', relu)

    params = {
        "weights_3d": jax.random.normal(keys[0], (Cout, Cin, K, K, K), jnp.float32)
                      * math.sqrt(2.0 / fan_out),
        "w1": jax.random.normal(keys[1], (16, Cin), jnp.float32) * (1.0 / math.sqrt(Cin)),
        "b1": jax.random.normal(keys[2], (16,), jnp.float32) * 0.1,
        "w2": jax.random.normal(keys[3], (4, 16), jnp.float32) * (1.0 / math.sqrt(16.0)),
        "b2": jax.random.normal(keys[4], (4,), jnp.float32) * 0.1,
        "bn_gamma": jnp.ones((16,), jnp.float32),
        "bn_beta": jnp.zeros((16,), jnp.float32),
        "bn_mean": jnp.zeros((16,), jnp.float32),
        "bn_var": jnp.ones((16,), jnp.float32),
    }
    x = jax.random.normal(keys[5], (B, Cin, H, W), jnp.float32)

    out = jax.jit(cross_d_conv_forward)(x, params)
    out = jax.block_until_ready(out)

    ref = reference_forward(x, params)
    assert out.shape == (B, Cout, Cin, K, K, K), out.shape
    max_err = float(np.max(np.abs(np.asarray(out, np.float64) - ref)))
    # 5e-3 abs tolerance: the final rotated-weights matmul runs with bf16
    # inputs / f32 accumulation; the sensitive rotation-head path (feeding
    # tanh -> phase) stays exact f32 / HIGHEST.
    assert max_err < 5e-3, f"max abs err {max_err}"
    print("KERNEL_OK")
</pallas_src>

<mosaic_0001>
module attributes {stable_mosaic.version = 11 : i64} {
  func.func @kernel(%arg0: i32, %arg1: memref<4x256xf32, #tpu.memory_space<vmem>>, %arg2: memref<16x4xf32, #tpu.memory_space<vmem>>, %arg3: memref<16x1xf32, #tpu.memory_space<vmem>>, %arg4: memref<4x16xf32, #tpu.memory_space<vmem>>, %arg5: memref<4x1xf32, #tpu.memory_space<vmem>>, %arg6: memref<54x3xf32, #tpu.memory_space<vmem>>, %arg7: memref<54x27xbf16, #tpu.memory_space<vmem>>, %arg8: memref<54x27xbf16, #tpu.memory_space<vmem>>, %arg9: memref<32x54xbf16, #tpu.memory_space<vmem>>, %arg10: memref<1x32x27xf32, #tpu.memory_space<vmem>>) attributes {dimension_semantics = [#tpu.dimension_semantics<parallel>], iteration_bounds = array<i64: 2>, scalar_prefetch = 0 : i64, scratch_operands = 0 : i64, tpu.core_type = #tpu.core_type<tc>, window_params = [{transform_indices = @transform_0, window_bounds = array<i64: 4, 256>}, {pipeline_mode = #tpu.pipeline_mode<synchronous>, transform_indices = @transform_1, window_bounds = array<i64: 16, 4>}, {pipeline_mode = #tpu.pipeline_mode<synchronous>, transform_indices = @transform_2, window_bounds = array<i64: 16, 1>}, {pipeline_mode = #tpu.pipeline_mode<synchronous>, transform_indices = @transform_3, window_bounds = array<i64: 4, 16>}, {pipeline_mode = #tpu.pipeline_mode<synchronous>, transform_indices = @transform_4, window_bounds = array<i64: 4, 1>}, {pipeline_mode = #tpu.pipeline_mode<synchronous>, transform_indices = @transform_5, window_bounds = array<i64: 54, 3>}, {pipeline_mode = #tpu.pipeline_mode<synchronous>, transform_indices = @transform_6, window_bounds = array<i64: 54, 27>}, {pipeline_mode = #tpu.pipeline_mode<synchronous>, transform_indices = @transform_7, window_bounds = array<i64: 54, 27>}, {pipeline_mode = #tpu.pipeline_mode<synchronous>, transform_indices = @transform_8, window_bounds = array<i64: 32, 54>}, {transform_indices = @transform_9, window_bounds = array<i64: 1, 32, 27>}]} {
    %c0 = arith.constant 0 : index
    %c0_0 = arith.constant 0 : index
    %0 = vector.load %arg1[%c0, %c0_0] : memref<4x256xf32, #tpu.memory_space<vmem>>, vector<4x256xf32>
    %c0_1 = arith.constant 0 : index
    %c0_2 = arith.constant 0 : index
    %1 = vector.load %arg2[%c0_1, %c0_2] : memref<16x4xf32, #tpu.memory_space<vmem>>, vector<16x1xf32>
    %2 = vector.extract_strided_slice %0 {offsets = [0, 0], sizes = [1, 256], strides = [1, 1]} : vector<4x256xf32> to vector<1x256xf32>
    %3 = vector.broadcast %1 : vector<16x1xf32> to vector<16x256xf32>
    %4 = vector.broadcast %2 : vector<1x256xf32> to vector<16x256xf32>
    %5 = arith.mulf %3, %4 : vector<16x256xf32>
    %c0_3 = arith.constant 0 : index
    %c1 = arith.constant 1 : index
    %6 = vector.load %arg2[%c0_3, %c1] : memref<16x4xf32, #tpu.memory_space<vmem>>, vector<16x1xf32>
    %7 = vector.extract_strided_slice %0 {offsets = [1, 0], sizes = [1, 256], strides = [1, 1]} : vector<4x256xf32> to vector<1x256xf32>
    %8 = vector.broadcast %6 : vector<16x1xf32> to vector<16x256xf32>
    %9 = vector.broadcast %7 : vector<1x256xf32> to vector<16x256xf32>
    %10 = arith.mulf %8, %9 : vector<16x256xf32>
    %11 = arith.addf %5, %10 : vector<16x256xf32>
    %c0_4 = arith.constant 0 : index
    %c2 = arith.constant 2 : index
    %12 = vector.load %arg2[%c0_4, %c2] : memref<16x4xf32, #tpu.memory_space<vmem>>, vector<16x1xf32>
    %13 = vector.extract_strided_slice %0 {offsets = [2, 0], sizes = [1, 256], strides = [1, 1]} : vector<4x256xf32> to vector<1x256xf32>
    %14 = vector.broadcast %12 : vector<16x1xf32> to vector<16x256xf32>
    %15 = vector.broadcast %13 : vector<1x256xf32> to vector<16x256xf32>
    %16 = arith.mulf %14, %15 : vector<16x256xf32>
    %17 = arith.addf %11, %16 : vector<16x256xf32>
    %c0_5 = arith.constant 0 : index
    %c3 = arith.constant 3 : index
    %18 = vector.load %arg2[%c0_5, %c3] : memref<16x4xf32, #tpu.memory_space<vmem>>, vector<16x1xf32>
    %19 = vector.extract_strided_slice %0 {offsets = [3, 0], sizes = [1, 256], strides = [1, 1]} : vector<4x256xf32> to vector<1x256xf32>
    %20 = vector.broadcast %18 : vector<16x1xf32> to vector<16x256xf32>
    %21 = vector.broadcast %19 : vector<1x256xf32> to vector<16x256xf32>
    %22 = arith.mulf %20, %21 : vector<16x256xf32>
    %23 = arith.addf %17, %22 : vector<16x256xf32>
    %c0_6 = arith.constant 0 : index
    %c0_7 = arith.constant 0 : index
    %24 = vector.load %arg3[%c0_6, %c0_7] : memref<16x1xf32, #tpu.memory_space<vmem>>, vector<16x1xf32>
    %25 = vector.broadcast %24 : vector<16x1xf32> to vector<16x256xf32>
    %26 = arith.addf %23, %25 : vector<16x256xf32>
    %cst = arith.constant 0.000000e+00 : f32
    %27 = vector.broadcast %cst : f32 to vector<16x256xf32>
    %28 = arith.maximumf %26, %27 : vector<16x256xf32>
    %c0_8 = arith.constant 0 : index
    %c0_9 = arith.constant 0 : index
    %29 = vector.load %arg4[%c0_8, %c0_9] : memref<4x16xf32, #tpu.memory_space<vmem>>, vector<4x16xf32>
    %cst_10 = arith.constant dense<0.000000e+00> : vector<4x256xf32>
    %30 = tpu.matmul %29, %28, %cst_10 {dimension_numbers = #tpu.dot_dimension_numbers<[1], [0], [0], [1], [0, 0, 1, 1], [], []>, precision = #tpu.contract_precision<fp32>} : vector<4x16xf32>, vector<16x256xf32>, vector<4x256xf32> -> vector<4x256xf32>
    %c0_11 = arith.constant 0 : index
    %c0_12 = arith.constant 0 : index
    %31 = vector.load %arg5[%c0_11, %c0_12] : memref<4x1xf32, #tpu.memory_space<vmem>>, vector<4x1xf32>
    %32 = vector.broadcast %31 : vector<4x1xf32> to vector<4x256xf32>
    %33 = arith.addf %30, %32 : vector<4x256xf32>
    %cst_13 = arith.constant dense<0xFF800000> : vector<4xf32>
    %34 = vector.multi_reduction <maximumf>, %33, %cst_13 [1] : vector<4x256xf32> to vector<4xf32>
    %35 = vector.shape_cast %34 : vector<4xf32> to vector<4x1xf32>
    %36 = vector.broadcast %35 : vector<4x1xf32> to vector<4x256xf32>
    %37 = arith.subf %33, %36 : vector<4x256xf32>
    %38 = math.exp %37 : vector<4x256xf32>
    %39 = arith.mulf %33, %38 : vector<4x256xf32>
    %cst_14 = arith.constant dense<0.000000e+00> : vector<4xf32>
    %40 = vector.multi_reduction <add>, %39, %cst_14 [1] : vector<4x256xf32> to vector<4xf32>
    %41 = vector.shape_cast %40 : vector<4xf32> to vector<4x1xf32>
    %cst_15 = arith.constant dense<0.000000e+00> : vector<4xf32>
    %42 = vector.multi_reduction <add>, %38, %cst_15 [1] : vector<4x256xf32> to vector<4xf32>
    %43 = vector.shape_cast %42 : vector<4xf32> to vector<4x1xf32>
    %44 = arith.divf %41, %43 : vector<4x1xf32>
    %45 = vector.extract_strided_slice %44 {offsets = [0, 0], sizes = [1, 1], strides = [1, 1]} : vector<4x1xf32> to vector<1x1xf32>
    %46 = vector.extract_strided_slice %44 {offsets = [1, 0], sizes = [1, 1], strides = [1, 1]} : vector<4x1xf32> to vector<1x1xf32>
    %47 = vector.extract_strided_slice %44 {offsets = [2, 0], sizes = [1, 1], strides = [1, 1]} : vector<4x1xf32> to vector<1x1xf32>
    %48 = vector.extract_strided_slice %44 {offsets = [3, 0], sizes = [1, 1], strides = [1, 1]} : vector<4x1xf32> to vector<1x1xf32>
    %49 = arith.mulf %45, %45 : vector<1x1xf32>
    %50 = arith.mulf %46, %46 : vector<1x1xf32>
    %51 = arith.addf %49, %50 : vector<1x1xf32>
    %52 = arith.mulf %47, %47 : vector<1x1xf32>
    %53 = arith.addf %51, %52 : vector<1x1xf32>
    %54 = math.sqrt %53 : vector<1x1xf32>
    %cst_16 = arith.constant 9.99999993E-9 : f32
    %55 = vector.broadcast %cst_16 : f32 to vector<1x1xf32>
    %56 = arith.addf %54, %55 : vector<1x1xf32>
    %cst_17 = arith.constant 1.000000e+00 : f32
    %57 = vector.broadcast %cst_17 : f32 to vector<1x1xf32>
    %58 = arith.divf %57, %56 : vector<1x1xf32>
    %59 = math.tanh %48 : vector<1x1xf32>
    %cst_18 = arith.constant 0.785398185 : f32
    %60 = vector.broadcast %cst_18 : f32 to vector<1x1xf32>
    %61 = arith.mulf %59, %60 : vector<1x1xf32>
    %62 = arith.mulf %61, %58 : vector<1x1xf32>
    %63 = arith.subf %47, %46 : vector<1x1xf32>
    %64 = arith.mulf %62, %63 : vector<1x1xf32>
    %cst_19 = arith.constant 1.000000e+00 : f32
    %65 = vector.broadcast %cst_19 : f32 to vector<1x1xf32>
    %66 = arith.addf %65, %64 : vector<1x1xf32>
    %67 = arith.subf %45, %47 : vector<1x1xf32>
    %68 = arith.mulf %62, %67 : vector<1x1xf32>
    %cst_20 = arith.constant 1.000000e+00 : f32
    %69 = vector.broadcast %cst_20 : f32 to vector<1x1xf32>
    %70 = arith.addf %69, %68 : vector<1x1xf32>
    %71 = arith.subf %46, %45 : vector<1x1xf32>
    %72 = arith.mulf %62, %71 : vector<1x1xf32>
    %cst_21 = arith.constant 1.000000e+00 : f32
    %73 = vector.broadcast %cst_21 : f32 to vector<1x1xf32>
    %74 = arith.addf %73, %72 : vector<1x1xf32>
    %c0_22 = arith.constant 0 : index
    %c0_23 = arith.constant 0 : index
    %75 = vector.load %arg6[%c0_22, %c0_23] : memref<54x3xf32, #tpu.memory_space<vmem>>, vector<54x1xf32>
    %c0_24 = arith.constant 0 : index
    %c1_25 = arith.constant 1 : index
    %76 = vector.load %arg6[%c0_24, %c1_25] : memref<54x3xf32, #tpu.memory_space<vmem>>, vector<54x1xf32>
    %c0_26 = arith.constant 0 : index
    %c2_27 = arith.constant 2 : index
    %77 = vector.load %arg6[%c0_26, %c2_27] : memref<54x3xf32, #tpu.memory_space<vmem>>, vector<54x1xf32>
    %78 = vector.broadcast %66 : vector<1x1xf32> to vector<54x1xf32>
    %79 = arith.mulf %75, %78 : vector<54x1xf32>
    %80 = vector.broadcast %70 : vector<1x1xf32> to vector<54x1xf32>
    %81 = arith.mulf %76, %80 : vector<54x1xf32>
    %82 = arith.addf %79, %81 : vector<54x1xf32>
    %83 = vector.broadcast %74 : vector<1x1xf32> to vector<54x1xf32>
    %84 = arith.mulf %77, %83 : vector<54x1xf32>
    %85 = arith.addf %82, %84 : vector<54x1xf32>
    %cst_28 = arith.constant -6.28318548 : f32
    %86 = vector.broadcast %cst_28 : f32 to vector<54x1xf32>
    %87 = arith.mulf %86, %85 : vector<54x1xf32>
    %88 = math.cos %87 : vector<54x1xf32>
    %89 = math.sin %87 : vector<54x1xf32>
    %c0_29 = arith.constant 0 : index
    %c0_30 = arith.constant 0 : index
    %90 = vector.load %arg7[%c0_29, %c0_30] : memref<54x27xbf16, #tpu.memory_space<vmem>>, vector<54x27xbf16>
    %c0_31 = arith.constant 0 : index
    %c0_32 = arith.constant 0 : index
    %91 = vector.load %arg8[%c0_31, %c0_32] : memref<54x27xbf16, #tpu.memory_space<vmem>>, vector<54x27xbf16>
    %92 = arith.extf %90 : vector<54x27xbf16> to vector<54x27xf32>
    %93 = vector.broadcast %88 : vector<54x1xf32> to vector<54x27xf32>
    %94 = arith.mulf %93, %92 : vector<54x27xf32>
    %95 = arith.extf %91 : vector<54x27xbf16> to vector<54x27xf32>
    %96 = vector.broadcast %89 : vector<54x1xf32> to vector<54x27xf32>
    %97 = arith.mulf %96, %95 : vector<54x27xf32>
    %98 = arith.addf %94, %97 : vector<54x27xf32>
    %c0_33 = arith.constant 0 : index
    %c0_34 = arith.constant 0 : index
    %99 = vector.load %arg9[%c0_33, %c0_34] : memref<32x54xbf16, #tpu.memory_space<vmem>>, vector<32x54xbf16>
    %100 = arith.truncf %98 : vector<54x27xf32> to vector<54x27xbf16>
    %cst_35 = arith.constant dense<0.000000e+00> : vector<32x27xf32>
    %101 = tpu.matmul %99, %100, %cst_35 {dimension_numbers = #tpu.dot_dimension_numbers<[1], [0], [0], [1], [0, 0, 1, 1], [], []>} : vector<32x54xbf16>, vector<54x27xbf16>, vector<32x27xf32> -> vector<32x27xf32>
    %c0_36 = arith.constant 0 : index
    %c0_37 = arith.constant 0 : index
    %c0_38 = arith.constant 0 : index
    %102 = vector.load %arg10[%c0_36, %c0_37, %c0_38] : memref<1x32x27xf32, #tpu.memory_space<vmem>>, vector<1x32x27xf32>
    %103 = vector.shape_cast %102 : vector<1x32x27xf32> to vector<32x27xf32>
    %104 = vector.shape_cast %101 : vector<32x27xf32> to vector<1x32x27xf32>
    tpu.vector_store %arg10[%c0_36, %c0_37, %c0_38], %104 {strides = array<i32>} : memref<1x32x27xf32, #tpu.memory_space<vmem>>, vector<1x32x27xf32>,
    return
  }
  func.func @transform_0(%arg0: i32) -> (i32, i32) {
    %c0_i32 = arith.constant 0 : i32
    %c0_i32_0 = arith.constant 0 : i32
    return %c0_i32, %arg0 : i32, i32
  }
  func.func @transform_1(%arg0: i32) -> (i32, i32) {
    %c0_i32 = arith.constant 0 : i32
    %c0_i32_0 = arith.constant 0 : i32
    %c0_i32_1 = arith.constant 0 : i32
    return %c0_i32, %c0_i32_0 : i32, i32
  }
  func.func @transform_2(%arg0: i32) -> (i32, i32) {
    %c0_i32 = arith.constant 0 : i32
    %c0_i32_0 = arith.constant 0 : i32
    %c0_i32_1 = arith.constant 0 : i32
    return %c0_i32, %c0_i32_0 : i32, i32
  }
  func.func @transform_3(%arg0: i32) -> (i32, i32) {
    %c0_i32 = arith.constant 0 : i32
    %c0_i32_0 = arith.constant 0 : i32
    %c0_i32_1 = arith.constant 0 : i32
    return %c0_i32, %c0_i32_0 : i32, i32
  }
  func.func @transform_4(%arg0: i32) -> (i32, i32) {
    %c0_i32 = arith.constant 0 : i32
    %c0_i32_0 = arith.constant 0 : i32
    %c0_i32_1 = arith.constant 0 : i32
    return %c0_i32, %c0_i32_0 : i32, i32
  }
  func.func @transform_5(%arg0: i32) -> (i32, i32) {
    %c0_i32 = arith.constant 0 : i32
    %c0_i32_0 = arith.constant 0 : i32
    %c0_i32_1 = arith.constant 0 : i32
    return %c0_i32, %c0_i32_0 : i32, i32
  }
  func.func @transform_6(%arg0: i32) -> (i32, i32) {
    %c0_i32 = arith.constant 0 : i32
    %c0_i32_0 = arith.constant 0 : i32
    %c0_i32_1 = arith.constant 0 : i32
    return %c0_i32, %c0_i32_0 : i32, i32
  }
  func.func @transform_7(%arg0: i32) -> (i32, i32) {
    %c0_i32 = arith.constant 0 : i32
    %c0_i32_0 = arith.constant 0 : i32
    %c0_i32_1 = arith.constant 0 : i32
    return %c0_i32, %c0_i32_0 : i32, i32
  }
  func.func @transform_8(%arg0: i32) -> (i32, i32) {
    %c0_i32 = arith.constant 0 : i32
    %c0_i32_0 = arith.constant 0 : i32
    %c0_i32_1 = arith.constant 0 : i32
    return %c0_i32, %c0_i32_0 : i32, i32
  }
  func.func @transform_9(%arg0: i32) -> (i32, i32, i32) {
    %c0_i32 = arith.constant 0 : i32
    %c0_i32_0 = arith.constant 0 : i32
    %c0_i32_1 = arith.constant 0 : i32
    return %arg0, %c0_i32, %c0_i32_0 : i32, i32, i32
  }
}

</mosaic_0001>

<llo_original>
// kernel: cross_d_conv_forward.1
$region0: #{cross_d_conv_forward.1}
  #allocation0 [shape = 'u32[]', space=smem, size = 0x4, offset = 0x4, fixed_abs, tag = 'smem constant byte address 0x4 - core index']
  #allocation1 [shape = 'u32[72,128]{1,0:T(1,128)}', space=vmem, size = 0x9000, scoped, tag = 'internal scratch']
  %s0 = inlined_call_operand.vmem [shape: f32[4,512], index: 0, kind: input, shape index: {}]
  %s1 = inlined_call_operand.vmem [shape: f32[16,4], index: 1, kind: input, shape index: {}]
  %s2 = inlined_call_operand.vmem [shape: f32[16,1], index: 2, kind: input, shape index: {}]
  %s3 = inlined_call_operand.vmem [shape: f32[4,16], index: 3, kind: input, shape index: {}]
  %s4 = inlined_call_operand.vmem [shape: f32[4,1], index: 4, kind: input, shape index: {}]
  %s5 = inlined_call_operand.vmem [shape: f32[54,3], index: 5, kind: input, shape index: {}]
  %s6 = inlined_call_operand.vmem [shape: bf16[54,27], index: 6, kind: input, shape index: {}]
  %s7 = inlined_call_operand.vmem [shape: bf16[54,27], index: 7, kind: input, shape index: {}]
  %s8 = inlined_call_operand.vmem [shape: bf16[32,54], index: 8, kind: input, shape index: {}]
  %s9 = inlined_call_operand.vmem [shape: f32[2,32,27], index: 9, kind: output, shape index: {}]
  %s10 = sld [smem:[#allocation0]]
  $region69: #{cross_d_conv_forward.1} parent=0
    _
  %s12 = ssub.s32 1, %s10
  %s13 = scalar_select 0, %s12, %s10
  loop: start=0, step=1, limit=4
  $region2: #{cross_d_conv_forward.1} parent=0 // loop_pre_header
    _
  $region3: #{cross_d_conv_forward.1} parent=0 // loop_header
    %s15 = sphi 0, %s19
    %p16 = scmp.ge.s32.totalorder %s15, 4
    %s25 = sphi 0, %s27
    %s28 = sphi 0, %s25
    %s29 = sphi 0, %s28
    %s45 = sphi 0, %s29
    %s49 = sphi 0, %s49
    %s51 = sphi 0, %s49
    %s52 = sphi 0, %s51
    %s66 = sphi 0, %s52
    %s70 = sphi 0, %s70
    %s72 = sphi 0, %s70
    %s73 = sphi 0, %s72
    %s87 = sphi 0, %s73
    %s91 = sphi 0, %s91
    %s93 = sphi 0, %s91
    %s94 = sphi 0, %s93
    %s108 = sphi 0, %s94
    %s112 = sphi 0, %s112
    %s114 = sphi 0, %s112
    %s115 = sphi 0, %s114
    %s129 = sphi 0, %s115
    %s133 = sphi 0, %s133
    %s135 = sphi 0, %s133
    %s136 = sphi 0, %s135
    %s150 = sphi 0, %s136
    %s154 = sphi 0, %s154
    %s156 = sphi 0, %s154
    %s157 = sphi 0, %s156
    %s171 = sphi 0, %s157
    %s175 = sphi 0, %s175
    %s177 = sphi 0, %s175
    %s178 = sphi 0, %s177
    %s192 = sphi 0, %s178
    %s196 = sphi 0, %s196
    %s198 = sphi 0, %s196
    %s199 = sphi 0, %s198
    %s213 = sphi 0, %s199
    %s219 = sphi 0, %s221
    %s222 = sphi 0, %s219
    %s223 = sphi 0, %s222
    %s239 = sphi 0, %s223
  $region4: #{cross_d_conv_forward.1} parent=0 // loop_header_branch
    %18 = sbr.rel (%p16) target = $region8
  $region5: #{cross_d_conv_forward.1} parent=0 // loop_body
    %s20 = ssub.s32 %s15, 1
    %s21 = ssub.s32 %s15, 2
    %s22 = sadd.s32 %s15, 1
    %s23 = ssub.s32 %s15, %s22
    %p24 = scmp.eq.s32.totalorder %s23, 0
    %s26 = sadd.s32 %s25, 1
    %s27 = scalar_select %p24, %s25, %s26
    %p30 = pneg %p24
    %p31 = scmp.eq.s32.totalorder %s15, 1
    %p32 = por %p30, %p31
    %p33 = scmp.ne.s32.totalorder %s25, %s28
    %p34 = scmp.eq.s32.totalorder %s15, 0
    %p35 = por %p33, %p34
    %p36 = scmp.ne.s32.totalorder %s25, %s28
    %p37 = scmp.eq.s32.totalorder %s20, 1
    %p38 = por %p36, %p37
    %p39 = scmp.ne.s32.totalorder %s28, %s29
    %p40 = scmp.eq.s32.totalorder %s20, 0
    %p41 = por %p39, %p40
    %p42 = scmp.ne.s32.totalorder %s28, %s29
    %p43 = scmp.eq.s32.totalorder %s21, 1
    %p44 = por %p42, %p43
    %p46 = scmp.ne.s32.totalorder %s29, %s45
    %p47 = scmp.eq.s32.totalorder %s21, 0
    %p48 = por %p46, %p47
    %s50 = sadd.s32 %s49, 1
    %p53 = scmp.eq.s32.totalorder %s15, 1
    %p54 = scmp.ne.s32.totalorder %s49, %s51
    %p55 = scmp.eq.s32.totalorder %s15, 0
    %p56 = por %p54, %p55
    %p57 = scmp.ne.s32.totalorder %s49, %s51
    %p58 = scmp.eq.s32.totalorder %s20, 1
    %p59 = por %p57, %p58
    %p60 = scmp.ne.s32.totalorder %s51, %s52
    %p61 = scmp.eq.s32.totalorder %s20, 0
    %p62 = por %p60, %p61
    %p63 = scmp.ne.s32.totalorder %s51, %s52
    %p64 = scmp.eq.s32.totalorder %s21, 1
    %p65 = por %p63, %p64
    %p67 = scmp.ne.s32.totalorder %s52, %s66
    %p68 = scmp.eq.s32.totalorder %s21, 0
    %p69 = por %p67, %p68
    %s71 = sadd.s32 %s70, 1
    %p74 = scmp.eq.s32.totalorder %s15, 1
    %p75 = scmp.ne.s32.totalorder %s70, %s72
    %p76 = scmp.eq.s32.totalorder %s15, 0
    %p77 = por %p75, %p76
    %p78 = scmp.ne.s32.totalorder %s70, %s72
    %p79 = scmp.eq.s32.totalorder %s20, 1
    %p80 = por %p78, %p79
    %p81 = scmp.ne.s32.totalorder %s72, %s73
    %p82 = scmp.eq.s32.totalorder %s20, 0
    %p83 = por %p81, %p82
    %p84 = scmp.ne.s32.totalorder %s72, %s73
    %p85 = scmp.eq.s32.totalorder %s21, 1
    %p86 = por %p84, %p85
    %p88 = scmp.ne.s32.totalorder %s73, %s87
    %p89 = scmp.eq.s32.totalorder %s21, 0
    %p90 = por %p88, %p89
    %s92 = sadd.s32 %s91, 1
    %p95 = scmp.eq.s32.totalorder %s15, 1
    %p96 = scmp.ne.s32.totalorder %s91, %s93
    %p97 = scmp.eq.s32.totalorder %s15, 0
    %p98 = por %p96, %p97
    %p99 = scmp.ne.s32.totalorder %s91, %s93
    %p100 = scmp.eq.s32.totalorder %s20, 1
    %p101 = por %p99, %p100
    %p102 = scmp.ne.s32.totalorder %s93, %s94
    %p103 = scmp.eq.s32.totalorder %s20, 0
    %p104 = por %p102, %p103
    %p105 = scmp.ne.s32.totalorder %s93, %s94
    %p106 = scmp.eq.s32.totalorder %s21, 1
    %p107 = por %p105, %p106
    %p109 = scmp.ne.s32.totalorder %s94, %s108
    %p110 = scmp.eq.s32.totalorder %s21, 0
    %p111 = por %p109, %p110
    %s113 = sadd.s32 %s112, 1
    %p116 = scmp.eq.s32.totalorder %s15, 1
    %p117 = scmp.ne.s32.totalorder %s112, %s114
    %p118 = scmp.eq.s32.totalorder %s15, 0
    %p119 = por %p117, %p118
    %p120 = scmp.ne.s32.totalorder %s112, %s114
    %p121 = scmp.eq.s32.totalorder %s20, 1
    %p122 = por %p120, %p121
    %p123 = scmp.ne.s32.totalorder %s114, %s115
    %p124 = scmp.eq.s32.totalorder %s20, 0
    %p125 = por %p123, %p124
    %p126 = scmp.ne.s32.totalorder %s114, %s115
    %p127 = scmp.eq.s32.totalorder %s21, 1
    %p128 = por %p126, %p127
    %p130 = scmp.ne.s32.totalorder %s115, %s129
    %p131 = scmp.eq.s32.totalorder %s21, 0
    %p132 = por %p130, %p131
    %s134 = sadd.s32 %s133, 1
    %p137 = scmp.eq.s32.totalorder %s15, 1
    %p138 = scmp.ne.s32.totalorder %s133, %s135
    %p139 = scmp.eq.s32.totalorder %s15, 0
    %p140 = por %p138, %p139
    %p141 = scmp.ne.s32.totalorder %s133, %s135
    %p142 = scmp.eq.s32.totalorder %s20, 1
    %p143 = por %p141, %p142
    %p144 = scmp.ne.s32.totalorder %s135, %s136
    %p145 = scmp.eq.s32.totalorder %s20, 0
    %p146 = por %p144, %p145
    %p147 = scmp.ne.s32.totalorder %s135, %s136
    %p148 = scmp.eq.s32.totalorder %s21, 1
    %p149 = por %p147, %p148
    %p151 = scmp.ne.s32.totalorder %s136, %s150
    %p152 = scmp.eq.s32.totalorder %s21, 0
    %p153 = por %p151, %p152
    %s155 = sadd.s32 %s154, 1
    %p158 = scmp.eq.s32.totalorder %s15, 1
    %p159 = scmp.ne.s32.totalorder %s154, %s156
    %p160 = scmp.eq.s32.totalorder %s15, 0
    %p161 = por %p159, %p160
    %p162 = scmp.ne.s32.totalorder %s154, %s156
    %p163 = scmp.eq.s32.totalorder %s20, 1
    %p164 = por %p162, %p163
    %p165 = scmp.ne.s32.totalorder %s156, %s157
    %p166 = scmp.eq.s32.totalorder %s20, 0
    %p167 = por %p165, %p166
    %p168 = scmp.ne.s32.totalorder %s156, %s157
    %p169 = scmp.eq.s32.totalorder %s21, 1
    %p170 = por %p168, %p169
    %p172 = scmp.ne.s32.totalorder %s157, %s171
    %p173 = scmp.eq.s32.totalorder %s21, 0
    %p174 = por %p172, %p173
    %s176 = sadd.s32 %s175, 1
    %p179 = scmp.eq.s32.totalorder %s15, 1
    %p180 = scmp.ne.s32.totalorder %s175, %s177
    %p181 = scmp.eq.s32.totalorder %s15, 0
    %p182 = por %p180, %p181
    %p183 = scmp.ne.s32.totalorder %s175, %s177
    %p184 = scmp.eq.s32.totalorder %s20, 1
    %p185 = por %p183, %p184
    %p186 = scmp.ne.s32.totalorder %s177, %s178
    %p187 = scmp.eq.s32.totalorder %s20, 0
    %p188 = por %p186, %p187
    %p189 = scmp.ne.s32.totalorder %s177, %s178
    %p190 = scmp.eq.s32.totalorder %s21, 1
    %p191 = por %p189, %p190
    %p193 = scmp.ne.s32.totalorder %s178, %s192
    %p194 = scmp.eq.s32.totalorder %s21, 0
    %p195 = por %p193, %p194
    %s197 = sadd.s32 %s196, 1
    %p200 = scmp.eq.s32.totalorder %s15, 1
    %p201 = scmp.ne.s32.totalorder %s196, %s198
    %p202 = scmp.eq.s32.totalorder %s15, 0
    %p203 = por %p201, %p202
    %p204 = scmp.ne.s32.totalorder %s196, %s198
    %p205 = scmp.eq.s32.totalorder %s20, 1
    %p206 = por %p204, %p205
    %p207 = scmp.ne.s32.totalorder %s198, %s199
    %p208 = scmp.eq.s32.totalorder %s20, 0
    %p209 = por %p207, %p208
    %p210 = scmp.ne.s32.totalorder %s198, %s199
    %p211 = scmp.eq.s32.totalorder %s21, 1
    %p212 = por %p210, %p211
    %p214 = scmp.ne.s32.totalorder %s199, %s213
    %p215 = scmp.eq.s32.totalorder %s21, 0
    %p216 = por %p214, %p215
    %s217 = ssub.s32 %s15, %s22
    %p218 = scmp.eq.s32.totalorder %s217, 0
    %s220 = sadd.s32 %s219, 1
    %s221 = scalar_select %p218, %s219, %s220
    %p224 = pneg %p218
    %p225 = scmp.eq.s32.totalorder %s15, 1
    %p226 = por %p224, %p225
    %p227 = scmp.ne.s32.totalorder %s219, %s222
    %p228 = scmp.eq.s32.totalorder %s15, 0
    %p229 = por %p227, %p228
    %p230 = scmp.ne.s32.totalorder %s219, %s222
    %p231 = scmp.eq.s32.totalorder %s20, 1
    %p232 = por %p230, %p231
    %p233 = scmp.ne.s32.totalorder %s222, %s223
    %p234 = scmp.eq.s32.totalorder %s20, 0
    %p235 = por %p233, %p234
    %p236 = scmp.ne.s32.totalorder %s222, %s223
    %p237 = scmp.eq.s32.totalorder %s21, 1
    %p238 = por %p236, %p237
    %p240 = scmp.ne.s32.totalorder %s223, %s239
    %p241 = scmp.eq.s32.totalorder %s21, 0
    %p242 = por %p240, %p241
    %p243 = scmp.le.s32.totalorder 1, %s15
    %p244 = scmp.lt.s32.totalorder %s15, 3
    %p245 = pnand %p243, %p244
    %p246 = pneg %p245
    // Predicated region
    $region9: #{cross_d_conv_forward.1} parent=5 // pred_check
      _
    $region10: #{cross_d_conv_forward.1} parent=5 // pred_check_branch
      %248 = sbr.rel (%p245) target = $region12
    $region11: #{cross_d_conv_forward.1} parent=5 // pred_region
      %s249 = ssub.s32 %s15, 1
      // Predicated region
      $region13: #{cross_d_conv_forward.1} parent=11 // pred_check
        %p250 = pneg %p62
      $region14: #{cross_d_conv_forward.1} parent=11 // pred_check_branch
        %252 = sbr.rel (%p250) target = $region16
      $region15: #{cross_d_conv_forward.1} parent=11 // pred_region
        _
      $region16: #{cross_d_conv_forward.1} parent=11 // pred_fallthru
        _
      // Predicated region
      $region17: #{cross_d_conv_forward.1} parent=11 // pred_check
        %p253 = pneg %p83
      $region18: #{cross_d_conv_forward.1} parent=11 // pred_check_branch
        %255 = sbr.rel (%p253) target = $region20
      $region19: #{cross_d_conv_forward.1} parent=11 // pred_region
        _
      $region20: #{cross_d_conv_forward.1} parent=11 // pred_fallthru
        _
      // Predicated region
      $region21: #{cross_d_conv_forward.1} parent=11 // pred_check
        %p256 = pneg %p104
      $region22: #{cross_d_conv_forward.1} parent=11 // pred_check_branch
        %258 = sbr.rel (%p256) target = $region24
      $region23: #{cross_d_conv_forward.1} parent=11 // pred_region
        _
      $region24: #{cross_d_conv_forward.1} parent=11 // pred_fallthru
        _
      // Predicated region
      $region25: #{cross_d_conv_forward.1} parent=11 // pred_check
        %p259 = pneg %p125
      $region26: #{cross_d_conv_forward.1} parent=11 // pred_check_branch
        %261 = sbr.rel (%p259) target = $region28
      $region27: #{cross_d_conv_forward.1} parent=11 // pred_region
        _
      $region28: #{cross_d_conv_forward.1} parent=11 // pred_fallthru
        _
      // Predicated region
      $region29: #{cross_d_conv_forward.1} parent=11 // pred_check
        %p262 = pneg %p146
      $region30: #{cross_d_conv_forward.1} parent=11 // pred_check_branch
        %264 = sbr.rel (%p262) target = $region32
      $region31: #{cross_d_conv_forward.1} parent=11 // pred_region
        _
      $region32: #{cross_d_conv_forward.1} parent=11 // pred_fallthru
        _
      // Predicated region
      $region33: #{cross_d_conv_forward.1} parent=11 // pred_check
        %p265 = pneg %p167
      $region34: #{cross_d_conv_forward.1} parent=11 // pred_check_branch
        %267 = sbr.rel (%p265) target = $region36
      $region35: #{cross_d_conv_forward.1} parent=11 // pred_region
        _
      $region36: #{cross_d_conv_forward.1} parent=11 // pred_fallthru
        _
      // Predicated region
      $region37: #{cross_d_conv_forward.1} parent=11 // pred_check
        %p268 = pneg %p188
      $region38: #{cross_d_conv_forward.1} parent=11 // pred_check_branch
        %270 = sbr.rel (%p268) target = $region40
      $region39: #{cross_d_conv_forward.1} parent=11 // pred_region
        _
      $region40: #{cross_d_conv_forward.1} parent=11 // pred_fallthru
        _
      // Predicated region
      $region41: #{cross_d_conv_forward.1} parent=11 // pred_check
        %p271 = pneg %p209
      $region42: #{cross_d_conv_forward.1} parent=11 // pred_check_branch
        %273 = sbr.rel (%p271) target = $region44
      $region43: #{cross_d_conv_forward.1} parent=11 // pred_region
        _
      $region44: #{cross_d_conv_forward.1} parent=11 // pred_fallthru
        _
    $region12: #{cross_d_conv_forward.1} parent=5 // pred_fallthru
      _
    %p274 = scmp.lt.s32.totalorder %s15, 2
    // Predicated region
    $region45: #{cross_d_conv_forward.1} parent=5 // pred_check
      %p275 = pneg %p274
    $region46: #{cross_d_conv_forward.1} parent=5 // pred_check_branch
      %277 = sbr.rel (%p275) target = $region48
    $region47: #{cross_d_conv_forward.1} parent=5 // pred_region
      // Predicated region
      $region49: #{cross_d_conv_forward.1} parent=47 // pred_check
        %p278 = pneg %p35
      $region50: #{cross_d_conv_forward.1} parent=47 // pred_check_branch
        %280 = sbr.rel (%p278) target = $region52
      $region51: #{cross_d_conv_forward.1} parent=47 // pred_region
        %s281 = smul.u32 2, %s15
        %p282 = scmp.lt.s32.totalorder %s281, 3
        %s283 = scalar_select %p282, %s281, 3
        %s284 = smul.addr %s283, 4
        %s285 = scalar_lea.vmem %s0, %s284
        %s286 = smul.u32 2, %s15
      $region52: #{cross_d_conv_forward.1} parent=47 // pred_fallthru
        _
    $region48: #{cross_d_conv_forward.1} parent=5 // pred_fallthru
      _
    %p287 = scmp.le.s32.totalorder 1, %s15
    %p288 = scmp.lt.s32.totalorder %s15, 3
    %p289 = pnand %p287, %p288
    %p290 = pneg %p289
    // Predicated region
    $region53: #{cross_d_conv_forward.1} parent=5 // pred_check
      _
    $region54: #{cross_d_conv_forward.1} parent=5 // pred_check_branch
      %292 = sbr.rel (%p289) target = $region56
    $region55: #{cross_d_conv_forward.1} parent=5 // pred_region
      %s293 = ssub.s32 %s15, 1
      %s294 = smul.u32 2, %s20
      %p295 = scmp.lt.s32.totalorder %s294, 3
      %s296 = scalar_select %p295, %s294, 3
      %s297 = smul.addr %s296, 4
      %s298 = scalar_lea.vmem %s0, %s297
      %p299 = pneg %p41
      %p300 = pneg %p38
      %p301 = pneg %p62
      %p302 = pneg %p59
      %p303 = pneg %p83
      %p304 = pneg %p80
      %p305 = pneg %p104
      %p306 = pneg %p101
      %p307 = pneg %p125
      %p308 = pneg %p122
      %p309 = pneg %p146
      %p310 = pneg %p143
      %p311 = pneg %p167
      %p312 = pneg %p164
      %p313 = pneg %p188
      %p314 = pneg %p185
      %p315 = pneg %p209
      %p316 = pneg %p206
      %p317 = pneg %p235
      %p318 = pneg %p232
      %p319 = scmp.lt.s32.totalorder %s20, 1
      %s320 = scalar_select %p319, %s20, 1
      %s321 = smul.addr %s320, 4
      %s322 = smul.addr %s321, 8
      %s323 = scalar_lea.vmem %s9, %s322
      %s324 = smul.u32 2, %s20
      %p325 = scmp.lt.s32.totalorder %s324, 3
      %s326 = scalar_select %p325, %s324, 3
      %s327 = smul.addr %s326, 4
      %s328 = scalar_lea.vmem %s0, %s327
      %s329 = smul.u32 2, %s20
      %p330 = scmp.lt.s32.totalorder %s20, 1
      %s331 = scalar_select %p330, %s20, 1
      %s332 = smul.addr %s331, 4
      %s333 = smul.addr %s332, 8
      %s334 = scalar_lea.vmem %s9, %s333
      %v336 = vld [vmem:[%s328] sm:$0xff]
      %v337 = vld [vmem:[%s1] sm:$0xff]
      %v338 = vld [vmem:[%s1 + $0x8] sm:$0xff]
      %340 = vset.pattern.permute.xlu0 0
      %341 = vperm.xlu0 %340, %v337
      %v342 = vpop.permute.xlu0 %341
      %345 = vset.pattern.permute.xlu0 0
      %346 = vperm.xlu0 %345, %v338
      %v347 = vpop.permute.xlu0 %346
      %v350 = vperm.slane %v336, 0
      %v351 = vperm.slane %v336, 4
      %v354 = vperm.slane %v350, 0
      %v355 = vperm.slane %v351, 0
      %v356 = vmul.f32 %v342, %v354
      %v357 = vmul.f32 %v342, %v355
      %v358 = vmul.f32 %v347, %v354
      %v359 = vmul.f32 %v347, %v355
      %360 = vset.pattern.permute.xlu0 1
      %361 = vperm.xlu0 %360, %v337
      %v362 = vpop.permute.xlu0 %361
      %364 = vset.pattern.permute.xlu0 1
      %365 = vperm.xlu0 %364, %v338
      %v366 = vpop.permute.xlu0 %365
      %v368 = vperm.slane %v336, 1
      %v369 = vperm.slane %v336, 5
      %v372 = vperm.slane %v368, 1
      %v373 = vperm.slane %v369, 1
      %v374 = vmul.f32 %v362, %v372
      %v375 = vmul.f32 %v362, %v373
      %v376 = vmul.f32 %v366, %v372
      %v377 = vmul.f32 %v366, %v373
      %v378 = vadd.f32 %v356, %v374
      %v379 = vadd.f32 %v357, %v375
      %v380 = vadd.f32 %v358, %v376
      %v381 = vadd.f32 %v359, %v377
      %382 = vset.pattern.permute.xlu0 2
      %383 = vperm.xlu0 %382, %v337
      %v384 = vpop.permute.xlu0 %383
      %386 = vset.pattern.permute.xlu0 2
      %387 = vperm.xlu0 %386, %v338
      %v388 = vpop.permute.xlu0 %387
      %v390 = vperm.slane %v336, 2
      %v391 = vperm.slane %v336, 6
      %v394 = vperm.slane %v390, 2
      %v395 = vperm.slane %v391, 2
      %v396 = vmul.f32 %v384, %v394
      %v397 = vmul.f32 %v384, %v395
      %v398 = vmul.f32 %v388, %v394
      %v399 = vmul.f32 %v388, %v395
      %v400 = vadd.f32 %v378, %v396
      %v401 = vadd.f32 %v379, %v397
      %v402 = vadd.f32 %v380, %v398
      %v403 = vadd.f32 %v381, %v399
      %404 = vset.pattern.permute.xlu0 3
      %405 = vperm.xlu0 %404, %v337
      %v406 = vpop.permute.xlu0 %405
      %408 = vset.pattern.permute.xlu0 3
      %409 = vperm.xlu0 %408, %v338
      %v410 = vpop.permute.xlu0 %409
      %v412 = vperm.slane %v336, 3
      %v413 = vperm.slane %v336, 7
      %v416 = vperm.slane %v412, 3
      %v417 = vperm.slane %v413, 3
      %v418 = vmul.f32 %v406, %v416
      %v419 = vmul.f32 %v406, %v417
      %v420 = vmul.f32 %v410, %v416
      %v421 = vmul.f32 %v410, %v417
      %v422 = vadd.f32 %v400, %v418
      %v423 = vadd.f32 %v401, %v419
      %v424 = vadd.f32 %v402, %v420
      %v425 = vadd.f32 %v403, %v421
      %v426 = vld [vmem:[%s2] sm:$0xff]
      %v427 = vld [vmem:[%s2 + $0x8] sm:$0xff]
      %429 = vset.pattern.permute.xlu0 0
      %430 = vperm.xlu0 %429, %v426
      %v431 = vpop.permute.xlu0 %430
      %434 = vset.pattern.permute.xlu0 0
      %435 = vperm.xlu0 %434, %v427
      %v436 = vpop.permute.xlu0 %435
      %v438 = vadd.f32 %v422, %v431
      %v439 = vadd.f32 %v423, %v431
      %v440 = vadd.f32 %v424, %v436
      %v441 = vadd.f32 %v425, %v436
      %v442 = vmax.f32 %v438, 0.0
      %v443 = vmax.f32 %v439, 0.0
      %v444 = vmax.f32 %v440, 0.0
      %v445 = vmax.f32 %v441, 0.0
      %v446 = vld [vmem:[%s3] sm:$0xf]
      %v447 = vld [vmem:[%s4] sm:$0xf]
      %449 = vset.pattern.permute.xlu0 0
      %450 = vperm.xlu0 %449, %v447
      %v451 = vpop.permute.xlu0 %450
      %vm453 = vcmask 130048
      %v455 = vsel %vm453, %v446, 0
      %457 = vmatpush.msra.mxu0 0.0
      %458 = vmatpush.msra.mxu0 0.0
      %459 = vmatpush.msra.mxu0 0.0
      %460 = vmatpush.msra.mxu0 0.0
      %461 = vmatpush.msra.mxu0 0.0
      %462 = vmatpush.msra.mxu0 0.0
      %463 = vmatpush.msra.mxu0 0.0
      %464 = vmatpush.msra.mxu0 0.0
      %465 = vmatpush.msra.mxu0 0.0
      %466 = vmatpush.msra.mxu0 0.0
      %467 = vmatpush.msra.mxu0 0.0
      %468 = vmatpush.msra.mxu0 0.0
      %469 = vmatpush.msra.mxu0 0.0
      %470 = vmatpush.msra.mxu0 0.0
      %v471 = vand.u32 %v444, 4294901760
      %472 = vmatpush.msra.mxu0 %v471
      %v473 = vand.u32 %v442, 4294901760
      %474 = vmatpush.msra.mxu0 %v473
      %v475 = vand.u32 %v455, 4294901760
      %v476 = vsub.f32 %v455, %v475
      %v477 = vand.u32 %v476, 4294901760
      %v478 = vsub.f32 %v476, %v477
      %v479 = vand.u32 %v478, 4294901760
      %480 = vmatmul.f32.gmra.mxu0 %v479
      %v481 = vpop.f32.mrf.mxu0
      %v482 = vadd.f32 %v451, %v481
      %483 = vdwg.mxu0
      %484 = vmatpush.msra.mxu0 0.0
      %485 = vmatpush.msra.mxu0 0.0
      %486 = vmatpush.msra.mxu0 0.0
      %487 = vmatpush.msra.mxu0 0.0
      %488 = vmatpush.msra.mxu0 0.0
      %489 = vmatpush.msra.mxu0 0.0
      %490 = vmatpush.msra.mxu0 0.0
      %491 = vmatpush.msra.mxu0 0.0
      %492 = vmatpush.msra.mxu0 0.0
      %493 = vmatpush.msra.mxu0 0.0
      %494 = vmatpush.msra.mxu0 0.0
      %495 = vmatpush.msra.mxu0 0.0
      %496 = vmatpush.msra.mxu0 0.0
      %497 = vmatpush.msra.mxu0 0.0
      %v498 = vand.u32 %v444, 4294901760
      %v499 = vsub.f32 %v444, %v498
      %v500 = vand.u32 %v499, 4294901760
      %v501 = vsub.f32 %v499, %v500
      %v502 = vand.u32 %v501, 4294901760
      %503 = vmatpush.msra.mxu0 %v502
      %v504 = vand.u32 %v442, 4294901760
      %v505 = vsub.f32 %v442, %v504
      %v506 = vand.u32 %v505, 4294901760
      %v507 = vsub.f32 %v505, %v506
      %v508 = vand.u32 %v507, 4294901760
      %509 = vmatpush.msra.mxu0 %v508
      %v510 = vand.u32 %v455, 4294901760
      %511 = vmatmul.f32.gmra.mxu0 %v510
      %v512 = vpop.f32.mrf.mxu0
      %v513 = vadd.f32 %v482, %v512
      %514 = vdwg.mxu0
      %515 = vmatpush.msra.mxu0 0.0
      %516 = vmatpush.msra.mxu0 0.0
      %517 = vmatpush.msra.mxu0 0.0
      %518 = vmatpush.msra.mxu0 0.0
      %519 = vmatpush.msra.mxu0 0.0
      %520 = vmatpush.msra.mxu0 0.0
      %521 = vmatpush.msra.mxu0 0.0
      %522 = vmatpush.msra.mxu0 0.0
      %523 = vmatpush.msra.mxu0 0.0
      %524 = vmatpush.msra.mxu0 0.0
      %525 = vmatpush.msra.mxu0 0.0
      %526 = vmatpush.msra.mxu0 0.0
      %527 = vmatpush.msra.mxu0 0.0
      %528 = vmatpush.msra.mxu0 0.0
      %v529 = vand.u32 %v444, 4294901760
      %v530 = vsub.f32 %v444, %v529
      %531 = vmatpush.msra.mxu0 %v530
      %v532 = vand.u32 %v442, 4294901760
      %v533 = vsub.f32 %v442, %v532
      %534 = vmatpush.msra.mxu0 %v533
      %v535 = vand.u32 %v455, 4294901760
      %v536 = vsub.f32 %v455, %v535
      %537 = vmatmul.f32.gmra.mxu0 %v536
      %v538 = vpop.f32.mrf.mxu0
      %v539 = vadd.f32 %v513, %v538
      %540 = vdwg.mxu0
      %541 = vmatpush.msra.mxu0 0.0
      %542 = vmatpush.msra.mxu0 0.0
      %543 = vmatpush.msra.mxu0 0.0
      %544 = vmatpush.msra.mxu0 0.0
      %545 = vmatpush.msra.mxu0 0.0
      %546 = vmatpush.msra.mxu0 0.0
      %547 = vmatpush.msra.mxu0 0.0
      %548 = vmatpush.msra.mxu0 0.0
      %549 = vmatpush.msra.mxu0 0.0
      %550 = vmatpush.msra.mxu0 0.0
      %551 = vmatpush.msra.mxu0 0.0
      %552 = vmatpush.msra.mxu0 0.0
      %553 = vmatpush.msra.mxu0 0.0
      %554 = vmatpush.msra.mxu0 0.0
      %v555 = vand.u32 %v444, 4294901760
      %556 = vmatpush.msra.mxu0 %v555
      %v557 = vand.u32 %v442, 4294901760
      %558 = vmatpush.msra.mxu0 %v557
      %v559 = vand.u32 %v455, 4294901760
      %v560 = vsub.f32 %v455, %v559
      %v561 = vand.u32 %v560, 4294901760
      %562 = vmatmul.f32.gmra.mxu0 %v561
      %v563 = vpop.f32.mrf.mxu0
      %v564 = vadd.f32 %v539, %v563
      %565 = vdwg.mxu0
      %566 = vmatpush.msra.mxu0 0.0
      %567 = vmatpush.msra.mxu0 0.0
      %568 = vmatpush.msra.mxu0 0.0
      %569 = vmatpush.msra.mxu0 0.0
      %570 = vmatpush.msra.mxu0 0.0
      %571 = vmatpush.msra.mxu0 0.0
      %572 = vmatpush.msra.mxu0 0.0
      %573 = vmatpush.msra.mxu0 0.0
      %574 = vmatpush.msra.mxu0 0.0
      %575 = vmatpush.msra.mxu0 0.0
      %576 = vmatpush.msra.mxu0 0.0
      %577 = vmatpush.msra.mxu0 0.0
      %578 = vmatpush.msra.mxu0 0.0
      %579 = vmatpush.msra.mxu0 0.0
      %v580 = vand.u32 %v444, 4294901760
      %v581 = vsub.f32 %v444, %v580
      %v582 = vand.u32 %v581, 4294901760
      %583 = vmatpush.msra.mxu0 %v582
      %v584 = vand.u32 %v442, 4294901760
      %v585 = vsub.f32 %v442, %v584
      %v586 = vand.u32 %v585, 4294901760
      %587 = vmatpush.msra.mxu0 %v586
      %v588 = vand.u32 %v455, 4294901760
      %589 = vmatmul.f32.gmra.mxu0 %v588
      %v590 = vpop.f32.mrf.mxu0
      %v591 = vadd.f32 %v564, %v590
      %592 = vdwg.mxu0
      %593 = vmatpush.msra.mxu0 0.0
      %594 = vmatpush.msra.mxu0 0.0
      %595 = vmatpush.msra.mxu0 0.0
      %596 = vmatpush.msra.mxu0 0.0
      %597 = vmatpush.msra.mxu0 0.0
      %598 = vmatpush.msra.mxu0 0.0
      %599 = vmatpush.msra.mxu0 0.0
      %600 = vmatpush.msra.mxu0 0.0
      %601 = vmatpush.msra.mxu0 0.0
      %602 = vmatpush.msra.mxu0 0.0
      %603 = vmatpush.msra.mxu0 0.0
      %604 = vmatpush.msra.mxu0 0.0
      %605 = vmatpush.msra.mxu0 0.0
      %606 = vmatpush.msra.mxu0 0.0
      %v607 = vand.u32 %v444, 4294901760
      %608 = vmatpush.msra.mxu0 %v607
      %v609 = vand.u32 %v442, 4294901760
      %610 = vmatpush.msra.mxu0 %v609
      %v611 = vand.u32 %v455, 4294901760
      %612 = vmatmul.f32.gmra.mxu0 %v611
      %v613 = vpop.f32.mrf.mxu0
      %v614 = vadd.f32 %v591, %v613
      %615 = vdwg.mxu0
      %616 = vmatpush.msra.mxu0 0.0
      %617 = vmatpush.msra.mxu0 0.0
      %618 = vmatpush.msra.mxu0 0.0
      %619 = vmatpush.msra.mxu0 0.0
      %620 = vmatpush.msra.mxu0 0.0
      %621 = vmatpush.msra.mxu0 0.0
      %622 = vmatpush.msra.mxu0 0.0
      %623 = vmatpush.msra.mxu0 0.0
      %624 = vmatpush.msra.mxu0 0.0
      %625 = vmatpush.msra.mxu0 0.0
      %626 = vmatpush.msra.mxu0 0.0
      %627 = vmatpush.msra.mxu0 0.0
      %628 = vmatpush.msra.mxu0 0.0
      %629 = vmatpush.msra.mxu0 0.0
      %v630 = vand.u32 %v445, 4294901760
      %631 = vmatpush.msra.mxu0 %v630
      %v632 = vand.u32 %v443, 4294901760
      %633 = vmatpush.msra.mxu0 %v632
      %v634 = vand.u32 %v455, 4294901760
      %v635 = vsub.f32 %v455, %v634
      %v636 = vand.u32 %v635, 4294901760
      %v637 = vsub.f32 %v635, %v636
      %v638 = vand.u32 %v637, 4294901760
      %639 = vmatmul.f32.gmra.mxu0 %v638
      %v640 = vpop.f32.mrf.mxu0
      %v641 = vadd.f32 %v451, %v640
      %642 = vdwg.mxu0
      %643 = vmatpush.msra.mxu0 0.0
      %644 = vmatpush.msra.mxu0 0.0
      %645 = vmatpush.msra.mxu0 0.0
      %646 = vmatpush.msra.mxu0 0.0
      %647 = vmatpush.msra.mxu0 0.0
      %648 = vmatpush.msra.mxu0 0.0
      %649 = vmatpush.msra.mxu0 0.0
      %650 = vmatpush.msra.mxu0 0.0
      %651 = vmatpush.msra.mxu0 0.0
      %652 = vmatpush.msra.mxu0 0.0
      %653 = vmatpush.msra.mxu0 0.0
      %654 = vmatpush.msra.mxu0 0.0
      %655 = vmatpush.msra.mxu0 0.0
      %656 = vmatpush.msra.mxu0 0.0
      %v657 = vand.u32 %v445, 4294901760
      %v658 = vsub.f32 %v445, %v657
      %v659 = vand.u32 %v658, 4294901760
      %v660 = vsub.f32 %v658, %v659
      %v661 = vand.u32 %v660, 4294901760
      %662 = vmatpush.msra.mxu0 %v661
      %v663 = vand.u32 %v443, 4294901760
      %v664 = vsub.f32 %v443, %v663
      %v665 = vand.u32 %v664, 4294901760
      %v666 = vsub.f32 %v664, %v665
      %v667 = vand.u32 %v666, 4294901760
      %668 = vmatpush.msra.mxu0 %v667
      %v669 = vand.u32 %v455, 4294901760
      %670 = vmatmul.f32.gmra.mxu0 %v669
      %v671 = vpop.f32.mrf.mxu0
      %v672 = vadd.f32 %v641, %v671
      %673 = vdwg.mxu0
      %674 = vmatpush.msra.mxu0 0.0
      %675 = vmatpush.msra.mxu0 0.0
      %676 = vmatpush.msra.mxu0 0.0
      %677 = vmatpush.msra.mxu0 0.0
      %678 = vmatpush.msra.mxu0 0.0
      %679 = vmatpush.msra.mxu0 0.0
      %680 = vmatpush.msra.mxu0 0.0
      %681 = vmatpush.msra.mxu0 0.0
      %682 = vmatpush.msra.mxu0 0.0
      %683 = vmatpush.msra.mxu0 0.0
      %684 = vmatpush.msra.mxu0 0.0
      %685 = vmatpush.msra.mxu0 0.0
      %686 = vmatpush.msra.mxu0 0.0
      %687 = vmatpush.msra.mxu0 0.0
      %v688 = vand.u32 %v445, 4294901760
      %v689 = vsub.f32 %v445, %v688
      %690 = vmatpush.msra.mxu0 %v689
      %v691 = vand.u32 %v443, 4294901760
      %v692 = vsub.f32 %v443, %v691
      %693 = vmatpush.msra.mxu0 %v692
      %v694 = vand.u32 %v455, 4294901760
      %v695 = vsub.f32 %v455, %v694
      %696 = vmatmul.f32.gmra.mxu0 %v695
      %v697 = vpop.f32.mrf.mxu0
      %v698 = vadd.f32 %v672, %v697
      %699 = vdwg.mxu0
      %700 = vmatpush.msra.mxu0 0.0
      %701 = vmatpush.msra.mxu0 0.0
      %702 = vmatpush.msra.mxu0 0.0
      %703 = vmatpush.msra.mxu0 0.0
      %704 = vmatpush.msra.mxu0 0.0
      %705 = vmatpush.msra.mxu0 0.0
      %706 = vmatpush.msra.mxu0 0.0
      %707 = vmatpush.msra.mxu0 0.0
      %708 = vmatpush.msra.mxu0 0.0
      %709 = vmatpush.msra.mxu0 0.0
      %710 = vmatpush.msra.mxu0 0.0
      %711 = vmatpush.msra.mxu0 0.0
      %712 = vmatpush.msra.mxu0 0.0
      %713 = vmatpush.msra.mxu0 0.0
      %v714 = vand.u32 %v445, 4294901760
      %715 = vmatpush.msra.mxu0 %v714
      %v716 = vand.u32 %v443, 4294901760
      %717 = vmatpush.msra.mxu0 %v716
      %v718 = vand.u32 %v455, 4294901760
      %v719 = vsub.f32 %v455, %v718
      %v720 = vand.u32 %v719, 4294901760
      %721 = vmatmul.f32.gmra.mxu0 %v720
      %v722 = vpop.f32.mrf.mxu0
      %v723 = vadd.f32 %v698, %v722
      %724 = vdwg.mxu0
      %725 = vmatpush.msra.mxu0 0.0
      %726 = vmatpush.msra.mxu0 0.0
      %727 = vmatpush.msra.mxu0 0.0
      %728 = vmatpush.msra.mxu0 0.0
      %729 = vmatpush.msra.mxu0 0.0
      %730 = vmatpush.msra.mxu0 0.0
      %731 = vmatpush.msra.mxu0 0.0
      %732 = vmatpush.msra.mxu0 0.0
      %733 = vmatpush.msra.mxu0 0.0
      %734 = vmatpush.msra.mxu0 0.0
      %735 = vmatpush.msra.mxu0 0.0
      %736 = vmatpush.msra.mxu0 0.0
      %737 = vmatpush.msra.mxu0 0.0
      %738 = vmatpush.msra.mxu0 0.0
      %v739 = vand.u32 %v445, 4294901760
      %v740 = vsub.f32 %v445, %v739
      %v741 = vand.u32 %v740, 4294901760
      %742 = vmatpush.msra.mxu0 %v741
      %v743 = vand.u32 %v443, 4294901760
      %v744 = vsub.f32 %v443, %v743
      %v745 = vand.u32 %v744, 4294901760
      %746 = vmatpush.msra.mxu0 %v745
      %v747 = vand.u32 %v455, 4294901760
      %748 = vmatmul.f32.gmra.mxu0 %v747
      %v749 = vpop.f32.mrf.mxu0
      %v750 = vadd.f32 %v723, %v749
      %751 = vdwg.mxu0
      %752 = vmatpush.msra.mxu0 0.0
      %753 = vmatpush.msra.mxu0 0.0
      %754 = vmatpush.msra.mxu0 0.0
      %755 = vmatpush.msra.mxu0 0.0
      %756 = vmatpush.msra.mxu0 0.0
      %757 = vmatpush.msra.mxu0 0.0
      %758 = vmatpush.msra.mxu0 0.0
      %759 = vmatpush.msra.mxu0 0.0
      %760 = vmatpush.msra.mxu0 0.0
      %761 = vmatpush.msra.mxu0 0.0
      %762 = vmatpush.msra.mxu0 0.0
      %763 = vmatpush.msra.mxu0 0.0
      %764 = vmatpush.msra.mxu0 0.0
      %765 = vmatpush.msra.mxu0 0.0
      %v766 = vand.u32 %v445, 4294901760
      %767 = vmatpush.msra.mxu0 %v766
      %v768 = vand.u32 %v443, 4294901760
      %769 = vmatpush.msra.mxu0 %v768
      %v770 = vand.u32 %v455, 4294901760
      %771 = vmatmul.f32.gmra.mxu0 %v770
      %v772 = vpop.f32.mrf.mxu0
      %v773 = vadd.f32 %v750, %v772
      %774 = vdwg.mxu0
      %vm775 = vcmask 1043456
      %v776 = vsel %vm775, %v614, -inf
      %v777 = vsel %vm775, %v773, -inf
      %v778 = vmax.f32 %v776, %v777
      %779 = vmax.xlane.f32.xlu0 %v778
      %v780 = vpop.xlane.xlu0 %779
      %v781 = vsub.f32 %v614, %v780
      %v782 = vsub.f32 %v773, %v780
      %v783 = vmul.f32 %v781, 1.442695
      %v784 = vpow.pop %v783
      %v785 = vmul.f32 %v782, 1.442695
      %v786 = vpow.pop %v785
      %v787 = vmul.f32 %v614, %v784
      %v788 = vmul.f32 %v773, %v786
      %v789 = vsel %vm775, %v787, 0.0
      %v790 = vsel %vm775, %v788, 0.0
      %v791 = vadd.f32 %v789, %v790
      %792 = vadd.xlane.f32.xlu0 %v791
      %v793 = vpop.xlane.xlu0 %792
      %v794 = vsel %vm775, %v784, 0.0
      %v795 = vsel %vm775, %v786, 0.0
      %v796 = vadd.f32 %v794, %v795
      %797 = vadd.xlane.f32.xlu0 %v796
      %v798 = vpop.xlane.xlu0 %797
      %v799 = vrcp.pop %v798
      %v800 = vmul.f32 %v798, %v799
      %v801 = vsub.f32 1.0, %v800
      %v802 = vmul.f32 %v799, %v801
      %v803 = vadd.f32 %v799, %v802
      %vm804 = vweird.f32 %v798
      %vm805 = vweird.f32 %v799
      %vm806 = vmor %vm804, %vm805
      %v807 = vsel %vm806, %v799, %v803
      %v808 = vand.u32 2147483647, %v798
      %vm809 = vcmp.eq.f32.partialorder %v808, 8.507059e+37
      %v810 = vand.u32 %v798, 2147483648
      %v811 = vor.u32 1.1754944e-38, %v810
      %v812 = vsel %vm809, %v811, %v807
      %v813 = vmul.f32 %v793, %v812
      %v814 = vmul.f32 %v813, %v813
      %v816 = vrot.slane %v814, 1
      %v818 = vadd.f32 %v814, %v816
      %v819 = vrot.slane %v814, 2
      %v821 = vadd.f32 %v818, %v819
      %v822 = vrsqrt.pop %v821
      %v823 = vmul.f32 %v822, %v821
      %v824 = vmul.f32 %v823, %v822
      %v825 = vmul.f32 0.5, %v824
      %v826 = vsub.f32 1.5, %v825
      %v827 = vmul.f32 %v822, %v826
      %v828 = vmul.f32 %v821, %v827
      %vm829 = vcmp.eq.f32.partialorder %v821, inf
      %v830 = vsel %vm829, %v821, %v828
      %vm831 = vcmp.eq.f32.partialorder %v821, 0.0
      %v832 = vand.u32 %v821, 2147483648
      %v833 = vsel %vm831, %v832, %v830
      %v834 = vadd.f32 %v833, 1e-08
      %v835 = vrcp.pop %v834
      %v836 = vmul.f32 %v834, %v835
      %v837 = vsub.f32 1.0, %v836
      %v838 = vmul.f32 %v835, %v837
      %v839 = vadd.f32 %v835, %v838
      %vm840 = vweird.f32 %v834
      %vm841 = vweird.f32 %v835
      %vm842 = vmor %vm840, %vm841
      %v843 = vsel %vm842, %v835, %v839
      %v844 = vand.u32 2147483647, %v834
      %vm845 = vcmp.eq.f32.partialorder %v844, 8.507059e+37
      %v846 = vand.u32 %v834, 2147483648
      %v847 = vor.u32 1.1754944e-38, %v846
      %v848 = vsel %vm845, %v847, %v843
      %v849 = vmul.f32 1.0, %v848
      %v850 = vtanh.pop %v813
      %v851 = vmul.f32 %v850, 0.7853982
      %v853 = vrot.slane %v849, 5
      %v855 = vmul.f32 %v851, %v853
      %v857 = vrot.slane %v813, 7
      %v859 = vsub.f32 %v813, %v857
      %v861 = vrot.slane %v859, 7
      %v863 = vmul.f32 %v855, %v861
      %v864 = vadd.f32 %v863, 1.0
      %v865 = vrot.slane %v813, 2
      %v867 = vsub.f32 %v813, %v865
      %v869 = vrot.slane %v867, 5
      %v871 = vmul.f32 %v855, %v869
      %v872 = vadd.f32 %v871, 1.0
      %v873 = vrot.slane %v859, 6
      %v875 = vmul.f32 %v855, %v873
      %v876 = vadd.f32 %v875, 1.0
      %v877 = vld [vmem:[%s5] sm:$0xff]
      %v878 = vld [vmem:[%s5 + $0x8] sm:$0xff]
      %v879 = vld [vmem:[%s5 + $0x10] sm:$0xff]
      %v880 = vld [vmem:[%s5 + $0x18] sm:$0xff]
      %v881 = vld [vmem:[%s5 + $0x20] sm:$0xff]
      %v882 = vld [vmem:[%s5 + $0x28] sm:$0xff]
      %v883 = vld [vmem:[%s5 + $0x30] sm:$0x3f]
      %v884 = vperm.slane %v864, 3
      %v885 = vmul.f32 %v877, %v884
      %v886 = vmul.f32 %v878, %v884
      %v887 = vmul.f32 %v879, %v884
      %v888 = vmul.f32 %v880, %v884
      %v889 = vmul.f32 %v881, %v884
      %v890 = vmul.f32 %v882, %v884
      %v891 = vmul.f32 %v883, %v884
      %v892 = vperm.slane %v872, 3
      %894 = vrot.lane.b32.xlu0 %v892, 1
      %v895 = vpop.permute.xlu0 %894
      %v897 = vmul.f32 %v877, %v895
      %v898 = vmul.f32 %v878, %v895
      %v899 = vmul.f32 %v879, %v895
      %v900 = vmul.f32 %v880, %v895
      %v901 = vmul.f32 %v881, %v895
      %v902 = vmul.f32 %v882, %v895
      %v903 = vmul.f32 %v883, %v895
      %911 = vrot.lane.b32.xlu0 %v897, 127
      %v912 = vpop.permute.xlu0 %911
      %913 = vrot.lane.b32.xlu0 %v898, 127
      %v914 = vpop.permute.xlu0 %913
      %915 = vrot.lane.b32.xlu0 %v899, 127
      %v916 = vpop.permute.xlu0 %915
      %917 = vrot.lane.b32.xlu0 %v900, 127
      %v918 = vpop.permute.xlu0 %917
      %919 = vrot.lane.b32.xlu0 %v901, 127
      %v920 = vpop.permute.xlu0 %919
      %921 = vrot.lane.b32.xlu0 %v902, 127
      %v922 = vpop.permute.xlu0 %921
      %923 = vrot.lane.b32.xlu0 %v903, 127
      %v924 = vpop.permute.xlu0 %923
      %v932 = vadd.f32 %v885, %v912
      %v933 = vadd.f32 %v886, %v914
      %v934 = vadd.f32 %v887, %v916
      %v935 = vadd.f32 %v888, %v918
      %v936 = vadd.f32 %v889, %v920
      %v937 = vadd.f32 %v890, %v922
      %v938 = vadd.f32 %v891, %v924
      %v939 = vperm.slane %v876, 3
      %941 = vrot.lane.b32.xlu0 %v939, 2
      %v942 = vpop.permute.xlu0 %941
      %v944 = vmul.f32 %v877, %v942
      %v945 = vmul.f32 %v878, %v942
      %v946 = vmul.f32 %v879, %v942
      %v947 = vmul.f32 %v880, %v942
      %v948 = vmul.f32 %v881, %v942
      %v949 = vmul.f32 %v882, %v942
      %v950 = vmul.f32 %v883, %v942
      %958 = vrot.lane.b32.xlu0 %v944, 126
      %v959 = vpop.permute.xlu0 %958
      %960 = vrot.lane.b32.xlu0 %v945, 126
      %v961 = vpop.permute.xlu0 %960
      %962 = vrot.lane.b32.xlu0 %v946, 126
      %v963 = vpop.permute.xlu0 %962
      %964 = vrot.lane.b32.xlu0 %v947, 126
      %v965 = vpop.permute.xlu0 %964
      %966 = vrot.lane.b32.xlu0 %v948, 126
      %v967 = vpop.permute.xlu0 %966
      %968 = vrot.lane.b32.xlu0 %v949, 126
      %v969 = vpop.permute.xlu0 %968
      %970 = vrot.lane.b32.xlu0 %v950, 126
      %v971 = vpop.permute.xlu0 %970
      %v979 = vadd.f32 %v932, %v959
      %v980 = vadd.f32 %v933, %v961
      %v981 = vadd.f32 %v934, %v963
      %v982 = vadd.f32 %v935, %v965
      %v983 = vadd.f32 %v936, %v967
      %v984 = vadd.f32 %v937, %v969
      %v985 = vadd.f32 %v938, %v971
      %v986 = vmul.f32 %v979, -6.2831855
      %v987 = vmul.f32 %v980, -6.2831855
      %v988 = vmul.f32 %v981, -6.2831855
      %v989 = vmul.f32 %v982, -6.2831855
      %v990 = vmul.f32 %v983, -6.2831855
      %v991 = vmul.f32 %v984, -6.2831855
      %v992 = vmul.f32 %v985, -6.2831855
      %v993 = vand.u32 2147483647, %v986
      %vm994 = vcmp.le.f32.partialorder %v993, 0.7853982
      %vm995 = vcmp.lt.s32.totalorder %v986, 0
      %v996 = vand.u32 %v986, 2139095040
      %v997 = vshrl.u32 %v996, 23
      %v998 = vsub.s32 %v997, 127
      %v999 = vand.u32 2147483647, %v986
      %v1000 = vand.u32 %v999, 8388607
      %v1001 = vor.u32 %v1000, 8388608
      %v1002 = vsub.s32 0, %v1001
      %v1003 = vadd.s32 %v998, 1
      %vm1004 = vcmp.gt.s32.totalorder %v1003, 0
      %v1005 = vsel %vm1004, %v1003, 0
      %v1006 = vshrl.u32 %v1005, 5
      %v1007 = vand.u32 %v1005, 31
      %v1008 = vsub.s32 32, %v1007
      %v1009 = vshrl.u32 683565275, %v1008
      %v1010 = vshll.u32 683565275, %v1007
      %v1011 = vshrl.u32 2475754826, %v1008
      %v1012 = vor.u32 %v1010, %v1011
      %v1013 = vshll.u32 2475754826, %v1007
      %v1014 = vshrl.u32 2131351028, %v1008
      %v1015 = vor.u32 %v1013, %v1014
      %v1016 = vshll.u32 2131351028, %v1007
      %v1017 = vshrl.u32 2102212464, %v1008
      %v1018 = vor.u32 %v1016, %v1017
      %v1019 = vshll.u32 2102212464, %v1007
      %v1020 = vshrl.u32 920167782, %v1008
      %v1021 = vor.u32 %v1019, %v1020
      %v1022 = vshll.u32 920167782, %v1007
      %v1023 = vshrl.u32 1326507024, %v1008
      %v1024 = vor.u32 %v1022, %v1023
      %vm1025 = vcmp.lt.s32.totalorder %v1006, 1
      %vm1026 = vcmp.lt.s32.totalorder %v1006, 2
      %vm1027 = vcmp.lt.s32.totalorder %v1006, 3
      %vm1028 = vcmp.lt.s32.totalorder %v1006, 4
      %v1029 = vsel %vm1025, %v1009, %v1012
      %v1030 = vsel %vm1028, %v1018, 2102212464
      %v1031 = vsel %vm1027, %v1015, %v1030
      %v1032 = vsel %vm1026, %v1029, %v1031
      %v1033 = vsel %vm1025, %v1012, %v1015
      %v1034 = vsel %vm1028, %v1021, 920167782
      %v1035 = vsel %vm1027, %v1018, %v1034
      %v1036 = vsel %vm1026, %v1033, %v1035
      %v1037 = vsel %vm1025, %v1015, %v1018
      %v1038 = vsel %vm1028, %v1024, 1326507024
      %v1039 = vsel %vm1027, %v1021, %v1038
      %v1040 = vsel %vm1026, %v1037, %v1039
      %v1041 = vshll.u32 %v1001, 8
      %v1042 = vand.u32 %v1041, 65535
      %v1043 = vshrl.u32 %v1041, 16
      %v1044 = vand.u32 %v1040, 65535
      %v1045 = vshrl.u32 %v1040, 16
      %v1046 = vmul.u32 %v1042, %v1044
      %v1047 = vmul.u32 %v1042, %v1045
      %v1048 = vmul.u32 %v1043, %v1044
      %v1049 = vmul.u32 %v1043, %v1045
      %v1050 = vshll.u32 %v1047, 16
      %v1051 = vshrl.u32 %v1047, 16
      %v1052 = vshll.u32 %v1048, 16
      %v1053 = vshrl.u32 %v1048, 16
      %vm1054 = vc.u32 %v1046, %v1050
      %v1055 = vsel %vm1054, 1, 0
      %v1056 = vadd.s32 %v1046, %v1050
      %v1057 = vadd.s32 %v1049, %v1055
      %vm1058 = vc.u32 %v1056, %v1052
      %v1059 = vsel %vm1058, 1, 0
      %v1060 = vadd.s32 %v1056, %v1052
      %v1061 = vadd.s32 %v1057, %v1059
      %v1062 = vadd.s32 %v1061, %v1051
      %v1063 = vadd.s32 %v1062, %v1053
      %v1064 = vand.u32 %v1041, 65535
      %v1065 = vshrl.u32 %v1041, 16
      %v1066 = vand.u32 %v1036, 65535
      %v1067 = vshrl.u32 %v1036, 16
      %v1068 = vmul.u32 %v1064, %v1066
      %v1069 = vmul.u32 %v1064, %v1067
      %v1070 = vmul.u32 %v1065, %v1066
      %v1071 = vmul.u32 %v1065, %v1067
      %v1072 = vshll.u32 %v1069, 16
      %v1073 = vshrl.u32 %v1069, 16
      %v1074 = vshll.u32 %v1070, 16
      %v1075 = vshrl.u32 %v1070, 16
      %vm1076 = vc.u32 %v1068, %v1072
      %v1077 = vsel %vm1076, 1, 0
      %v1078 = vadd.s32 %v1068, %v1072
      %v1079 = vadd.s32 %v1071, %v1077
      %vm1080 = vc.u32 %v1078, %v1074
      %v1081 = vsel %vm1080, 1, 0
      %v1082 = vadd.s32 %v1078, %v1074
      %v1083 = vadd.s32 %v1079, %v1081
      %v1084 = vadd.s32 %v1083, %v1073
      %v1085 = vadd.s32 %v1084, %v1075
      %v1086 = vmul.u32 %v1041, %v1032
      %v1087 = vadd.s32 %v1063, %v1082
      %vm1088 = vc.u32 %v1063, %v1082
      %v1089 = vadd.s32 %v1085, 1
      %v1090 = vsel %vm1088, %v1089, %v1085
      %v1091 = vadd.s32 %v1086, %v1090
      %v1092 = vadd.s32 %v1091, 536870912
      %v1093 = vshrl.u32 %v1092, 30
      %v1094 = vshll.u32 %v1093, 30
      %v1095 = vsub.s32 %v1091, %v1094
      %vm1096 = vcmp.lt.s32.totalorder %v1095, 0
      %v1097 = vsub.s32 0, %v1095
      %v1098 = vsel %vm1096, %v1097, %v1095
      %v1099 = vclz %v1098
      %v1100 = vsub.s32 %v1099, 2
      %vm1101 = vcmp.gt.s32.totalorder 0, %v1100
      %v1102 = vsel %vm1101, 0, %v1100
      %v1103 = vsub.s32 32, %v1102
      %v1104 = vshll.u32 %v1095, %v1102
      %v1105 = vshrl.u32 %v1087, %v1103
      %v1106 = vor.u32 %v1104, %v1105
      %v1107 = vsub.s32 4294967266, %v1102
      %v1108 = vadd.s32 %v1107, 127
      %v1109 = vshll.u32 %v1108, 23
      %v1110 = vor.u32 4788187, %v1109
      %v1111 = vand.u32 2147483647, %v1110
      %v1113 = vcvt.s32.f32 %v1106
      %v1114 = vmul.f32 %v1113, %v1111
      %v1115 = vxor.u32 %v1114, 2147483648
      %v1116 = vsel %vm995, %v1115, %v1114
      %v1117 = vsub.s32 4, %v1093
      %v1118 = vsel %vm995, %v1117, %v1093
      %v1119 = vsel %vm994, %v986, %v1116
      %v1120 = vsel %vm994, 0, %v1118
      %v1121 = vmul.f32 %v1119, %v1119
      %v1122 = vmul.f32 %v1121, -0.001358992
      %v1123 = vadd.f32 %v1122, 0.041655596
      %v1124 = vmul.f32 %v1121, %v1123
      %v1125 = vadd.f32 %v1124, -0.4999988
      %v1126 = vmul.f32 %v1121, %v1125
      %v1127 = vadd.f32 1.0, %v1126
      %v1128 = vmul.f32 %v1119, %v1119
      %v1129 = vmul.f32 %v1128, -0.00019511016
      %v1130 = vadd.f32 %v1129, 0.008332121
      %v1131 = vmul.f32 %v1128, %v1130
      %v1132 = vadd.f32 %v1131, -0.16666654
      %v1133 = vmul.f32 %v1128, %v1132
      %v1134 = vadd.f32 %v1133, 1.0
      %v1135 = vmul.f32 %v1134, %v1119
      %vm1136 = vweird.f32 %v986
      %v1137 = vand.u32 %v1120, 3
      %vm1138 = vcmp.lt.s32.totalorder %v1137, 2
      %vm1139 = vcmp.eq.s32.totalorder %v1137, 0
      %v1140 = vxor.u32 %v1135, 2147483648
      %v1141 = vsel %vm1139, %v1127, %v1140
      %vm1142 = vcmp.eq.s32.totalorder %v1137, 2
      %v1143 = vxor.u32 %v1127, 2147483648
      %v1144 = vsel %vm1142, %v1143, %v1135
      %v1145 = vsel %vm1138, %v1141, %v1144
      %v1146 = vsel %vm1136, nan, %v1145
      %v1147 = vand.u32 2147483647, %v987
      %vm1148 = vcmp.le.f32.partialorder %v1147, 0.7853982
      %vm1149 = vcmp.lt.s32.totalorder %v987, 0
      %v1150 = vand.u32 %v987, 2139095040
      %v1151 = vshrl.u32 %v1150, 23
      %v1152 = vsub.s32 %v1151, 127
      %v1153 = vand.u32 2147483647, %v987
      %v1154 = vand.u32 %v1153, 8388607
      %v1155 = vor.u32 %v1154, 8388608
      %v1156 = vsub.s32 0, %v1155
      %v1157 = vadd.s32 %v1152, 1
      %vm1158 = vcmp.gt.s32.totalorder %v1157, 0
      %v1159 = vsel %vm1158, %v1157, 0
      %v1160 = vshrl.u32 %v1159, 5
      %v1161 = vand.u32 %v1159, 31
      %v1162 = vsub.s32 32, %v1161
      %v1163 = vshrl.u32 683565275, %v1162
      %v1164 = vshll.u32 683565275, %v1161
      %v1165 = vshrl.u32 2475754826, %v1162
      %v1166 = vor.u32 %v1164, %v1165
      %v1167 = vshll.u32 2475754826, %v1161
      %v1168 = vshrl.u32 2131351028, %v1162
      %v1169 = vor.u32 %v1167, %v1168
      %v1170 = vshll.u32 2131351028, %v1161
      %v1171 = vshrl.u32 2102212464, %v1162
      %v1172 = vor.u32 %v1170, %v1171
      %v1173 = vshll.u32 2102212464, %v1161
      %v1174 = vshrl.u32 920167782, %v1162
      %v1175 = vor.u32 %v1173, %v1174
      %v1176 = vshll.u32 920167782, %v1161
      %v1177 = vshrl.u32 1326507024, %v1162
      %v1178 = vor.u32 %v1176, %v1177
      %vm1179 = vcmp.lt.s32.totalorder %v1160, 1
      %vm1180 = vcmp.lt.s32.totalorder %v1160, 2
      %vm1181 = vcmp.lt.s32.totalorder %v1160, 3
      %vm1182 = vcmp.lt.s32.totalorder %v1160, 4
      %v1183 = vsel %vm1179, %v1163, %v1166
      %v1184 = vsel %vm1182, %v1172, 2102212464
      %v1185 = vsel %vm1181, %v1169, %v1184
      %v1186 = vsel %vm1180, %v1183, %v1185
      %v1187 = vsel %vm1179, %v1166, %v1169
      %v1188 = vsel %vm1182, %v1175, 920167782
      %v1189 = vsel %vm1181, %v1172, %v1188
      %v1190 = vsel %vm1180, %v1187, %v1189
      %v1191 = vsel %vm1179, %v1169, %v1172
      %v1192 = vsel %vm1182, %v1178, 1326507024
      %v1193 = vsel %vm1181, %v1175, %v1192
      %v1194 = vsel %vm1180, %v1191, %v1193
      %v1195 = vshll.u32 %v1155, 8
      %v1196 = vand.u32 %v1195, 65535
      %v1197 = vshrl.u32 %v1195, 16
      %v1198 = vand.u32 %v1194, 65535
      %v1199 = vshrl.u32 %v1194, 16
      %v1200 = vmul.u32 %v1196, %v1198
      %v1201 = vmul.u32 %v1196, %v1199
      %v1202 = vmul.u32 %v1197, %v1198
      %v1203 = vmul.u32 %v1197, %v1199
      %v1204 = vshll.u32 %v1201, 16
      %v1205 = vshrl.u32 %v1201, 16
      %v1206 = vshll.u32 %v1202, 16
      %v1207 = vshrl.u32 %v1202, 16
      %vm1208 = vc.u32 %v1200, %v1204
      %v1209 = vsel %vm1208, 1, 0
      %v1210 = vadd.s32 %v1200, %v1204
      %v1211 = vadd.s32 %v1203, %v1209
      %vm1212 = vc.u32 %v1210, %v1206
      %v1213 = vsel %vm1212, 1, 0
      %v1214 = vadd.s32 %v1210, %v1206
      %v1215 = vadd.s32 %v1211, %v1213
      %v1216 = vadd.s32 %v1215, %v1205
      %v1217 = vadd.s32 %v1216, %v1207
      %v1218 = vand.u32 %v1195, 65535
      %v1219 = vshrl.u32 %v1195, 16
      %v1220 = vand.u32 %v1190, 65535
      %v1221 = vshrl.u32 %v1190, 16
      %v1222 = vmul.u32 %v1218, %v1220
      %v1223 = vmul.u32 %v1218, %v1221
      %v1224 = vmul.u32 %v1219, %v1220
      %v1225 = vmul.u32 %v1219, %v1221
      %v1226 = vshll.u32 %v1223, 16
      %v1227 = vshrl.u32 %v1223, 16
      %v1228 = vshll.u32 %v1224, 16
      %v1229 = vshrl.u32 %v1224, 16
      %vm1230 = vc.u32 %v1222, %v1226
      %v1231 = vsel %vm1230, 1, 0
      %v1232 = vadd.s32 %v1222, %v1226
      %v1233 = vadd.s32 %v1225, %v1231
      %vm1234 = vc.u32 %v1232, %v1228
      %v1235 = vsel %vm1234, 1, 0
      %v1236 = vadd.s32 %v1232, %v1228
      %v1237 = vadd.s32 %v1233, %v1235
      %v1238 = vadd.s32 %v1237, %v1227
      %v1239 = vadd.s32 %v1238, %v1229
      %v1240 = vmul.u32 %v1195, %v1186
      %v1241 = vadd.s32 %v1217, %v1236
      %vm1242 = vc.u32 %v1217, %v1236
      %v1243 = vadd.s32 %v1239, 1
      %v1244 = vsel %vm1242, %v1243, %v1239
      %v1245 = vadd.s32 %v1240, %v1244
      %v1246 = vadd.s32 %v1245, 536870912
      %v1247 = vshrl.u32 %v1246, 30
      %v1248 = vshll.u32 %v1247, 30
      %v1249 = vsub.s32 %v1245, %v1248
      %vm1250 = vcmp.lt.s32.totalorder %v1249, 0
      %v1251 = vsub.s32 0, %v1249
      %v1252 = vsel %vm1250, %v1251, %v1249
      %v1253 = vclz %v1252
      %v1254 = vsub.s32 %v1253, 2
      %vm1255 = vcmp.gt.s32.totalorder 0, %v1254
      %v1256 = vsel %vm1255, 0, %v1254
      %v1257 = vsub.s32 32, %v1256
      %v1258 = vshll.u32 %v1249, %v1256
      %v1259 = vshrl.u32 %v1241, %v1257
      %v1260 = vor.u32 %v1258, %v1259
      %v1261 = vsub.s32 4294967266, %v1256
      %v1262 = vadd.s32 %v1261, 127
      %v1263 = vshll.u32 %v1262, 23
      %v1264 = vor.u32 4788187, %v1263
      %v1265 = vand.u32 2147483647, %v1264
      %v1267 = vcvt.s32.f32 %v1260
      %v1268 = vmul.f32 %v1267, %v1265
      %v1269 = vxor.u32 %v1268, 2147483648
      %v1270 = vsel %vm1149, %v1269, %v1268
      %v1271 = vsub.s32 4, %v1247
      %v1272 = vsel %vm1149, %v1271, %v1247
      %v1273 = vsel %vm1148, %v987, %v1270
      %v1274 = vsel %vm1148, 0, %v1272
      %v1275 = vmul.f32 %v1273, %v1273
      %v1276 = vmul.f32 %v1275, -0.001358992
      %v1277 = vadd.f32 %v1276, 0.041655596
      %v1278 = vmul.f32 %v1275, %v1277
      %v1279 = vadd.f32 %v1278, -0.4999988
      %v1280 = vmul.f32 %v1275, %v1279
      %v1281 = vadd.f32 1.0, %v1280
      %v1282 = vmul.f32 %v1273, %v1273
      %v1283 = vmul.f32 %v1282, -0.00019511016
      %v1284 = vadd.f32 %v1283, 0.008332121
      %v1285 = vmul.f32 %v1282, %v1284
      %v1286 = vadd.f32 %v1285, -0.16666654
      %v1287 = vmul.f32 %v1282, %v1286
      %v1288 = vadd.f32 %v1287, 1.0
      %v1289 = vmul.f32 %v1288, %v1273
      %vm1290 = vweird.f32 %v987
      %v1291 = vand.u32 %v1274, 3
      %vm1292 = vcmp.lt.s32.totalorder %v1291, 2
      %vm1293 = vcmp.eq.s32.totalorder %v1291, 0
      %v1294 = vxor.u32 %v1289, 2147483648
      %v1295 = vsel %vm1293, %v1281, %v1294
      %vm1296 = vcmp.eq.s32.totalorder %v1291, 2
      %v1297 = vxor.u32 %v1281, 2147483648
      %v1298 = vsel %vm1296, %v1297, %v1289
      %v1299 = vsel %vm1292, %v1295, %v1298
      %v1300 = vsel %vm1290, nan, %v1299
      %v1301 = vand.u32 2147483647, %v988
      %vm1302 = vcmp.le.f32.partialorder %v1301, 0.7853982
      %vm1303 = vcmp.lt.s32.totalorder %v988, 0
      %v1304 = vand.u32 %v988, 2139095040
      %v1305 = vshrl.u32 %v1304, 23
      %v1306 = vsub.s32 %v1305, 127
      %v1307 = vand.u32 2147483647, %v988
      %v1308 = vand.u32 %v1307, 8388607
      %v1309 = vor.u32 %v1308, 8388608
      %v1310 = vsub.s32 0, %v1309
      %v1311 = vadd.s32 %v1306, 1
      %vm1312 = vcmp.gt.s32.totalorder %v1311, 0
      %v1313 = vsel %vm1312, %v1311, 0
      %v1314 = vshrl.u32 %v1313, 5
      %v1315 = vand.u32 %v1313, 31
      %v1316 = vsub.s32 32, %v1315
      %v1317 = vshrl.u32 683565275, %v1316
      %v1318 = vshll.u32 683565275, %v1315
      %v1319 = vshrl.u32 2475754826, %v1316
      %v1320 = vor.u32 %v1318, %v1319
      %v1321 = vshll.u32 2475754826, %v1315
      %v1322 = vshrl.u32 2131351028, %v1316
      %v1323 = vor.u32 %v1321, %v1322
      %v1324 = vshll.u32 2131351028, %v1315
      %v1325 = vshrl.u32 2102212464, %v1316
      %v1326 = vor.u32 %v1324, %v1325
      %v1327 = vshll.u32 2102212464, %v1315
      %v1328 = vshrl.u32 920167782, %v1316
      %v1329 = vor.u32 %v1327, %v1328
      %v1330 = vshll.u32 920167782, %v1315
      %v1331 = vshrl.u32 1326507024, %v1316
      %v1332 = vor.u32 %v1330, %v1331
      %vm1333 = vcmp.lt.s32.totalorder %v1314, 1
      %vm1334 = vcmp.lt.s32.totalorder %v1314, 2
      %vm1335 = vcmp.lt.s32.totalorder %v1314, 3
      %vm1336 = vcmp.lt.s32.totalorder %v1314, 4
      %v1337 = vsel %vm1333, %v1317, %v1320
      %v1338 = vsel %vm1336, %v1326, 2102212464
      %v1339 = vsel %vm1335, %v1323, %v1338
      %v1340 = vsel %vm1334, %v1337, %v1339
      %v1341 = vsel %vm1333, %v1320, %v1323
      %v1342 = vsel %vm1336, %v1329, 920167782
      %v1343 = vsel %vm1335, %v1326, %v1342
      %v1344 = vsel %vm1334, %v1341, %v1343
      %v1345 = vsel %vm1333, %v1323, %v1326
      %v1346 = vsel %vm1336, %v1332, 1326507024
      %v1347 = vsel %vm1335, %v1329, %v1346
      %v1348 = vsel %vm1334, %v1345, %v1347
      %v1349 = vshll.u32 %v1309, 8
      %v1350 = vand.u32 %v1349, 65535
      %v1351 = vshrl.u32 %v1349, 16
      %v1352 = vand.u32 %v1348, 65535
      %v1353 = vshrl.u32 %v1348, 16
      %v1354 = vmul.u32 %v1350, %v1352
      %v1355 = vmul.u32 %v1350, %v1353
      %v1356 = vmul.u32 %v1351, %v1352
      %v1357 = vmul.u32 %v1351, %v1353
      %v1358 = vshll.u32 %v1355, 16
      %v1359 = vshrl.u32 %v1355, 16
      %v1360 = vshll.u32 %v1356, 16
      %v1361 = vshrl.u32 %v1356, 16
      %vm1362 = vc.u32 %v1354, %v1358
      %v1363 = vsel %vm1362, 1, 0
      %v1364 = vadd.s32 %v1354, %v1358
      %v1365 = vadd.s32 %v1357, %v1363
      %vm1366 = vc.u32 %v1364, %v1360
      %v1367 = vsel %vm1366, 1, 0
      %v1368 = vadd.s32 %v1364, %v1360
      %v1369 = vadd.s32 %v1365, %v1367
      %v1370 = vadd.s32 %v1369, %v1359
      %v1371 = vadd.s32 %v1370, %v1361
      %v1372 = vand.u32 %v1349, 65535
      %v1373 = vshrl.u32 %v1349, 16
      %v1374 = vand.u32 %v1344, 65535
      %v1375 = vshrl.u32 %v1344, 16
      %v1376 = vmul.u32 %v1372, %v1374
      %v1377 = vmul.u32 %v1372, %v1375
      %v1378 = vmul.u32 %v1373, %v1374
      %v1379 = vmul.u32 %v1373, %v1375
      %v1380 = vshll.u32 %v1377, 16
      %v1381 = vshrl.u32 %v1377, 16
      %v1382 = vshll.u32 %v1378, 16
      %v1383 = vshrl.u32 %v1378, 16
      %vm1384 = vc.u32 %v1376, %v1380
      %v1385 = vsel %vm1384, 1, 0
      %v1386 = vadd.s32 %v1376, %v1380
      %v1387 = vadd.s32 %v1379, %v1385
      %vm1388 = vc.u32 %v1386, %v1382
      %v1389 = vsel %vm1388, 1, 0
      %v1390 = vadd.s32 %v1386, %v1382
      %v1391 = vadd.s32 %v1387, %v1389
      %v1392 = vadd.s32 %v1391, %v1381
      %v1393 = vadd.s32 %v1392, %v1383
      %v1394 = vmul.u32 %v1349, %v1340
      %v1395 = vadd.s32 %v1371, %v1390
      %vm1396 = vc.u32 %v1371, %v1390
      %v1397 = vadd.s32 %v1393, 1
      %v1398 = vsel %vm1396, %v1397, %v1393
      %v1399 = vadd.s32 %v1394, %v1398
      %v1400 = vadd.s32 %v1399, 536870912
      %v1401 = vshrl.u32 %v1400, 30
      %v1402 = vshll.u32 %v1401, 30
      %v1403 = vsub.s32 %v1399, %v1402
      %vm1404 = vcmp.lt.s32.totalorder %v1403, 0
      %v1405 = vsub.s32 0, %v1403
      %v1406 = vsel %vm1404, %v1405, %v1403
      %v1407 = vclz %v1406
      %v1408 = vsub.s32 %v1407, 2
      %vm1409 = vcmp.gt.s32.totalorder 0, %v1408
      %v1410 = vsel %vm1409, 0, %v1408
      %v1411 = vsub.s32 32, %v1410
      %v1412 = vshll.u32 %v1403, %v1410
      %v1413 = vshrl.u32 %v1395, %v1411
      %v1414 = vor.u32 %v1412, %v1413
      %v1415 = vsub.s32 4294967266, %v1410
      %v1416 = vadd.s32 %v1415, 127
      %v1417 = vshll.u32 %v1416, 23
      %v1418 = vor.u32 4788187, %v1417
      %v1419 = vand.u32 2147483647, %v1418
      %v1421 = vcvt.s32.f32 %v1414
      %v1422 = vmul.f32 %v1421, %v1419
      %v1423 = vxor.u32 %v1422, 2147483648
      %v1424 = vsel %vm1303, %v1423, %v1422
      %v1425 = vsub.s32 4, %v1401
      %v1426 = vsel %vm1303, %v1425, %v1401
      %v1427 = vsel %vm1302, %v988, %v1424
      %v1428 = vsel %vm1302, 0, %v1426
      %v1429 = vmul.f32 %v1427, %v1427
      %v1430 = vmul.f32 %v1429, -0.001358992
      %v1431 = vadd.f32 %v1430, 0.041655596
      %v1432 = vmul.f32 %v1429, %v1431
      %v1433 = vadd.f32 %v1432, -0.4999988
      %v1434 = vmul.f32 %v1429, %v1433
      %v1435 = vadd.f32 1.0, %v1434
      %v1436 = vmul.f32 %v1427, %v1427
      %v1437 = vmul.f32 %v1436, -0.00019511016
      %v1438 = vadd.f32 %v1437, 0.008332121
      %v1439 = vmul.f32 %v1436, %v1438
      %v1440 = vadd.f32 %v1439, -0.16666654
      %v1441 = vmul.f32 %v1436, %v1440
      %v1442 = vadd.f32 %v1441, 1.0
      %v1443 = vmul.f32 %v1442, %v1427
      %vm1444 = vweird.f32 %v988
      %v1445 = vand.u32 %v1428, 3
      %vm1446 = vcmp.lt.s32.totalorder %v1445, 2
      %vm1447 = vcmp.eq.s32.totalorder %v1445, 0
      %v1448 = vxor.u32 %v1443, 2147483648
      %v1449 = vsel %vm1447, %v1435, %v1448
      %vm1450 = vcmp.eq.s32.totalorder %v1445, 2
      %v1451 = vxor.u32 %v1435, 2147483648
      %v1452 = vsel %vm1450, %v1451, %v1443
      %v1453 = vsel %vm1446, %v1449, %v1452
      %v1454 = vsel %vm1444, nan, %v1453
      %v1455 = vand.u32 2147483647, %v989
      %vm1456 = vcmp.le.f32.partialorder %v1455, 0.7853982
      %vm1457 = vcmp.lt.s32.totalorder %v989, 0
      %v1458 = vand.u32 %v989, 2139095040
      %v1459 = vshrl.u32 %v1458, 23
      %v1460 = vsub.s32 %v1459, 127
      %v1461 = vand.u32 2147483647, %v989
      %v1462 = vand.u32 %v1461, 8388607
      %v1463 = vor.u32 %v1462, 8388608
      %v1464 = vsub.s32 0, %v1463
      %v1465 = vadd.s32 %v1460, 1
      %vm1466 = vcmp.gt.s32.totalorder %v1465, 0
      %v1467 = vsel %vm1466, %v1465, 0
      %v1468 = vshrl.u32 %v1467, 5
      %v1469 = vand.u32 %v1467, 31
      %v1470 = vsub.s32 32, %v1469
      %v1471 = vshrl.u32 683565275, %v1470
      %v1472 = vshll.u32 683565275, %v1469
      %v1473 = vshrl.u32 2475754826, %v1470
      %v1474 = vor.u32 %v1472, %v1473
      %v1475 = vshll.u32 2475754826, %v1469
      %v1476 = vshrl.u32 2131351028, %v1470
      %v1477 = vor.u32 %v1475, %v1476
      %v1478 = vshll.u32 2131351028, %v1469
      %v1479 = vshrl.u32 2102212464, %v1470
      %v1480 = vor.u32 %v1478, %v1479
      %v1481 = vshll.u32 2102212464, %v1469
      %v1482 = vshrl.u32 920167782, %v1470
      %v1483 = vor.u32 %v1481, %v1482
      %v1484 = vshll.u32 920167782, %v1469
      %v1485 = vshrl.u32 1326507024, %v1470
      %v1486 = vor.u32 %v1484, %v1485
      %vm1487 = vcmp.lt.s32.totalorder %v1468, 1
      %vm1488 = vcmp.lt.s32.totalorder %v1468, 2
      %vm1489 = vcmp.lt.s32.totalorder %v1468, 3
      %vm1490 = vcmp.lt.s32.totalorder %v1468, 4
      %v1491 = vsel %vm1487, %v1471, %v1474
      %v1492 = vsel %vm1490, %v1480, 2102212464
      %v1493 = vsel %vm1489, %v1477, %v1492
      %v1494 = vsel %vm1488, %v1491, %v1493
      %v1495 = vsel %vm1487, %v1474, %v1477
      %v1496 = vsel %vm1490, %v1483, 920167782
      %v1497 = vsel %vm1489, %v1480, %v1496
      %v1498 = vsel %vm1488, %v1495, %v1497
      %v1499 = vsel %vm1487, %v1477, %v1480
      %v1500 = vsel %vm1490, %v1486, 1326507024
      %v1501 = vsel %vm1489, %v1483, %v1500
      %v1502 = vsel %vm1488, %v1499, %v1501
      %v1503 = vshll.u32 %v1463, 8
      %v1504 = vand.u32 %v1503, 65535
      %v1505 = vshrl.u32 %v1503, 16
      %v1506 = vand.u32 %v1502, 65535
      %v1507 = vshrl.u32 %v1502, 16
      %v1508 = vmul.u32 %v1504, %v1506
      %v1509 = vmul.u32 %v1504, %v1507
      %v1510 = vmul.u32 %v1505, %v1506
      %v1511 = vmul.u32 %v1505, %v1507
      %v1512 = vshll.u32 %v1509, 16
      %v1513 = vshrl.u32 %v1509, 16
      %v1514 = vshll.u32 %v1510, 16
      %v1515 = vshrl.u32 %v1510, 16
      %vm1516 = vc.u32 %v1508, %v1512
      %v1517 = vsel %vm1516, 1, 0
      %v1518 = vadd.s32 %v1508, %v1512
      %v1519 = vadd.s32 %v1511, %v1517
      %vm1520 = vc.u32 %v1518, %v1514
      %v1521 = vsel %vm1520, 1, 0
      %v1522 = vadd.s32 %v1518, %v1514
      %v1523 = vadd.s32 %v1519, %v1521
      %v1524 = vadd.s32 %v1523, %v1513
      %v1525 = vadd.s32 %v1524, %v1515
      %v1526 = vand.u32 %v1503, 65535
      %v1527 = vshrl.u32 %v1503, 16
      %v1528 = vand.u32 %v1498, 65535
      %v1529 = vshrl.u32 %v1498, 16
      %v1530 = vmul.u32 %v1526, %v1528
      %v1531 = vmul.u32 %v1526, %v1529
      %v1532 = vmul.u32 %v1527, %v1528
      %v1533 = vmul.u32 %v1527, %v1529
      %v1534 = vshll.u32 %v1531, 16
      %v1535 = vshrl.u32 %v1531, 16
      %v1536 = vshll.u32 %v1532, 16
      %v1537 = vshrl.u32 %v1532, 16
      %vm1538 = vc.u32 %v1530, %v1534
      %v1539 = vsel %vm1538, 1, 0
      %v1540 = vadd.s32 %v1530, %v1534
      %v1541 = vadd.s32 %v1533, %v1539
      %vm1542 = vc.u32 %v1540, %v1536
      %v1543 = vsel %vm1542, 1, 0
      %v1544 = vadd.s32 %v1540, %v1536
      %v1545 = vadd.s32 %v1541, %v1543
      %v1546 = vadd.s32 %v1545, %v1535
      %v1547 = vadd.s32 %v1546, %v1537
      %v1548 = vmul.u32 %v1503, %v1494
      %v1549 = vadd.s32 %v1525, %v1544
      %vm1550 = vc.u32 %v1525, %v1544
      %v1551 = vadd.s32 %v1547, 1
      %v1552 = vsel %vm1550, %v1551, %v1547
      %v1553 = vadd.s32 %v1548, %v1552
      %v1554 = vadd.s32 %v1553, 536870912
      %v1555 = vshrl.u32 %v1554, 30
      %v1556 = vshll.u32 %v1555, 30
      %v1557 = vsub.s32 %v1553, %v1556
      %vm1558 = vcmp.lt.s32.totalorder %v1557, 0
      %v1559 = vsub.s32 0, %v1557
      %v1560 = vsel %vm1558, %v1559, %v1557
      %v1561 = vclz %v1560
      %v1562 = vsub.s32 %v1561, 2
      %vm1563 = vcmp.gt.s32.totalorder 0, %v1562
      %v1564 = vsel %vm1563, 0, %v1562
      %v1565 = vsub.s32 32, %v1564
      %v1566 = vshll.u32 %v1557, %v1564
      %v1567 = vshrl.u32 %v1549, %v1565
      %v1568 = vor.u32 %v1566, %v1567
      %v1569 = vsub.s32 4294967266, %v1564
      %v1570 = vadd.s32 %v1569, 127
      %v1571 = vshll.u32 %v1570, 23
      %v1572 = vor.u32 4788187, %v1571
      %v1573 = vand.u32 2147483647, %v1572
      %v1575 = vcvt.s32.f32 %v1568
      %v1576 = vmul.f32 %v1575, %v1573
      %v1577 = vxor.u32 %v1576, 2147483648
      %v1578 = vsel %vm1457, %v1577, %v1576
      %v1579 = vsub.s32 4, %v1555
      %v1580 = vsel %vm1457, %v1579, %v1555
      %v1581 = vsel %vm1456, %v989, %v1578
      %v1582 = vsel %vm1456, 0, %v1580
      %v1583 = vmul.f32 %v1581, %v1581
      %v1584 = vmul.f32 %v1583, -0.001358992
      %v1585 = vadd.f32 %v1584, 0.041655596
      %v1586 = vmul.f32 %v1583, %v1585
      %v1587 = vadd.f32 %v1586, -0.4999988
      %v1588 = vmul.f32 %v1583, %v1587
      %v1589 = vadd.f32 1.0, %v1588
      %v1590 = vmul.f32 %v1581, %v1581
      %v1591 = vmul.f32 %v1590, -0.00019511016
      %v1592 = vadd.f32 %v1591, 0.008332121
      %v1593 = vmul.f32 %v1590, %v1592
      %v1594 = vadd.f32 %v1593, -0.16666654
      %v1595 = vmul.f32 %v1590, %v1594
      %v1596 = vadd.f32 %v1595, 1.0
      %v1597 = vmul.f32 %v1596, %v1581
      %vm1598 = vweird.f32 %v989
      %v1599 = vand.u32 %v1582, 3
      %vm1600 = vcmp.lt.s32.totalorder %v1599, 2
      %vm1601 = vcmp.eq.s32.totalorder %v1599, 0
      %v1602 = vxor.u32 %v1597, 2147483648
      %v1603 = vsel %vm1601, %v1589, %v1602
      %vm1604 = vcmp.eq.s32.totalorder %v1599, 2
      %v1605 = vxor.u32 %v1589, 2147483648
      %v1606 = vsel %vm1604, %v1605, %v1597
      %v1607 = vsel %vm1600, %v1603, %v1606
      %v1608 = vsel %vm1598, nan, %v1607
      %v1609 = vand.u32 2147483647, %v990
      %vm1610 = vcmp.le.f32.partialorder %v1609, 0.7853982
      %vm1611 = vcmp.lt.s32.totalorder %v990, 0
      %v1612 = vand.u32 %v990, 2139095040
      %v1613 = vshrl.u32 %v1612, 23
      %v1614 = vsub.s32 %v1613, 127
      %v1615 = vand.u32 2147483647, %v990
      %v1616 = vand.u32 %v1615, 8388607
      %v1617 = vor.u32 %v1616, 8388608
      %v1618 = vsub.s32 0, %v1617
      %v1619 = vadd.s32 %v1614, 1
      %vm1620 = vcmp.gt.s32.totalorder %v1619, 0
      %v1621 = vsel %vm1620, %v1619, 0
      %v1622 = vshrl.u32 %v1621, 5
      %v1623 = vand.u32 %v1621, 31
      %v1624 = vsub.s32 32, %v1623
      %v1625 = vshrl.u32 683565275, %v1624
      %v1626 = vshll.u32 683565275, %v1623
      %v1627 = vshrl.u32 2475754826, %v1624
      %v1628 = vor.u32 %v1626, %v1627
      %v1629 = vshll.u32 2475754826, %v1623
      %v1630 = vshrl.u32 2131351028, %v1624
      %v1631 = vor.u32 %v1629, %v1630
      %v1632 = vshll.u32 2131351028, %v1623
      %v1633 = vshrl.u32 2102212464, %v1624
      %v1634 = vor.u32 %v1632, %v1633
      %v1635 = vshll.u32 2102212464, %v1623
      %v1636 = vshrl.u32 920167782, %v1624
      %v1637 = vor.u32 %v1635, %v1636
      %v1638 = vshll.u32 920167782, %v1623
      %v1639 = vshrl.u32 1326507024, %v1624
      %v1640 = vor.u32 %v1638, %v1639
      %vm1641 = vcmp.lt.s32.totalorder %v1622, 1
      %vm1642 = vcmp.lt.s32.totalorder %v1622, 2
      %vm1643 = vcmp.lt.s32.totalorder %v1622, 3
      %vm1644 = vcmp.lt.s32.totalorder %v1622, 4
      %v1645 = vsel %vm1641, %v1625, %v1628
      %v1646 = vsel %vm1644, %v1634, 2102212464
      %v1647 = vsel %vm1643, %v1631, %v1646
      %v1648 = vsel %vm1642, %v1645, %v1647
      %v1649 = vsel %vm1641, %v1628, %v1631
      %v1650 = vsel %vm1644, %v1637, 920167782
      %v1651 = vsel %vm1643, %v1634, %v1650
      %v1652 = vsel %vm1642, %v1649, %v1651
      %v1653 = vsel %vm1641, %v1631, %v1634
      %v1654 = vsel %vm1644, %v1640, 1326507024
      %v1655 = vsel %vm1643, %v1637, %v1654
      %v1656 = vsel %vm1642, %v1653, %v1655
      %v1657 = vshll.u32 %v1617, 8
      %v1658 = vand.u32 %v1657, 65535
      %v1659 = vshrl.u32 %v1657, 16
      %v1660 = vand.u32 %v1656, 65535
      %v1661 = vshrl.u32 %v1656, 16
      %v1662 = vmul.u32 %v1658, %v1660
      %v1663 = vmul.u32 %v1658, %v1661
      %v1664 = vmul.u32 %v1659, %v1660
      %v1665 = vmul.u32 %v1659, %v1661
      %v1666 = vshll.u32 %v1663, 16
      %v1667 = vshrl.u32 %v1663, 16
      %v1668 = vshll.u32 %v1664, 16
      %v1669 = vshrl.u32 %v1664, 16
      %vm1670 = vc.u32 %v1662, %v1666
      %v1671 = vsel %vm1670, 1, 0
      %v1672 = vadd.s32 %v1662, %v1666
      %v1673 = vadd.s32 %v1665, %v1671
      %vm1674 = vc.u32 %v1672, %v1668
      %v1675 = vsel %vm1674, 1, 0
      %v1676 = vadd.s32 %v1672, %v1668
      %v1677 = vadd.s32 %v1673, %v1675
      %v1678 = vadd.s32 %v1677, %v1667
      %v1679 = vadd.s32 %v1678, %v1669
      %v1680 = vand.u32 %v1657, 65535
      %v1681 = vshrl.u32 %v1657, 16
      %v1682 = vand.u32 %v1652, 65535
      %v1683 = vshrl.u32 %v1652, 16
      %v1684 = vmul.u32 %v1680, %v1682
      %v1685 = vmul.u32 %v1680, %v1683
      %v1686 = vmul.u32 %v1681, %v1682
      %v1687 = vmul.u32 %v1681, %v1683
      %v1688 = vshll.u32 %v1685, 16
      %v1689 = vshrl.u32 %v1685, 16
      %v1690 = vshll.u32 %v1686, 16
      %v1691 = vshrl.u32 %v1686, 16
      %vm1692 = vc.u32 %v1684, %v1688
      %v1693 = vsel %vm1692, 1, 0
      %v1694 = vadd.s32 %v1684, %v1688
      %v1695 = vadd.s32 %v1687, %v1693
      %vm1696 = vc.u32 %v1694, %v1690
      %v1697 = vsel %vm1696, 1, 0
      %v1698 = vadd.s32 %v1694, %v1690
      %v1699 = vadd.s32 %v1695, %v1697
      %v1700 = vadd.s32 %v1699, %v1689
      %v1701 = vadd.s32 %v1700, %v1691
      %v1702 = vmul.u32 %v1657, %v1648
      %v1703 = vadd.s32 %v1679, %v1698
      %vm1704 = vc.u32 %v1679, %v1698
      %v1705 = vadd.s32 %v1701, 1
      %v1706 = vsel %vm1704, %v1705, %v1701
      %v1707 = vadd.s32 %v1702, %v1706
      %v1708 = vadd.s32 %v1707, 536870912
      %v1709 = vshrl.u32 %v1708, 30
      %v1710 = vshll.u32 %v1709, 30
      %v1711 = vsub.s32 %v1707, %v1710
      %vm1712 = vcmp.lt.s32.totalorder %v1711, 0
      %v1713 = vsub.s32 0, %v1711
      %v1714 = vsel %vm1712, %v1713, %v1711
      %v1715 = vclz %v1714
      %v1716 = vsub.s32 %v1715, 2
      %vm1717 = vcmp.gt.s32.totalorder 0, %v1716
      %v1718 = vsel %vm1717, 0, %v1716
      %v1719 = vsub.s32 32, %v1718
      %v1720 = vshll.u32 %v1711, %v1718
      %v1721 = vshrl.u32 %v1703, %v1719
      %v1722 = vor.u32 %v1720, %v1721
      %v1723 = vsub.s32 4294967266, %v1718
      %v1724 = vadd.s32 %v1723, 127
      %v1725 = vshll.u32 %v1724, 23
      %v1726 = vor.u32 4788187, %v1725
      %v1727 = vand.u32 2147483647, %v1726
      %v1729 = vcvt.s32.f32 %v1722
      %v1730 = vmul.f32 %v1729, %v1727
      %v1731 = vxor.u32 %v1730, 2147483648
      %v1732 = vsel %vm1611, %v1731, %v1730
      %v1733 = vsub.s32 4, %v1709
      %v1734 = vsel %vm1611, %v1733, %v1709
      %v1735 = vsel %vm1610, %v990, %v1732
      %v1736 = vsel %vm1610, 0, %v1734
      %v1737 = vmul.f32 %v1735, %v1735
      %v1738 = vmul.f32 %v1737, -0.001358992
      %v1739 = vadd.f32 %v1738, 0.041655596
      %v1740 = vmul.f32 %v1737, %v1739
      %v1741 = vadd.f32 %v1740, -0.4999988
      %v1742 = vmul.f32 %v1737, %v1741
      %v1743 = vadd.f32 1.0, %v1742
      %v1744 = vmul.f32 %v1735, %v1735
      %v1745 = vmul.f32 %v1744, -0.00019511016
      %v1746 = vadd.f32 %v1745, 0.008332121
      %v1747 = vmul.f32 %v1744, %v1746
      %v1748 = vadd.f32 %v1747, -0.16666654
      %v1749 = vmul.f32 %v1744, %v1748
      %v1750 = vadd.f32 %v1749, 1.0
      %v1751 = vmul.f32 %v1750, %v1735
      %vm1752 = vweird.f32 %v990
      %v1753 = vand.u32 %v1736, 3
      %vm1754 = vcmp.lt.s32.totalorder %v1753, 2
      %vm1755 = vcmp.eq.s32.totalorder %v1753, 0
      %v1756 = vxor.u32 %v1751, 2147483648
      %v1757 = vsel %vm1755, %v1743, %v1756
      %vm1758 = vcmp.eq.s32.totalorder %v1753, 2
      %v1759 = vxor.u32 %v1743, 2147483648
      %v1760 = vsel %vm1758, %v1759, %v1751
      %v1761 = vsel %vm1754, %v1757, %v1760
      %v1762 = vsel %vm1752, nan, %v1761
      %v1763 = vand.u32 2147483647, %v991
      %vm1764 = vcmp.le.f32.partialorder %v1763, 0.7853982
      %vm1765 = vcmp.lt.s32.totalorder %v991, 0
      %v1766 = vand.u32 %v991, 2139095040
      %v1767 = vshrl.u32 %v1766, 23
      %v1768 = vsub.s32 %v1767, 127
      %v1769 = vand.u32 2147483647, %v991
      %v1770 = vand.u32 %v1769, 8388607
      %v1771 = vor.u32 %v1770, 8388608
      %v1772 = vsub.s32 0, %v1771
      %v1773 = vadd.s32 %v1768, 1
      %vm1774 = vcmp.gt.s32.totalorder %v1773, 0
      %v1775 = vsel %vm1774, %v1773, 0
      %v1776 = vshrl.u32 %v1775, 5
      %v1777 = vand.u32 %v1775, 31
      %v1778 = vsub.s32 32, %v1777
      %v1779 = vshrl.u32 683565275, %v1778
      %v1780 = vshll.u32 683565275, %v1777
      %v1781 = vshrl.u32 2475754826, %v1778
      %v1782 = vor.u32 %v1780, %v1781
      %v1783 = vshll.u32 2475754826, %v1777
      %v1784 = vshrl.u32 2131351028, %v1778
      %v1785 = vor.u32 %v1783, %v1784
      %v1786 = vshll.u32 2131351028, %v1777
      %v1787 = vshrl.u32 2102212464, %v1778
      %v1788 = vor.u32 %v1786, %v1787
      %v1789 = vshll.u32 2102212464, %v1777
      %v1790 = vshrl.u32 920167782, %v1778
      %v1791 = vor.u32 %v1789, %v1790
      %v1792 = vshll.u32 920167782, %v1777
      %v1793 = vshrl.u32 1326507024, %v1778
      %v1794 = vor.u32 %v1792, %v1793
      %vm1795 = vcmp.lt.s32.totalorder %v1776, 1
      %vm1796 = vcmp.lt.s32.totalorder %v1776, 2
      %vm1797 = vcmp.lt.s32.totalorder %v1776, 3
      %vm1798 = vcmp.lt.s32.totalorder %v1776, 4
      %v1799 = vsel %vm1795, %v1779, %v1782
      %v1800 = vsel %vm1798, %v1788, 2102212464
      %v1801 = vsel %vm1797, %v1785, %v1800
      %v1802 = vsel %vm1796, %v1799, %v1801
      %v1803 = vsel %vm1795, %v1782, %v1785
      %v1804 = vsel %vm1798, %v1791, 920167782
      %v1805 = vsel %vm1797, %v1788, %v1804
      %v1806 = vsel %vm1796, %v1803, %v1805
      %v1807 = vsel %vm1795, %v1785, %v1788
      %v1808 = vsel %vm1798, %v1794, 1326507024
      %v1809 = vsel %vm1797, %v1791, %v1808
      %v1810 = vsel %vm1796, %v1807, %v1809
      %v1811 = vshll.u32 %v1771, 8
      %v1812 = vand.u32 %v1811, 65535
      %v1813 = vshrl.u32 %v1811, 16
      %v1814 = vand.u32 %v1810, 65535
      %v1815 = vshrl.u32 %v1810, 16
      %v1816 = vmul.u32 %v1812, %v1814
      %v1817 = vmul.u32 %v1812, %v1815
      %v1818 = vmul.u32 %v1813, %v1814
      %v1819 = vmul.u32 %v1813, %v1815
      %v1820 = vshll.u32 %v1817, 16
      %v1821 = vshrl.u32 %v1817, 16
      %v1822 = vshll.u32 %v1818, 16
      %v1823 = vshrl.u32 %v1818, 16
      %vm1824 = vc.u32 %v1816, %v1820
      %v1825 = vsel %vm1824, 1, 0
      %v1826 = vadd.s32 %v1816, %v1820
      %v1827 = vadd.s32 %v1819, %v1825
      %vm1828 = vc.u32 %v1826, %v1822
      %v1829 = vsel %vm1828, 1, 0
      %v1830 = vadd.s32 %v1826, %v1822
      %v1831 = vadd.s32 %v1827, %v1829
      %v1832 = vadd.s32 %v1831, %v1821
      %v1833 = vadd.s32 %v1832, %v1823
      %v1834 = vand.u32 %v1811, 65535
      %v1835 = vshrl.u32 %v1811, 16
      %v1836 = vand.u32 %v1806, 65535
      %v1837 = vshrl.u32 %v1806, 16
      %v1838 = vmul.u32 %v1834, %v1836
      %v1839 = vmul.u32 %v1834, %v1837
      %v1840 = vmul.u32 %v1835, %v1836
      %v1841 = vmul.u32 %v1835, %v1837
      %v1842 = vshll.u32 %v1839, 16
      %v1843 = vshrl.u32 %v1839, 16
      %v1844 = vshll.u32 %v1840, 16
      %v1845 = vshrl.u32 %v1840, 16
      %vm1846 = vc.u32 %v1838, %v1842
      %v1847 = vsel %vm1846, 1, 0
      %v1848 = vadd.s32 %v1838, %v1842
      %v1849 = vadd.s32 %v1841, %v1847
      %vm1850 = vc.u32 %v1848, %v1844
      %v1851 = vsel %vm1850, 1, 0
      %v1852 = vadd.s32 %v1848, %v1844
      %v1853 = vadd.s32 %v1849, %v1851
      %v1854 = vadd.s32 %v1853, %v1843
      %v1855 = vadd.s32 %v1854, %v1845
      %v1856 = vmul.u32 %v1811, %v1802
      %v1857 = vadd.s32 %v1833, %v1852
      %vm1858 = vc.u32 %v1833, %v1852
      %v1859 = vadd.s32 %v1855, 1
      %v1860 = vsel %vm1858, %v1859, %v1855
      %v1861 = vadd.s32 %v1856, %v1860
      %v1862 = vadd.s32 %v1861, 536870912
      %v1863 = vshrl.u32 %v1862, 30
      %v1864 = vshll.u32 %v1863, 30
      %v1865 = vsub.s32 %v1861, %v1864
      %vm1866 = vcmp.lt.s32.totalorder %v1865, 0
      %v1867 = vsub.s32 0, %v1865
      %v1868 = vsel %vm1866, %v1867, %v1865
      %v1869 = vclz %v1868
      %v1870 = vsub.s32 %v1869, 2
      %vm1871 = vcmp.gt.s32.totalorder 0, %v1870
      %v1872 = vsel %vm1871, 0, %v1870
      %v1873 = vsub.s32 32, %v1872
      %v1874 = vshll.u32 %v1865, %v1872
      %v1875 = vshrl.u32 %v1857, %v1873
      %v1876 = vor.u32 %v1874, %v1875
      %v1877 = vsub.s32 4294967266, %v1872
      %v1878 = vadd.s32 %v1877, 127
      %v1879 = vshll.u32 %v1878, 23
      %v1880 = vor.u32 4788187, %v1879
      %v1881 = vand.u32 2147483647, %v1880
      %v1883 = vcvt.s32.f32 %v1876
      %v1884 = vmul.f32 %v1883, %v1881
      %v1885 = vxor.u32 %v1884, 2147483648
      %v1886 = vsel %vm1765, %v1885, %v1884
      %v1887 = vsub.s32 4, %v1863
      %v1888 = vsel %vm1765, %v1887, %v1863
      %v1889 = vsel %vm1764, %v991, %v1886
      %v1890 = vsel %vm1764, 0, %v1888
      %v1891 = vmul.f32 %v1889, %v1889
      %v1892 = vmul.f32 %v1891, -0.001358992
      %v1893 = vadd.f32 %v1892, 0.041655596
      %v1894 = vmul.f32 %v1891, %v1893
      %v1895 = vadd.f32 %v1894, -0.4999988
      %v1896 = vmul.f32 %v1891, %v1895
      %v1897 = vadd.f32 1.0, %v1896
      %v1898 = vmul.f32 %v1889, %v1889
      %v1899 = vmul.f32 %v1898, -0.00019511016
      %v1900 = vadd.f32 %v1899, 0.008332121
      %v1901 = vmul.f32 %v1898, %v1900
      %v1902 = vadd.f32 %v1901, -0.16666654
      %v1903 = vmul.f32 %v1898, %v1902
      %v1904 = vadd.f32 %v1903, 1.0
      %v1905 = vmul.f32 %v1904, %v1889
      %vm1906 = vweird.f32 %v991
      %v1907 = vand.u32 %v1890, 3
      %vm1908 = vcmp.lt.s32.totalorder %v1907, 2
      %vm1909 = vcmp.eq.s32.totalorder %v1907, 0
      %v1910 = vxor.u32 %v1905, 2147483648
      %v1911 = vsel %vm1909, %v1897, %v1910
      %vm1912 = vcmp.eq.s32.totalorder %v1907, 2
      %v1913 = vxor.u32 %v1897, 2147483648
      %v1914 = vsel %vm1912, %v1913, %v1905
      %v1915 = vsel %vm1908, %v1911, %v1914
      %v1916 = vsel %vm1906, nan, %v1915
      %v1917 = vand.u32 2147483647, %v992
      %vm1918 = vcmp.le.f32.partialorder %v1917, 0.7853982
      %vm1919 = vcmp.lt.s32.totalorder %v992, 0
      %v1920 = vand.u32 %v992, 2139095040
      %v1921 = vshrl.u32 %v1920, 23
      %v1922 = vsub.s32 %v1921, 127
      %v1923 = vand.u32 2147483647, %v992
      %v1924 = vand.u32 %v1923, 8388607
      %v1925 = vor.u32 %v1924, 8388608
      %v1926 = vsub.s32 0, %v1925
      %v1927 = vadd.s32 %v1922, 1
      %vm1928 = vcmp.gt.s32.totalorder %v1927, 0
      %v1929 = vsel %vm1928, %v1927, 0
      %v1930 = vshrl.u32 %v1929, 5
      %v1931 = vand.u32 %v1929, 31
      %v1932 = vsub.s32 32, %v1931
      %v1933 = vshrl.u32 683565275, %v1932
      %v1934 = vshll.u32 683565275, %v1931
      %v1935 = vshrl.u32 2475754826, %v1932
      %v1936 = vor.u32 %v1934, %v1935
      %v1937 = vshll.u32 2475754826, %v1931
      %v1938 = vshrl.u32 2131351028, %v1932
      %v1939 = vor.u32 %v1937, %v1938
      %v1940 = vshll.u32 2131351028, %v1931
      %v1941 = vshrl.u32 2102212464, %v1932
      %v1942 = vor.u32 %v1940, %v1941
      %v1943 = vshll.u32 2102212464, %v1931
      %v1944 = vshrl.u32 920167782, %v1932
      %v1945 = vor.u32 %v1943, %v1944
      %v1946 = vshll.u32 920167782, %v1931
      %v1947 = vshrl.u32 1326507024, %v1932
      %v1948 = vor.u32 %v1946, %v1947
      %vm1949 = vcmp.lt.s32.totalorder %v1930, 1
      %vm1950 = vcmp.lt.s32.totalorder %v1930, 2
      %vm1951 = vcmp.lt.s32.totalorder %v1930, 3
      %vm1952 = vcmp.lt.s32.totalorder %v1930, 4
      %v1953 = vsel %vm1949, %v1933, %v1936
      %v1954 = vsel %vm1952, %v1942, 2102212464
      %v1955 = vsel %vm1951, %v1939, %v1954
      %v1956 = vsel %vm1950, %v1953, %v1955
      %v1957 = vsel %vm1949, %v1936, %v1939
      %v1958 = vsel %vm1952, %v1945, 920167782
      %v1959 = vsel %vm1951, %v1942, %v1958
      %v1960 = vsel %vm1950, %v1957, %v1959
      %v1961 = vsel %vm1949, %v1939, %v1942
      %v1962 = vsel %vm1952, %v1948, 1326507024
      %v1963 = vsel %vm1951, %v1945, %v1962
      %v1964 = vsel %vm1950, %v1961, %v1963
      %v1965 = vshll.u32 %v1925, 8
      %v1966 = vand.u32 %v1965, 65535
      %v1967 = vshrl.u32 %v1965, 16
      %v1968 = vand.u32 %v1964, 65535
      %v1969 = vshrl.u32 %v1964, 16
      %v1970 = vmul.u32 %v1966, %v1968
      %v1971 = vmul.u32 %v1966, %v1969
      %v1972 = vmul.u32 %v1967, %v1968
      %v1973 = vmul.u32 %v1967, %v1969
      %v1974 = vshll.u32 %v1971, 16
      %v1975 = vshrl.u32 %v1971, 16
      %v1976 = vshll.u32 %v1972, 16
      %v1977 = vshrl.u32 %v1972, 16
      %vm1978 = vc.u32 %v1970, %v1974
      %v1979 = vsel %vm1978, 1, 0
      %v1980 = vadd.s32 %v1970, %v1974
      %v1981 = vadd.s32 %v1973, %v1979
      %vm1982 = vc.u32 %v1980, %v1976
      %v1983 = vsel %vm1982, 1, 0
      %v1984 = vadd.s32 %v1980, %v1976
      %v1985 = vadd.s32 %v1981, %v1983
      %v1986 = vadd.s32 %v1985, %v1975
      %v1987 = vadd.s32 %v1986, %v1977
      %v1988 = vand.u32 %v1965, 65535
      %v1989 = vshrl.u32 %v1965, 16
      %v1990 = vand.u32 %v1960, 65535
      %v1991 = vshrl.u32 %v1960, 16
      %v1992 = vmul.u32 %v1988, %v1990
      %v1993 = vmul.u32 %v1988, %v1991
      %v1994 = vmul.u32 %v1989, %v1990
      %v1995 = vmul.u32 %v1989, %v1991
      %v1996 = vshll.u32 %v1993, 16
      %v1997 = vshrl.u32 %v1993, 16
      %v1998 = vshll.u32 %v1994, 16
      %v1999 = vshrl.u32 %v1994, 16
      %vm2000 = vc.u32 %v1992, %v1996
      %v2001 = vsel %vm2000, 1, 0
      %v2002 = vadd.s32 %v1992, %v1996
      %v2003 = vadd.s32 %v1995, %v2001
      %vm2004 = vc.u32 %v2002, %v1998
      %v2005 = vsel %vm2004, 1, 0
      %v2006 = vadd.s32 %v2002, %v1998
      %v2007 = vadd.s32 %v2003, %v2005
      %v2008 = vadd.s32 %v2007, %v1997
      %v2009 = vadd.s32 %v2008, %v1999
      %v2010 = vmul.u32 %v1965, %v1956
      %v2011 = vadd.s32 %v1987, %v2006
      %vm2012 = vc.u32 %v1987, %v2006
      %v2013 = vadd.s32 %v2009, 1
      %v2014 = vsel %vm2012, %v2013, %v2009
      %v2015 = vadd.s32 %v2010, %v2014
      %v2016 = vadd.s32 %v2015, 536870912
      %v2017 = vshrl.u32 %v2016, 30
      %v2018 = vshll.u32 %v2017, 30
      %v2019 = vsub.s32 %v2015, %v2018
      %vm2020 = vcmp.lt.s32.totalorder %v2019, 0
      %v2021 = vsub.s32 0, %v2019
      %v2022 = vsel %vm2020, %v2021, %v2019
      %v2023 = vclz %v2022
      %v2024 = vsub.s32 %v2023, 2
      %vm2025 = vcmp.gt.s32.totalorder 0, %v2024
      %v2026 = vsel %vm2025, 0, %v2024
      %v2027 = vsub.s32 32, %v2026
      %v2028 = vshll.u32 %v2019, %v2026
      %v2029 = vshrl.u32 %v2011, %v2027
      %v2030 = vor.u32 %v2028, %v2029
      %v2031 = vsub.s32 4294967266, %v2026
      %v2032 = vadd.s32 %v2031, 127
      %v2033 = vshll.u32 %v2032, 23
      %v2034 = vor.u32 4788187, %v2033
      %v2035 = vand.u32 2147483647, %v2034
      %v2037 = vcvt.s32.f32 %v2030
      %v2038 = vmul.f32 %v2037, %v2035
      %v2039 = vxor.u32 %v2038, 2147483648
      %v2040 = vsel %vm1919, %v2039, %v2038
      %v2041 = vsub.s32 4, %v2017
      %v2042 = vsel %vm1919, %v2041, %v2017
      %v2043 = vsel %vm1918, %v992, %v2040
      %v2044 = vsel %vm1918, 0, %v2042
      %v2045 = vmul.f32 %v2043, %v2043
      %v2046 = vmul.f32 %v2045, -0.001358992
      %v2047 = vadd.f32 %v2046, 0.041655596
      %v2048 = vmul.f32 %v2045, %v2047
      %v2049 = vadd.f32 %v2048, -0.4999988
      %v2050 = vmul.f32 %v2045, %v2049
      %v2051 = vadd.f32 1.0, %v2050
      %v2052 = vmul.f32 %v2043, %v2043
      %v2053 = vmul.f32 %v2052, -0.00019511016
      %v2054 = vadd.f32 %v2053, 0.008332121
      %v2055 = vmul.f32 %v2052, %v2054
      %v2056 = vadd.f32 %v2055, -0.16666654
      %v2057 = vmul.f32 %v2052, %v2056
      %v2058 = vadd.f32 %v2057, 1.0
      %v2059 = vmul.f32 %v2058, %v2043
      %vm2060 = vweird.f32 %v992
      %v2061 = vand.u32 %v2044, 3
      %vm2062 = vcmp.lt.s32.totalorder %v2061, 2
      %vm2063 = vcmp.eq.s32.totalorder %v2061, 0
      %v2064 = vxor.u32 %v2059, 2147483648
      %v2065 = vsel %vm2063, %v2051, %v2064
      %vm2066 = vcmp.eq.s32.totalorder %v2061, 2
      %v2067 = vxor.u32 %v2051, 2147483648
      %v2068 = vsel %vm2066, %v2067, %v2059
      %v2069 = vsel %vm2062, %v2065, %v2068
      %v2070 = vsel %vm2060, nan, %v2069
      %v2071 = vand.u32 2147483647, %v986
      %vm2072 = vcmp.le.f32.partialorder %v2071, 0.7853982
      %vm2073 = vcmp.lt.s32.totalorder %v986, 0
      %v2074 = vand.u32 %v986, 2139095040
      %v2075 = vshrl.u32 %v2074, 23
      %v2076 = vsub.s32 %v2075, 127
      %v2077 = vand.u32 2147483647, %v986
      %v2078 = vand.u32 %v2077, 8388607
      %v2079 = vor.u32 %v2078, 8388608
      %v2080 = vsub.s32 0, %v2079
      %v2081 = vadd.s32 %v2076, 1
      %vm2082 = vcmp.gt.s32.totalorder %v2081, 0
      %v2083 = vsel %vm2082, %v2081, 0
      %v2084 = vshrl.u32 %v2083, 5
      %v2085 = vand.u32 %v2083, 31
      %v2086 = vsub.s32 32, %v2085
      %v2087 = vshrl.u32 683565275, %v2086
      %v2088 = vshll.u32 683565275, %v2085
      %v2089 = vshrl.u32 2475754826, %v2086
      %v2090 = vor.u32 %v2088, %v2089
      %v2091 = vshll.u32 2475754826, %v2085
      %v2092 = vshrl.u32 2131351028, %v2086
      %v2093 = vor.u32 %v2091, %v2092
      %v2094 = vshll.u32 2131351028, %v2085
      %v2095 = vshrl.u32 2102212464, %v2086
      %v2096 = vor.u32 %v2094, %v2095
      %v2097 = vshll.u32 2102212464, %v2085
      %v2098 = vshrl.u32 920167782, %v2086
      %v2099 = vor.u32 %v2097, %v2098
      %v2100 = vshll.u32 920167782, %v2085
      %v2101 = vshrl.u32 1326507024, %v2086
      %v2102 = vor.u32 %v2100, %v2101
      %vm2103 = vcmp.lt.s32.totalorder %v2084, 1
      %vm2104 = vcmp.lt.s32.totalorder %v2084, 2
      %vm2105 = vcmp.lt.s32.totalorder %v2084, 3
      %vm2106 = vcmp.lt.s32.totalorder %v2084, 4
      %v2107 = vsel %vm2103, %v2087, %v2090
      %v2108 = vsel %vm2106, %v2096, 2102212464
      %v2109 = vsel %vm2105, %v2093, %v2108
      %v2110 = vsel %vm2104, %v2107, %v2109
      %v2111 = vsel %vm2103, %v2090, %v2093
      %v2112 = vsel %vm2106, %v2099, 920167782
      %v2113 = vsel %vm2105, %v2096, %v2112
      %v2114 = vsel %vm2104, %v2111, %v2113
      %v2115 = vsel %vm2103, %v2093, %v2096
      %v2116 = vsel %vm2106, %v2102, 1326507024
      %v2117 = vsel %vm2105, %v2099, %v2116
      %v2118 = vsel %vm2104, %v2115, %v2117
      %v2119 = vshll.u32 %v2079, 8
      %v2120 = vand.u32 %v2119, 65535
      %v2121 = vshrl.u32 %v2119, 16
      %v2122 = vand.u32 %v2118, 65535
      %v2123 = vshrl.u32 %v2118, 16
      %v2124 = vmul.u32 %v2120, %v2122
      %v2125 = vmul.u32 %v2120, %v2123
      %v2126 = vmul.u32 %v2121, %v2122
      %v2127 = vmul.u32 %v2121, %v2123
      %v2128 = vshll.u32 %v2125, 16
      %v2129 = vshrl.u32 %v2125, 16
      %v2130 = vshll.u32 %v2126, 16
      %v2131 = vshrl.u32 %v2126, 16
      %vm2132 = vc.u32 %v2124, %v2128
      %v2133 = vsel %vm2132, 1, 0
      %v2134 = vadd.s32 %v2124, %v2128
      %v2135 = vadd.s32 %v2127, %v2133
      %vm2136 = vc.u32 %v2134, %v2130
      %v2137 = vsel %vm2136, 1, 0
      %v2138 = vadd.s32 %v2134, %v2130
      %v2139 = vadd.s32 %v2135, %v2137
      %v2140 = vadd.s32 %v2139, %v2129
      %v2141 = vadd.s32 %v2140, %v2131
      %v2142 = vand.u32 %v2119, 65535
      %v2143 = vshrl.u32 %v2119, 16
      %v2144 = vand.u32 %v2114, 65535
      %v2145 = vshrl.u32 %v2114, 16
      %v2146 = vmul.u32 %v2142, %v2144
      %v2147 = vmul.u32 %v2142, %v2145
      %v2148 = vmul.u32 %v2143, %v2144
      %v2149 = vmul.u32 %v2143, %v2145
      %v2150 = vshll.u32 %v2147, 16
      %v2151 = vshrl.u32 %v2147, 16
      %v2152 = vshll.u32 %v2148, 16
      %v2153 = vshrl.u32 %v2148, 16
      %vm2154 = vc.u32 %v2146, %v2150
      %v2155 = vsel %vm2154, 1, 0
      %v2156 = vadd.s32 %v2146, %v2150
      %v2157 = vadd.s32 %v2149, %v2155
      %vm2158 = vc.u32 %v2156, %v2152
      %v2159 = vsel %vm2158, 1, 0
      %v2160 = vadd.s32 %v2156, %v2152
      %v2161 = vadd.s32 %v2157, %v2159
      %v2162 = vadd.s32 %v2161, %v2151
      %v2163 = vadd.s32 %v2162, %v2153
      %v2164 = vmul.u32 %v2119, %v2110
      %v2165 = vadd.s32 %v2141, %v2160
      %vm2166 = vc.u32 %v2141, %v2160
      %v2167 = vadd.s32 %v2163, 1
      %v2168 = vsel %vm2166, %v2167, %v2163
      %v2169 = vadd.s32 %v2164, %v2168
      %v2170 = vadd.s32 %v2169, 536870912
      %v2171 = vshrl.u32 %v2170, 30
      %v2172 = vshll.u32 %v2171, 30
      %v2173 = vsub.s32 %v2169, %v2172
      %vm2174 = vcmp.lt.s32.totalorder %v2173, 0
      %v2175 = vsub.s32 0, %v2173
      %v2176 = vsel %vm2174, %v2175, %v2173
      %v2177 = vclz %v2176
      %v2178 = vsub.s32 %v2177, 2
      %vm2179 = vcmp.gt.s32.totalorder 0, %v2178
      %v2180 = vsel %vm2179, 0, %v2178
      %v2181 = vsub.s32 32, %v2180
      %v2182 = vshll.u32 %v2173, %v2180
      %v2183 = vshrl.u32 %v2165, %v2181
      %v2184 = vor.u32 %v2182, %v2183
      %v2185 = vsub.s32 4294967266, %v2180
      %v2186 = vadd.s32 %v2185, 127
      %v2187 = vshll.u32 %v2186, 23
      %v2188 = vor.u32 4788187, %v2187
      %v2189 = vand.u32 2147483647, %v2188
      %v2191 = vcvt.s32.f32 %v2184
      %v2192 = vmul.f32 %v2191, %v2189
      %v2193 = vxor.u32 %v2192, 2147483648
      %v2194 = vsel %vm2073, %v2193, %v2192
      %v2195 = vsub.s32 4, %v2171
      %v2196 = vsel %vm2073, %v2195, %v2171
      %v2197 = vsel %vm2072, %v986, %v2194
      %v2198 = vsel %vm2072, 0, %v2196
      %v2199 = vmul.f32 %v2197, %v2197
      %v2200 = vmul.f32 %v2199, -0.001358992
      %v2201 = vadd.f32 %v2200, 0.041655596
      %v2202 = vmul.f32 %v2199, %v2201
      %v2203 = vadd.f32 %v2202, -0.4999988
      %v2204 = vmul.f32 %v2199, %v2203
      %v2205 = vadd.f32 1.0, %v2204
      %v2206 = vmul.f32 %v2197, %v2197
      %v2207 = vmul.f32 %v2206, -0.00019511016
      %v2208 = vadd.f32 %v2207, 0.008332121
      %v2209 = vmul.f32 %v2206, %v2208
      %v2210 = vadd.f32 %v2209, -0.16666654
      %v2211 = vmul.f32 %v2206, %v2210
      %v2212 = vadd.f32 %v2211, 1.0
      %v2213 = vmul.f32 %v2212, %v2197
      %vm2214 = vweird.f32 %v986
      %v2215 = vadd.s32 %v2198, 3
      %v2216 = vand.u32 %v2215, 3
      %vm2217 = vcmp.lt.s32.totalorder %v2216, 2
      %vm2218 = vcmp.eq.s32.totalorder %v2216, 0
      %v2219 = vxor.u32 %v2213, 2147483648
      %v2220 = vsel %vm2218, %v2205, %v2219
      %vm2221 = vcmp.eq.s32.totalorder %v2216, 2
      %v2222 = vxor.u32 %v2205, 2147483648
      %v2223 = vsel %vm2221, %v2222, %v2213
      %v2224 = vsel %vm2217, %v2220, %v2223
      %v2225 = vsel %vm2214, nan, %v2224
      %v2226 = vand.u32 2147483647, %v987
      %vm2227 = vcmp.le.f32.partialorder %v2226, 0.7853982
      %vm2228 = vcmp.lt.s32.totalorder %v987, 0
      %v2229 = vand.u32 %v987, 2139095040
      %v2230 = vshrl.u32 %v2229, 23
      %v2231 = vsub.s32 %v2230, 127
      %v2232 = vand.u32 2147483647, %v987
      %v2233 = vand.u32 %v2232, 8388607
      %v2234 = vor.u32 %v2233, 8388608
      %v2235 = vsub.s32 0, %v2234
      %v2236 = vadd.s32 %v2231, 1
      %vm2237 = vcmp.gt.s32.totalorder %v2236, 0
      %v2238 = vsel %vm2237, %v2236, 0
      %v2239 = vshrl.u32 %v2238, 5
      %v2240 = vand.u32 %v2238, 31
      %v2241 = vsub.s32 32, %v2240
      %v2242 = vshrl.u32 683565275, %v2241
      %v2243 = vshll.u32 683565275, %v2240
      %v2244 = vshrl.u32 2475754826, %v2241
      %v2245 = vor.u32 %v2243, %v2244
      %v2246 = vshll.u32 2475754826, %v2240
      %v2247 = vshrl.u32 2131351028, %v2241
      %v2248 = vor.u32 %v2246, %v2247
      %v2249 = vshll.u32 2131351028, %v2240
      %v2250 = vshrl.u32 2102212464, %v2241
      %v2251 = vor.u32 %v2249, %v2250
      %v2252 = vshll.u32 2102212464, %v2240
      %v2253 = vshrl.u32 920167782, %v2241
      %v2254 = vor.u32 %v2252, %v2253
      %v2255 = vshll.u32 920167782, %v2240
      %v2256 = vshrl.u32 1326507024, %v2241
      %v2257 = vor.u32 %v2255, %v2256
      %vm2258 = vcmp.lt.s32.totalorder %v2239, 1
      %vm2259 = vcmp.lt.s32.totalorder %v2239, 2
      %vm2260 = vcmp.lt.s32.totalorder %v2239, 3
      %vm2261 = vcmp.lt.s32.totalorder %v2239, 4
      %v2262 = vsel %vm2258, %v2242, %v2245
      %v2263 = vsel %vm2261, %v2251, 2102212464
      %v2264 = vsel %vm2260, %v2248, %v2263
      %v2265 = vsel %vm2259, %v2262, %v2264
      %v2266 = vsel %vm2258, %v2245, %v2248
      %v2267 = vsel %vm2261, %v2254, 920167782
      %v2268 = vsel %vm2260, %v2251, %v2267
      %v2269 = vsel %vm2259, %v2266, %v2268
      %v2270 = vsel %vm2258, %v2248, %v2251
      %v2271 = vsel %vm2261, %v2257, 1326507024
      %v2272 = vsel %vm2260, %v2254, %v2271
      %v2273 = vsel %vm2259, %v2270, %v2272
      %v2274 = vshll.u32 %v2234, 8
      %v2275 = vand.u32 %v2274, 65535
      %v2276 = vshrl.u32 %v2274, 16
      %v2277 = vand.u32 %v2273, 65535
      %v2278 = vshrl.u32 %v2273, 16
      %v2279 = vmul.u32 %v2275, %v2277
      %v2280 = vmul.u32 %v2275, %v2278
      %v2281 = vmul.u32 %v2276, %v2277
      %v2282 = vmul.u32 %v2276, %v2278
      %v2283 = vshll.u32 %v2280, 16
      %v2284 = vshrl.u32 %v2280, 16
      %v2285 = vshll.u32 %v2281, 16
      %v2286 = vshrl.u32 %v2281, 16
      %vm2287 = vc.u32 %v2279, %v2283
      %v2288 = vsel %vm2287, 1, 0
      %v2289 = vadd.s32 %v2279, %v2283
      %v2290 = vadd.s32 %v2282, %v2288
      %vm2291 = vc.u32 %v2289, %v2285
      %v2292 = vsel %vm2291, 1, 0
      %v2293 = vadd.s32 %v2289, %v2285
      %v2294 = vadd.s32 %v2290, %v2292
      %v2295 = vadd.s32 %v2294, %v2284
      %v2296 = vadd.s32 %v2295, %v2286
      %v2297 = vand.u32 %v2274, 65535
      %v2298 = vshrl.u32 %v2274, 16
      %v2299 = vand.u32 %v2269, 65535
      %v2300 = vshrl.u32 %v2269, 16
      %v2301 = vmul.u32 %v2297, %v2299
      %v2302 = vmul.u32 %v2297, %v2300
      %v2303 = vmul.u32 %v2298, %v2299
      %v2304 = vmul.u32 %v2298, %v2300
      %v2305 = vshll.u32 %v2302, 16
      %v2306 = vshrl.u32 %v2302, 16
      %v2307 = vshll.u32 %v2303, 16
      %v2308 = vshrl.u32 %v2303, 16
      %vm2309 = vc.u32 %v2301, %v2305
      %v2310 = vsel %vm2309, 1, 0
      %v2311 = vadd.s32 %v2301, %v2305
      %v2312 = vadd.s32 %v2304, %v2310
      %vm2313 = vc.u32 %v2311, %v2307
      %v2314 = vsel %vm2313, 1, 0
      %v2315 = vadd.s32 %v2311, %v2307
      %v2316 = vadd.s32 %v2312, %v2314
      %v2317 = vadd.s32 %v2316, %v2306
      %v2318 = vadd.s32 %v2317, %v2308
      %v2319 = vmul.u32 %v2274, %v2265
      %v2320 = vadd.s32 %v2296, %v2315
      %vm2321 = vc.u32 %v2296, %v2315
      %v2322 = vadd.s32 %v2318, 1
      %v2323 = vsel %vm2321, %v2322, %v2318
      %v2324 = vadd.s32 %v2319, %v2323
      %v2325 = vadd.s32 %v2324, 536870912
      %v2326 = vshrl.u32 %v2325, 30
      %v2327 = vshll.u32 %v2326, 30
      %v2328 = vsub.s32 %v2324, %v2327
      %vm2329 = vcmp.lt.s32.totalorder %v2328, 0
      %v2330 = vsub.s32 0, %v2328
      %v2331 = vsel %vm2329, %v2330, %v2328
      %v2332 = vclz %v2331
      %v2333 = vsub.s32 %v2332, 2
      %vm2334 = vcmp.gt.s32.totalorder 0, %v2333
      %v2335 = vsel %vm2334, 0, %v2333
      %v2336 = vsub.s32 32, %v2335
      %v2337 = vshll.u32 %v2328, %v2335
      %v2338 = vshrl.u32 %v2320, %v2336
      %v2339 = vor.u32 %v2337, %v2338
      %v2340 = vsub.s32 4294967266, %v2335
      %v2341 = vadd.s32 %v2340, 127
      %v2342 = vshll.u32 %v2341, 23
      %v2343 = vor.u32 4788187, %v2342
      %v2344 = vand.u32 2147483647, %v2343
      %v2346 = vcvt.s32.f32 %v2339
      %v2347 = vmul.f32 %v2346, %v2344
      %v2348 = vxor.u32 %v2347, 2147483648
      %v2349 = vsel %vm2228, %v2348, %v2347
      %v2350 = vsub.s32 4, %v2326
      %v2351 = vsel %vm2228, %v2350, %v2326
      %v2352 = vsel %vm2227, %v987, %v2349
      %v2353 = vsel %vm2227, 0, %v2351
      %v2354 = vmul.f32 %v2352, %v2352
      %v2355 = vmul.f32 %v2354, -0.001358992
      %v2356 = vadd.f32 %v2355, 0.041655596
      %v2357 = vmul.f32 %v2354, %v2356
      %v2358 = vadd.f32 %v2357, -0.4999988
      %v2359 = vmul.f32 %v2354, %v2358
      %v2360 = vadd.f32 1.0, %v2359
      %v2361 = vmul.f32 %v2352, %v2352
      %v2362 = vmul.f32 %v2361, -0.00019511016
      %v2363 = vadd.f32 %v2362, 0.008332121
      %v2364 = vmul.f32 %v2361, %v2363
      %v2365 = vadd.f32 %v2364, -0.16666654
      %v2366 = vmul.f32 %v2361, %v2365
      %v2367 = vadd.f32 %v2366, 1.0
      %v2368 = vmul.f32 %v2367, %v2352
      %vm2369 = vweird.f32 %v987
      %v2370 = vadd.s32 %v2353, 3
      %v2371 = vand.u32 %v2370, 3
      %vm2372 = vcmp.lt.s32.totalorder %v2371, 2
      %vm2373 = vcmp.eq.s32.totalorder %v2371, 0
      %v2374 = vxor.u32 %v2368, 2147483648
      %v2375 = vsel %vm2373, %v2360, %v2374
      %vm2376 = vcmp.eq.s32.totalorder %v2371, 2
      %v2377 = vxor.u32 %v2360, 2147483648
      %v2378 = vsel %vm2376, %v2377, %v2368
      %v2379 = vsel %vm2372, %v2375, %v2378
      %v2380 = vsel %vm2369, nan, %v2379
      %v2381 = vand.u32 2147483647, %v988
      %vm2382 = vcmp.le.f32.partialorder %v2381, 0.7853982
      %vm2383 = vcmp.lt.s32.totalorder %v988, 0
      %v2384 = vand.u32 %v988, 2139095040
      %v2385 = vshrl.u32 %v2384, 23
      %v2386 = vsub.s32 %v2385, 127
      %v2387 = vand.u32 2147483647, %v988
      %v2388 = vand.u32 %v2387, 8388607
      %v2389 = vor.u32 %v2388, 8388608
      %v2390 = vsub.s32 0, %v2389
      %v2391 = vadd.s32 %v2386, 1
      %vm2392 = vcmp.gt.s32.totalorder %v2391, 0
      %v2393 = vsel %vm2392, %v2391, 0
      %v2394 = vshrl.u32 %v2393, 5
      %v2395 = vand.u32 %v2393, 31
      %v2396 = vsub.s32 32, %v2395
      %v2397 = vshrl.u32 683565275, %v2396
      %v2398 = vshll.u32 683565275, %v2395
      %v2399 = vshrl.u32 2475754826, %v2396
      %v2400 = vor.u32 %v2398, %v2399
      %v2401 = vshll.u32 2475754826, %v2395
      %v2402 = vshrl.u32 2131351028, %v2396
      %v2403 = vor.u32 %v2401, %v2402
      %v2404 = vshll.u32 2131351028, %v2395
      %v2405 = vshrl.u32 2102212464, %v2396
      %v2406 = vor.u32 %v2404, %v2405
      %v2407 = vshll.u32 2102212464, %v2395
      %v2408 = vshrl.u32 920167782, %v2396
      %v2409 = vor.u32 %v2407, %v2408
      %v2410 = vshll.u32 920167782, %v2395
      %v2411 = vshrl.u32 1326507024, %v2396
      %v2412 = vor.u32 %v2410, %v2411
      %vm2413 = vcmp.lt.s32.totalorder %v2394, 1
      %vm2414 = vcmp.lt.s32.totalorder %v2394, 2
      %vm2415 = vcmp.lt.s32.totalorder %v2394, 3
      %vm2416 = vcmp.lt.s32.totalorder %v2394, 4
      %v2417 = vsel %vm2413, %v2397, %v2400
      %v2418 = vsel %vm2416, %v2406, 2102212464
      %v2419 = vsel %vm2415, %v2403, %v2418
      %v2420 = vsel %vm2414, %v2417, %v2419
      %v2421 = vsel %vm2413, %v2400, %v2403
      %v2422 = vsel %vm2416, %v2409, 920167782
      %v2423 = vsel %vm2415, %v2406, %v2422
      %v2424 = vsel %vm2414, %v2421, %v2423
      %v2425 = vsel %vm2413, %v2403, %v2406
      %v2426 = vsel %vm2416, %v2412, 1326507024
      %v2427 = vsel %vm2415, %v2409, %v2426
      %v2428 = vsel %vm2414, %v2425, %v2427
      %v2429 = vshll.u32 %v2389, 8
      %v2430 = vand.u32 %v2429, 65535
      %v2431 = vshrl.u32 %v2429, 16
      %v2432 = vand.u32 %v2428, 65535
      %v2433 = vshrl.u32 %v2428, 16
      %v2434 = vmul.u32 %v2430, %v2432
      %v2435 = vmul.u32 %v2430, %v2433
      %v2436 = vmul.u32 %v2431, %v2432
      %v2437 = vmul.u32 %v2431, %v2433
      %v2438 = vshll.u32 %v2435, 16
      %v2439 = vshrl.u32 %v2435, 16
      %v2440 = vshll.u32 %v2436, 16
      %v2441 = vshrl.u32 %v2436, 16
      %vm2442 = vc.u32 %v2434, %v2438
      %v2443 = vsel %vm2442, 1, 0
      %v2444 = vadd.s32 %v2434, %v2438
      %v2445 = vadd.s32 %v2437, %v2443
      %vm2446 = vc.u32 %v2444, %v2440
      %v2447 = vsel %vm2446, 1, 0
      %v2448 = vadd.s32 %v2444, %v2440
      %v2449 = vadd.s32 %v2445, %v2447
      %v2450 = vadd.s32 %v2449, %v2439
      %v2451 = vadd.s32 %v2450, %v2441
      %v2452 = vand.u32 %v2429, 65535
      %v2453 = vshrl.u32 %v2429, 16
      %v2454 = vand.u32 %v2424, 65535
      %v2455 = vshrl.u32 %v2424, 16
      %v2456 = vmul.u32 %v2452, %v2454
      %v2457 = vmul.u32 %v2452, %v2455
      %v2458 = vmul.u32 %v2453, %v2454
      %v2459 = vmul.u32 %v2453, %v2455
      %v2460 = vshll.u32 %v2457, 16
      %v2461 = vshrl.u32 %v2457, 16
      %v2462 = vshll.u32 %v2458, 16
      %v2463 = vshrl.u32 %v2458, 16
      %vm2464 = vc.u32 %v2456, %v2460
      %v2465 = vsel %vm2464, 1, 0
      %v2466 = vadd.s32 %v2456, %v2460
      %v2467 = vadd.s32 %v2459, %v2465
      %vm2468 = vc.u32 %v2466, %v2462
      %v2469 = vsel %vm2468, 1, 0
      %v2470 = vadd.s32 %v2466, %v2462
      %v2471 = vadd.s32 %v2467, %v2469
      %v2472 = vadd.s32 %v2471, %v2461
      %v2473 = vadd.s32 %v2472, %v2463
      %v2474 = vmul.u32 %v2429, %v2420
      %v2475 = vadd.s32 %v2451, %v2470
      %vm2476 = vc.u32 %v2451, %v2470
      %v2477 = vadd.s32 %v2473, 1
      %v2478 = vsel %vm2476, %v2477, %v2473
      %v2479 = vadd.s32 %v2474, %v2478
      %v2480 = vadd.s32 %v2479, 536870912
      %v2481 = vshrl.u32 %v2480, 30
      %v2482 = vshll.u32 %v2481, 30
      %v2483 = vsub.s32 %v2479, %v2482
      %vm2484 = vcmp.lt.s32.totalorder %v2483, 0
      %v2485 = vsub.s32 0, %v2483
      %v2486 = vsel %vm2484, %v2485, %v2483
      %v2487 = vclz %v2486
      %v2488 = vsub.s32 %v2487, 2
      %vm2489 = vcmp.gt.s32.totalorder 0, %v2488
      %v2490 = vsel %vm2489, 0, %v2488
      %v2491 = vsub.s32 32, %v2490
      %v2492 = vshll.u32 %v2483, %v2490
      %v2493 = vshrl.u32 %v2475, %v2491
      %v2494 = vor.u32 %v2492, %v2493
      %v2495 = vsub.s32 4294967266, %v2490
      %v2496 = vadd.s32 %v2495, 127
      %v2497 = vshll.u32 %v2496, 23
      %v2498 = vor.u32 4788187, %v2497
      %v2499 = vand.u32 2147483647, %v2498
      %v2501 = vcvt.s32.f32 %v2494
      %v2502 = vmul.f32 %v2501, %v2499
      %v2503 = vxor.u32 %v2502, 2147483648
      %v2504 = vsel %vm2383, %v2503, %v2502
      %v2505 = vsub.s32 4, %v2481
      %v2506 = vsel %vm2383, %v2505, %v2481
      %v2507 = vsel %vm2382, %v988, %v2504
      %v2508 = vsel %vm2382, 0, %v2506
      %v2509 = vmul.f32 %v2507, %v2507
      %v2510 = vmul.f32 %v2509, -0.001358992
      %v2511 = vadd.f32 %v2510, 0.041655596
      %v2512 = vmul.f32 %v2509, %v2511
      %v2513 = vadd.f32 %v2512, -0.4999988
      %v2514 = vmul.f32 %v2509, %v2513
      %v2515 = vadd.f32 1.0, %v2514
      %v2516 = vmul.f32 %v2507, %v2507
      %v2517 = vmul.f32 %v2516, -0.00019511016
      %v2518 = vadd.f32 %v2517, 0.008332121
      %v2519 = vmul.f32 %v2516, %v2518
      %v2520 = vadd.f32 %v2519, -0.16666654
      %v2521 = vmul.f32 %v2516, %v2520
      %v2522 = vadd.f32 %v2521, 1.0
      %v2523 = vmul.f32 %v2522, %v2507
      %vm2524 = vweird.f32 %v988
      %v2525 = vadd.s32 %v2508, 3
      %v2526 = vand.u32 %v2525, 3
      %vm2527 = vcmp.lt.s32.totalorder %v2526, 2
      %vm2528 = vcmp.eq.s32.totalorder %v2526, 0
      %v2529 = vxor.u32 %v2523, 2147483648
      %v2530 = vsel %vm2528, %v2515, %v2529
      %vm2531 = vcmp.eq.s32.totalorder %v2526, 2
      %v2532 = vxor.u32 %v2515, 2147483648
      %v2533 = vsel %vm2531, %v2532, %v2523
      %v2534 = vsel %vm2527, %v2530, %v2533
      %v2535 = vsel %vm2524, nan, %v2534
      %v2536 = vand.u32 2147483647, %v989
      %vm2537 = vcmp.le.f32.partialorder %v2536, 0.7853982
      %vm2538 = vcmp.lt.s32.totalorder %v989, 0
      %v2539 = vand.u32 %v989, 2139095040
      %v2540 = vshrl.u32 %v2539, 23
      %v2541 = vsub.s32 %v2540, 127
      %v2542 = vand.u32 2147483647, %v989
      %v2543 = vand.u32 %v2542, 8388607
      %v2544 = vor.u32 %v2543, 8388608
      %v2545 = vsub.s32 0, %v2544
      %v2546 = vadd.s32 %v2541, 1
      %vm2547 = vcmp.gt.s32.totalorder %v2546, 0
      %v2548 = vsel %vm2547, %v2546, 0
      %v2549 = vshrl.u32 %v2548, 5
      %v2550 = vand.u32 %v2548, 31
      %v2551 = vsub.s32 32, %v2550
      %v2552 = vshrl.u32 683565275, %v2551
      %v2553 = vshll.u32 683565275, %v2550
      %v2554 = vshrl.u32 2475754826, %v2551
      %v2555 = vor.u32 %v2553, %v2554
      %v2556 = vshll.u32 2475754826, %v2550
      %v2557 = vshrl.u32 2131351028, %v2551
      %v2558 = vor.u32 %v2556, %v2557
      %v2559 = vshll.u32 2131351028, %v2550
      %v2560 = vshrl.u32 2102212464, %v2551
      %v2561 = vor.u32 %v2559, %v2560
      %v2562 = vshll.u32 2102212464, %v2550
      %v2563 = vshrl.u32 920167782, %v2551
      %v2564 = vor.u32 %v2562, %v2563
      %v2565 = vshll.u32 920167782, %v2550
      %v2566 = vshrl.u32 1326507024, %v2551
      %v2567 = vor.u32 %v2565, %v2566
      %vm2568 = vcmp.lt.s32.totalorder %v2549, 1
      %vm2569 = vcmp.lt.s32.totalorder %v2549, 2
      %vm2570 = vcmp.lt.s32.totalorder %v2549, 3
      %vm2571 = vcmp.lt.s32.totalorder %v2549, 4
      %v2572 = vsel %vm2568, %v2552, %v2555
      %v2573 = vsel %vm2571, %v2561, 2102212464
      %v2574 = vsel %vm2570, %v2558, %v2573
      %v2575 = vsel %vm2569, %v2572, %v2574
      %v2576 = vsel %vm2568, %v2555, %v2558
      %v2577 = vsel %vm2571, %v2564, 920167782
      %v2578 = vsel %vm2570, %v2561, %v2577
      %v2579 = vsel %vm2569, %v2576, %v2578
      %v2580 = vsel %vm2568, %v2558, %v2561
      %v2581 = vsel %vm2571, %v2567, 1326507024
      %v2582 = vsel %vm2570, %v2564, %v2581
      %v2583 = vsel %vm2569, %v2580, %v2582
      %v2584 = vshll.u32 %v2544, 8
      %v2585 = vand.u32 %v2584, 65535
      %v2586 = vshrl.u32 %v2584, 16
      %v2587 = vand.u32 %v2583, 65535
      %v2588 = vshrl.u32 %v2583, 16
      %v2589 = vmul.u32 %v2585, %v2587
      %v2590 = vmul.u32 %v2585, %v2588
      %v2591 = vmul.u32 %v2586, %v2587
      %v2592 = vmul.u32 %v2586, %v2588
      %v2593 = vshll.u32 %v2590, 16
      %v2594 = vshrl.u32 %v2590, 16
      %v2595 = vshll.u32 %v2591, 16
      %v2596 = vshrl.u32 %v2591, 16
      %vm2597 = vc.u32 %v2589, %v2593
      %v2598 = vsel %vm2597, 1, 0
      %v2599 = vadd.s32 %v2589, %v2593
      %v2600 = vadd.s32 %v2592, %v2598
      %vm2601 = vc.u32 %v2599, %v2595
      %v2602 = vsel %vm2601, 1, 0
      %v2603 = vadd.s32 %v2599, %v2595
      %v2604 = vadd.s32 %v2600, %v2602
      %v2605 = vadd.s32 %v2604, %v2594
      %v2606 = vadd.s32 %v2605, %v2596
      %v2607 = vand.u32 %v2584, 65535
      %v2608 = vshrl.u32 %v2584, 16
      %v2609 = vand.u32 %v2579, 65535
      %v2610 = vshrl.u32 %v2579, 16
      %v2611 = vmul.u32 %v2607, %v2609
      %v2612 = vmul.u32 %v2607, %v2610
      %v2613 = vmul.u32 %v2608, %v2609
      %v2614 = vmul.u32 %v2608, %v2610
      %v2615 = vshll.u32 %v2612, 16
      %v2616 = vshrl.u32 %v2612, 16
      %v2617 = vshll.u32 %v2613, 16
      %v2618 = vshrl.u32 %v2613, 16
      %vm2619 = vc.u32 %v2611, %v2615
      %v2620 = vsel %vm2619, 1, 0
      %v2621 = vadd.s32 %v2611, %v2615
      %v2622 = vadd.s32 %v2614, %v2620
      %vm2623 = vc.u32 %v2621, %v2617
      %v2624 = vsel %vm2623, 1, 0
      %v2625 = vadd.s32 %v2621, %v2617
      %v2626 = vadd.s32 %v2622, %v2624
      %v2627 = vadd.s32 %v2626, %v2616
      %v2628 = vadd.s32 %v2627, %v2618
      %v2629 = vmul.u32 %v2584, %v2575
      %v2630 = vadd.s32 %v2606, %v2625
      %vm2631 = vc.u32 %v2606, %v2625
      %v2632 = vadd.s32 %v2628, 1
      %v2633 = vsel %vm2631, %v2632, %v2628
      %v2634 = vadd.s32 %v2629, %v2633
      %v2635 = vadd.s32 %v2634, 536870912
      %v2636 = vshrl.u32 %v2635, 30
      %v2637 = vshll.u32 %v2636, 30
      %v2638 = vsub.s32 %v2634, %v2637
      %vm2639 = vcmp.lt.s32.totalorder %v2638, 0
      %v2640 = vsub.s32 0, %v2638
      %v2641 = vsel %vm2639, %v2640, %v2638
      %v2642 = vclz %v2641
      %v2643 = vsub.s32 %v2642, 2
      %vm2644 = vcmp.gt.s32.totalorder 0, %v2643
      %v2645 = vsel %vm2644, 0, %v2643
      %v2646 = vsub.s32 32, %v2645
      %v2647 = vshll.u32 %v2638, %v2645
      %v2648 = vshrl.u32 %v2630, %v2646
      %v2649 = vor.u32 %v2647, %v2648
      %v2650 = vsub.s32 4294967266, %v2645
      %v2651 = vadd.s32 %v2650, 127
      %v2652 = vshll.u32 %v2651, 23
      %v2653 = vor.u32 4788187, %v2652
      %v2654 = vand.u32 2147483647, %v2653
      %v2656 = vcvt.s32.f32 %v2649
      %v2657 = vmul.f32 %v2656, %v2654
      %v2658 = vxor.u32 %v2657, 2147483648
      %v2659 = vsel %vm2538, %v2658, %v2657
      %v2660 = vsub.s32 4, %v2636
      %v2661 = vsel %vm2538, %v2660, %v2636
      %v2662 = vsel %vm2537, %v989, %v2659
      %v2663 = vsel %vm2537, 0, %v2661
      %v2664 = vmul.f32 %v2662, %v2662
      %v2665 = vmul.f32 %v2664, -0.001358992
      %v2666 = vadd.f32 %v2665, 0.041655596
      %v2667 = vmul.f32 %v2664, %v2666
      %v2668 = vadd.f32 %v2667, -0.4999988
      %v2669 = vmul.f32 %v2664, %v2668
      %v2670 = vadd.f32 1.0, %v2669
      %v2671 = vmul.f32 %v2662, %v2662
      %v2672 = vmul.f32 %v2671, -0.00019511016
      %v2673 = vadd.f32 %v2672, 0.008332121
      %v2674 = vmul.f32 %v2671, %v2673
      %v2675 = vadd.f32 %v2674, -0.16666654
      %v2676 = vmul.f32 %v2671, %v2675
      %v2677 = vadd.f32 %v2676, 1.0
      %v2678 = vmul.f32 %v2677, %v2662
      %vm2679 = vweird.f32 %v989
      %v2680 = vadd.s32 %v2663, 3
      %v2681 = vand.u32 %v2680, 3
      %vm2682 = vcmp.lt.s32.totalorder %v2681, 2
      %vm2683 = vcmp.eq.s32.totalorder %v2681, 0
      %v2684 = vxor.u32 %v2678, 2147483648
      %v2685 = vsel %vm2683, %v2670, %v2684
      %vm2686 = vcmp.eq.s32.totalorder %v2681, 2
      %v2687 = vxor.u32 %v2670, 2147483648
      %v2688 = vsel %vm2686, %v2687, %v2678
      %v2689 = vsel %vm2682, %v2685, %v2688
      %v2690 = vsel %vm2679, nan, %v2689
      %v2691 = vand.u32 2147483647, %v990
      %vm2692 = vcmp.le.f32.partialorder %v2691, 0.7853982
      %vm2693 = vcmp.lt.s32.totalorder %v990, 0
      %v2694 = vand.u32 %v990, 2139095040
      %v2695 = vshrl.u32 %v2694, 23
      %v2696 = vsub.s32 %v2695, 127
      %v2697 = vand.u32 2147483647, %v990
      %v2698 = vand.u32 %v2697, 8388607
      %v2699 = vor.u32 %v2698, 8388608
      %v2700 = vsub.s32 0, %v2699
      %v2701 = vadd.s32 %v2696, 1
      %vm2702 = vcmp.gt.s32.totalorder %v2701, 0
      %v2703 = vsel %vm2702, %v2701, 0
      %v2704 = vshrl.u32 %v2703, 5
      %v2705 = vand.u32 %v2703, 31
      %v2706 = vsub.s32 32, %v2705
      %v2707 = vshrl.u32 683565275, %v2706
      %v2708 = vshll.u32 683565275, %v2705
      %v2709 = vshrl.u32 2475754826, %v2706
      %v2710 = vor.u32 %v2708, %v2709
      %v2711 = vshll.u32 2475754826, %v2705
      %v2712 = vshrl.u32 2131351028, %v2706
      %v2713 = vor.u32 %v2711, %v2712
      %v2714 = vshll.u32 2131351028, %v2705
      %v2715 = vshrl.u32 2102212464, %v2706
      %v2716 = vor.u32 %v2714, %v2715
      %v2717 = vshll.u32 2102212464, %v2705
      %v2718 = vshrl.u32 920167782, %v2706
      %v2719 = vor.u32 %v2717, %v2718
      %v2720 = vshll.u32 920167782, %v2705
      %v2721 = vshrl.u32 1326507024, %v2706
      %v2722 = vor.u32 %v2720, %v2721
      %vm2723 = vcmp.lt.s32.totalorder %v2704, 1
      %vm2724 = vcmp.lt.s32.totalorder %v2704, 2
      %vm2725 = vcmp.lt.s32.totalorder %v2704, 3
      %vm2726 = vcmp.lt.s32.totalorder %v2704, 4
      %v2727 = vsel %vm2723, %v2707, %v2710
      %v2728 = vsel %vm2726, %v2716, 2102212464
      %v2729 = vsel %vm2725, %v2713, %v2728
      %v2730 = vsel %vm2724, %v2727, %v2729
      %v2731 = vsel %vm2723, %v2710, %v2713
      %v2732 = vsel %vm2726, %v2719, 920167782
      %v2733 = vsel %vm2725, %v2716, %v2732
      %v2734 = vsel %vm2724, %v2731, %v2733
      %v2735 = vsel %vm2723, %v2713, %v2716
      %v2736 = vsel %vm2726, %v2722, 1326507024
      %v2737 = vsel %vm2725, %v2719, %v2736
      %v2738 = vsel %vm2724, %v2735, %v2737
      %v2739 = vshll.u32 %v2699, 8
      %v2740 = vand.u32 %v2739, 65535
      %v2741 = vshrl.u32 %v2739, 16
      %v2742 = vand.u32 %v2738, 65535
      %v2743 = vshrl.u32 %v2738, 16
      %v2744 = vmul.u32 %v2740, %v2742
      %v2745 = vmul.u32 %v2740, %v2743
      %v2746 = vmul.u32 %v2741, %v2742
      %v2747 = vmul.u32 %v2741, %v2743
      %v2748 = vshll.u32 %v2745, 16
      %v2749 = vshrl.u32 %v2745, 16
      %v2750 = vshll.u32 %v2746, 16
      %v2751 = vshrl.u32 %v2746, 16
      %vm2752 = vc.u32 %v2744, %v2748
      %v2753 = vsel %vm2752, 1, 0
      %v2754 = vadd.s32 %v2744, %v2748
      %v2755 = vadd.s32 %v2747, %v2753
      %vm2756 = vc.u32 %v2754, %v2750
      %v2757 = vsel %vm2756, 1, 0
      %v2758 = vadd.s32 %v2754, %v2750
      %v2759 = vadd.s32 %v2755, %v2757
      %v2760 = vadd.s32 %v2759, %v2749
      %v2761 = vadd.s32 %v2760, %v2751
      %v2762 = vand.u32 %v2739, 65535
      %v2763 = vshrl.u32 %v2739, 16
      %v2764 = vand.u32 %v2734, 65535
      %v2765 = vshrl.u32 %v2734, 16
      %v2766 = vmul.u32 %v2762, %v2764
      %v2767 = vmul.u32 %v2762, %v2765
      %v2768 = vmul.u32 %v2763, %v2764
      %v2769 = vmul.u32 %v2763, %v2765
      %v2770 = vshll.u32 %v2767, 16
      %v2771 = vshrl.u32 %v2767, 16
      %v2772 = vshll.u32 %v2768, 16
      %v2773 = vshrl.u32 %v2768, 16
      %vm2774 = vc.u32 %v2766, %v2770
      %v2775 = vsel %vm2774, 1, 0
      %v2776 = vadd.s32 %v2766, %v2770
      %v2777 = vadd.s32 %v2769, %v2775
      %vm2778 = vc.u32 %v2776, %v2772
      %v2779 = vsel %vm2778, 1, 0
      %v2780 = vadd.s32 %v2776, %v2772
      %v2781 = vadd.s32 %v2777, %v2779
      %v2782 = vadd.s32 %v2781, %v2771
      %v2783 = vadd.s32 %v2782, %v2773
      %v2784 = vmul.u32 %v2739, %v2730
      %v2785 = vadd.s32 %v2761, %v2780
      %vm2786 = vc.u32 %v2761, %v2780
      %v2787 = vadd.s32 %v2783, 1
      %v2788 = vsel %vm2786, %v2787, %v2783
      %v2789 = vadd.s32 %v2784, %v2788
      %v2790 = vadd.s32 %v2789, 536870912
      %v2791 = vshrl.u32 %v2790, 30
      %v2792 = vshll.u32 %v2791, 30
      %v2793 = vsub.s32 %v2789, %v2792
      %vm2794 = vcmp.lt.s32.totalorder %v2793, 0
      %v2795 = vsub.s32 0, %v2793
      %v2796 = vsel %vm2794, %v2795, %v2793
      %v2797 = vclz %v2796
      %v2798 = vsub.s32 %v2797, 2
      %vm2799 = vcmp.gt.s32.totalorder 0, %v2798
      %v2800 = vsel %vm2799, 0, %v2798
      %v2801 = vsub.s32 32, %v2800
      %v2802 = vshll.u32 %v2793, %v2800
      %v2803 = vshrl.u32 %v2785, %v2801
      %v2804 = vor.u32 %v2802, %v2803
      %v2805 = vsub.s32 4294967266, %v2800
      %v2806 = vadd.s32 %v2805, 127
      %v2807 = vshll.u32 %v2806, 23
      %v2808 = vor.u32 4788187, %v2807
      %v2809 = vand.u32 2147483647, %v2808
      %v2811 = vcvt.s32.f32 %v2804
      %v2812 = vmul.f32 %v2811, %v2809
      %v2813 = vxor.u32 %v2812, 2147483648
      %v2814 = vsel %vm2693, %v2813, %v2812
      %v2815 = vsub.s32 4, %v2791
      %v2816 = vsel %vm2693, %v2815, %v2791
      %v2817 = vsel %vm2692, %v990, %v2814
      %v2818 = vsel %vm2692, 0, %v2816
      %v2819 = vmul.f32 %v2817, %v2817
      %v2820 = vmul.f32 %v2819, -0.001358992
      %v2821 = vadd.f32 %v2820, 0.041655596
      %v2822 = vmul.f32 %v2819, %v2821
      %v2823 = vadd.f32 %v2822, -0.4999988
      %v2824 = vmul.f32 %v2819, %v2823
      %v2825 = vadd.f32 1.0, %v2824
      %v2826 = vmul.f32 %v2817, %v2817
      %v2827 = vmul.f32 %v2826, -0.00019511016
      %v2828 = vadd.f32 %v2827, 0.008332121
      %v2829 = vmul.f32 %v2826, %v2828
      %v2830 = vadd.f32 %v2829, -0.16666654
      %v2831 = vmul.f32 %v2826, %v2830
      %v2832 = vadd.f32 %v2831, 1.0
      %v2833 = vmul.f32 %v2832, %v2817
      %vm2834 = vweird.f32 %v990
      %v2835 = vadd.s32 %v2818, 3
      %v2836 = vand.u32 %v2835, 3
      %vm2837 = vcmp.lt.s32.totalorder %v2836, 2
      %vm2838 = vcmp.eq.s32.totalorder %v2836, 0
      %v2839 = vxor.u32 %v2833, 2147483648
      %v2840 = vsel %vm2838, %v2825, %v2839
      %vm2841 = vcmp.eq.s32.totalorder %v2836, 2
      %v2842 = vxor.u32 %v2825, 2147483648
      %v2843 = vsel %vm2841, %v2842, %v2833
      %v2844 = vsel %vm2837, %v2840, %v2843
      %v2845 = vsel %vm2834, nan, %v2844
      %v2846 = vand.u32 2147483647, %v991
      %vm2847 = vcmp.le.f32.partialorder %v2846, 0.7853982
      %vm2848 = vcmp.lt.s32.totalorder %v991, 0
      %v2849 = vand.u32 %v991, 2139095040
      %v2850 = vshrl.u32 %v2849, 23
      %v2851 = vsub.s32 %v2850, 127
      %v2852 = vand.u32 2147483647, %v991
      %v2853 = vand.u32 %v2852, 8388607
      %v2854 = vor.u32 %v2853, 8388608
      %v2855 = vsub.s32 0, %v2854
      %v2856 = vadd.s32 %v2851, 1
      %vm2857 = vcmp.gt.s32.totalorder %v2856, 0
      %v2858 = vsel %vm2857, %v2856, 0
      %v2859 = vshrl.u32 %v2858, 5
      %v2860 = vand.u32 %v2858, 31
      %v2861 = vsub.s32 32, %v2860
      %v2862 = vshrl.u32 683565275, %v2861
      %v2863 = vshll.u32 683565275, %v2860
      %v2864 = vshrl.u32 2475754826, %v2861
      %v2865 = vor.u32 %v2863, %v2864
      %v2866 = vshll.u32 2475754826, %v2860
      %v2867 = vshrl.u32 2131351028, %v2861
      %v2868 = vor.u32 %v2866, %v2867
      %v2869 = vshll.u32 2131351028, %v2860
      %v2870 = vshrl.u32 2102212464, %v2861
      %v2871 = vor.u32 %v2869, %v2870
      %v2872 = vshll.u32 2102212464, %v2860
      %v2873 = vshrl.u32 920167782, %v2861
      %v2874 = vor.u32 %v2872, %v2873
      %v2875 = vshll.u32 920167782, %v2860
      %v2876 = vshrl.u32 1326507024, %v2861
      %v2877 = vor.u32 %v2875, %v2876
      %vm2878 = vcmp.lt.s32.totalorder %v2859, 1
      %vm2879 = vcmp.lt.s32.totalorder %v2859, 2
      %vm2880 = vcmp.lt.s32.totalorder %v2859, 3
      %vm2881 = vcmp.lt.s32.totalorder %v2859, 4
      %v2882 = vsel %vm2878, %v2862, %v2865
      %v2883 = vsel %vm2881, %v2871, 2102212464
      %v2884 = vsel %vm2880, %v2868, %v2883
      %v2885 = vsel %vm2879, %v2882, %v2884
      %v2886 = vsel %vm2878, %v2865, %v2868
      %v2887 = vsel %vm2881, %v2874, 920167782
      %v2888 = vsel %vm2880, %v2871, %v2887
      %v2889 = vsel %vm2879, %v2886, %v2888
      %v2890 = vsel %vm2878, %v2868, %v2871
      %v2891 = vsel %vm2881, %v2877, 1326507024
      %v2892 = vsel %vm2880, %v2874, %v2891
      %v2893 = vsel %vm2879, %v2890, %v2892
      %v2894 = vshll.u32 %v2854, 8
      %v2895 = vand.u32 %v2894, 65535
      %v2896 = vshrl.u32 %v2894, 16
      %v2897 = vand.u32 %v2893, 65535
      %v2898 = vshrl.u32 %v2893, 16
      %v2899 = vmul.u32 %v2895, %v2897
      %v2900 = vmul.u32 %v2895, %v2898
      %v2901 = vmul.u32 %v2896, %v2897
      %v2902 = vmul.u32 %v2896, %v2898
      %v2903 = vshll.u32 %v2900, 16
      %v2904 = vshrl.u32 %v2900, 16
      %v2905 = vshll.u32 %v2901, 16
      %v2906 = vshrl.u32 %v2901, 16
      %vm2907 = vc.u32 %v2899, %v2903
      %v2908 = vsel %vm2907, 1, 0
      %v2909 = vadd.s32 %v2899, %v2903
      %v2910 = vadd.s32 %v2902, %v2908
      %vm2911 = vc.u32 %v2909, %v2905
      %v2912 = vsel %vm2911, 1, 0
      %v2913 = vadd.s32 %v2909, %v2905
      %v2914 = vadd.s32 %v2910, %v2912
      %v2915 = vadd.s32 %v2914, %v2904
      %v2916 = vadd.s32 %v2915, %v2906
      %v2917 = vand.u32 %v2894, 65535
      %v2918 = vshrl.u32 %v2894, 16
      %v2919 = vand.u32 %v2889, 65535
      %v2920 = vshrl.u32 %v2889, 16
      %v2921 = vmul.u32 %v2917, %v2919
      %v2922 = vmul.u32 %v2917, %v2920
      %v2923 = vmul.u32 %v2918, %v2919
      %v2924 = vmul.u32 %v2918, %v2920
      %v2925 = vshll.u32 %v2922, 16
      %v2926 = vshrl.u32 %v2922, 16
      %v2927 = vshll.u32 %v2923, 16
      %v2928 = vshrl.u32 %v2923, 16
      %vm2929 = vc.u32 %v2921, %v2925
      %v2930 = vsel %vm2929, 1, 0
      %v2931 = vadd.s32 %v2921, %v2925
      %v2932 = vadd.s32 %v2924, %v2930
      %vm2933 = vc.u32 %v2931, %v2927
      %v2934 = vsel %vm2933, 1, 0
      %v2935 = vadd.s32 %v2931, %v2927
      %v2936 = vadd.s32 %v2932, %v2934
      %v2937 = vadd.s32 %v2936, %v2926
      %v2938 = vadd.s32 %v2937, %v2928
      %v2939 = vmul.u32 %v2894, %v2885
      %v2940 = vadd.s32 %v2916, %v2935
      %vm2941 = vc.u32 %v2916, %v2935
      %v2942 = vadd.s32 %v2938, 1
      %v2943 = vsel %vm2941, %v2942, %v2938
      %v2944 = vadd.s32 %v2939, %v2943
      %v2945 = vadd.s32 %v2944, 536870912
      %v2946 = vshrl.u32 %v2945, 30
      %v2947 = vshll.u32 %v2946, 30
      %v2948 = vsub.s32 %v2944, %v2947
      %vm2949 = vcmp.lt.s32.totalorder %v2948, 0
      %v2950 = vsub.s32 0, %v2948
      %v2951 = vsel %vm2949, %v2950, %v2948
      %v2952 = vclz %v2951
      %v2953 = vsub.s32 %v2952, 2
      %vm2954 = vcmp.gt.s32.totalorder 0, %v2953
      %v2955 = vsel %vm2954, 0, %v2953
      %v2956 = vsub.s32 32, %v2955
      %v2957 = vshll.u32 %v2948, %v2955
      %v2958 = vshrl.u32 %v2940, %v2956
      %v2959 = vor.u32 %v2957, %v2958
      %v2960 = vsub.s32 4294967266, %v2955
      %v2961 = vadd.s32 %v2960, 127
      %v2962 = vshll.u32 %v2961, 23
      %v2963 = vor.u32 4788187, %v2962
      %v2964 = vand.u32 2147483647, %v2963
      %v2966 = vcvt.s32.f32 %v2959
      %v2967 = vmul.f32 %v2966, %v2964
      %v2968 = vxor.u32 %v2967, 2147483648
      %v2969 = vsel %vm2848, %v2968, %v2967
      %v2970 = vsub.s32 4, %v2946
      %v2971 = vsel %vm2848, %v2970, %v2946
      %v2972 = vsel %vm2847, %v991, %v2969
      %v2973 = vsel %vm2847, 0, %v2971
      %v2974 = vmul.f32 %v2972, %v2972
      %v2975 = vmul.f32 %v2974, -0.001358992
      %v2976 = vadd.f32 %v2975, 0.041655596
      %v2977 = vmul.f32 %v2974, %v2976
      %v2978 = vadd.f32 %v2977, -0.4999988
      %v2979 = vmul.f32 %v2974, %v2978
      %v2980 = vadd.f32 1.0, %v2979
      %v2981 = vmul.f32 %v2972, %v2972
      %v2982 = vmul.f32 %v2981, -0.00019511016
      %v2983 = vadd.f32 %v2982, 0.008332121
      %v2984 = vmul.f32 %v2981, %v2983
      %v2985 = vadd.f32 %v2984, -0.16666654
      %v2986 = vmul.f32 %v2981, %v2985
      %v2987 = vadd.f32 %v2986, 1.0
      %v2988 = vmul.f32 %v2987, %v2972
      %vm2989 = vweird.f32 %v991
      %v2990 = vadd.s32 %v2973, 3
      %v2991 = vand.u32 %v2990, 3
      %vm2992 = vcmp.lt.s32.totalorder %v2991, 2
      %vm2993 = vcmp.eq.s32.totalorder %v2991, 0
      %v2994 = vxor.u32 %v2988, 2147483648
      %v2995 = vsel %vm2993, %v2980, %v2994
      %vm2996 = vcmp.eq.s32.totalorder %v2991, 2
      %v2997 = vxor.u32 %v2980, 2147483648
      %v2998 = vsel %vm2996, %v2997, %v2988
      %v2999 = vsel %vm2992, %v2995, %v2998
      %v3000 = vsel %vm2989, nan, %v2999
      %v3001 = vand.u32 2147483647, %v992
      %vm3002 = vcmp.le.f32.partialorder %v3001, 0.7853982
      %vm3003 = vcmp.lt.s32.totalorder %v992, 0
      %v3004 = vand.u32 %v992, 2139095040
      %v3005 = vshrl.u32 %v3004, 23
      %v3006 = vsub.s32 %v3005, 127
      %v3007 = vand.u32 2147483647, %v992
      %v3008 = vand.u32 %v3007, 8388607
      %v3009 = vor.u32 %v3008, 8388608
      %v3010 = vsub.s32 0, %v3009
      %v3011 = vadd.s32 %v3006, 1
      %vm3012 = vcmp.gt.s32.totalorder %v3011, 0
      %v3013 = vsel %vm3012, %v3011, 0
      %v3014 = vshrl.u32 %v3013, 5
      %v3015 = vand.u32 %v3013, 31
      %v3016 = vsub.s32 32, %v3015
      %v3017 = vshrl.u32 683565275, %v3016
      %v3018 = vshll.u32 683565275, %v3015
      %v3019 = vshrl.u32 2475754826, %v3016
      %v3020 = vor.u32 %v3018, %v3019
      %v3021 = vshll.u32 2475754826, %v3015
      %v3022 = vshrl.u32 2131351028, %v3016
      %v3023 = vor.u32 %v3021, %v3022
      %v3024 = vshll.u32 2131351028, %v3015
      %v3025 = vshrl.u32 2102212464, %v3016
      %v3026 = vor.u32 %v3024, %v3025
      %v3027 = vshll.u32 2102212464, %v3015
      %v3028 = vshrl.u32 920167782, %v3016
      %v3029 = vor.u32 %v3027, %v3028
      %v3030 = vshll.u32 920167782, %v3015
      %v3031 = vshrl.u32 1326507024, %v3016
      %v3032 = vor.u32 %v3030, %v3031
      %vm3033 = vcmp.lt.s32.totalorder %v3014, 1
      %vm3034 = vcmp.lt.s32.totalorder %v3014, 2
      %vm3035 = vcmp.lt.s32.totalorder %v3014, 3
      %vm3036 = vcmp.lt.s32.totalorder %v3014, 4
      %v3037 = vsel %vm3033, %v3017, %v3020
      %v3038 = vsel %vm3036, %v3026, 2102212464
      %v3039 = vsel %vm3035, %v3023, %v3038
      %v3040 = vsel %vm3034, %v3037, %v3039
      %v3041 = vsel %vm3033, %v3020, %v3023
      %v3042 = vsel %vm3036, %v3029, 920167782
      %v3043 = vsel %vm3035, %v3026, %v3042
      %v3044 = vsel %vm3034, %v3041, %v3043
      %v3045 = vsel %vm3033, %v3023, %v3026
      %v3046 = vsel %vm3036, %v3032, 1326507024
      %v3047 = vsel %vm3035, %v3029, %v3046
      %v3048 = vsel %vm3034, %v3045, %v3047
      %v3049 = vshll.u32 %v3009, 8
      %v3050 = vand.u32 %v3049, 65535
      %v3051 = vshrl.u32 %v3049, 16
      %v3052 = vand.u32 %v3048, 65535
      %v3053 = vshrl.u32 %v3048, 16
      %v3054 = vmul.u32 %v3050, %v3052
      %v3055 = vmul.u32 %v3050, %v3053
      %v3056 = vmul.u32 %v3051, %v3052
      %v3057 = vmul.u32 %v3051, %v3053
      %v3058 = vshll.u32 %v3055, 16
      %v3059 = vshrl.u32 %v3055, 16
      %v3060 = vshll.u32 %v3056, 16
      %v3061 = vshrl.u32 %v3056, 16
      %vm3062 = vc.u32 %v3054, %v3058
      %v3063 = vsel %vm3062, 1, 0
      %v3064 = vadd.s32 %v3054, %v3058
      %v3065 = vadd.s32 %v3057, %v3063
      %vm3066 = vc.u32 %v3064, %v3060
      %v3067 = vsel %vm3066, 1, 0
      %v3068 = vadd.s32 %v3064, %v3060
      %v3069 = vadd.s32 %v3065, %v3067
      %v3070 = vadd.s32 %v3069, %v3059
      %v3071 = vadd.s32 %v3070, %v3061
      %v3072 = vand.u32 %v3049, 65535
      %v3073 = vshrl.u32 %v3049, 16
      %v3074 = vand.u32 %v3044, 65535
      %v3075 = vshrl.u32 %v3044, 16
      %v3076 = vmul.u32 %v3072, %v3074
      %v3077 = vmul.u32 %v3072, %v3075
      %v3078 = vmul.u32 %v3073, %v3074
      %v3079 = vmul.u32 %v3073, %v3075
      %v3080 = vshll.u32 %v3077, 16
      %v3081 = vshrl.u32 %v3077, 16
      %v3082 = vshll.u32 %v3078, 16
      %v3083 = vshrl.u32 %v3078, 16
      %vm3084 = vc.u32 %v3076, %v3080
      %v3085 = vsel %vm3084, 1, 0
      %v3086 = vadd.s32 %v3076, %v3080
      %v3087 = vadd.s32 %v3079, %v3085
      %vm3088 = vc.u32 %v3086, %v3082
      %v3089 = vsel %vm3088, 1, 0
      %v3090 = vadd.s32 %v3086, %v3082
      %v3091 = vadd.s32 %v3087, %v3089
      %v3092 = vadd.s32 %v3091, %v3081
      %v3093 = vadd.s32 %v3092, %v3083
      %v3094 = vmul.u32 %v3049, %v3040
      %v3095 = vadd.s32 %v3071, %v3090
      %vm3096 = vc.u32 %v3071, %v3090
      %v3097 = vadd.s32 %v3093, 1
      %v3098 = vsel %vm3096, %v3097, %v3093
      %v3099 = vadd.s32 %v3094, %v3098
      %v3100 = vadd.s32 %v3099, 536870912
      %v3101 = vshrl.u32 %v3100, 30
      %v3102 = vshll.u32 %v3101, 30
      %v3103 = vsub.s32 %v3099, %v3102
      %vm3104 = vcmp.lt.s32.totalorder %v3103, 0
      %v3105 = vsub.s32 0, %v3103
      %v3106 = vsel %vm3104, %v3105, %v3103
      %v3107 = vclz %v3106
      %v3108 = vsub.s32 %v3107, 2
      %vm3109 = vcmp.gt.s32.totalorder 0, %v3108
      %v3110 = vsel %vm3109, 0, %v3108
      %v3111 = vsub.s32 32, %v3110
      %v3112 = vshll.u32 %v3103, %v3110
      %v3113 = vshrl.u32 %v3095, %v3111
      %v3114 = vor.u32 %v3112, %v3113
      %v3115 = vsub.s32 4294967266, %v3110
      %v3116 = vadd.s32 %v3115, 127
      %v3117 = vshll.u32 %v3116, 23
      %v3118 = vor.u32 4788187, %v3117
      %v3119 = vand.u32 2147483647, %v3118
      %v3121 = vcvt.s32.f32 %v3114
      %v3122 = vmul.f32 %v3121, %v3119
      %v3123 = vxor.u32 %v3122, 2147483648
      %v3124 = vsel %vm3003, %v3123, %v3122
      %v3125 = vsub.s32 4, %v3101
      %v3126 = vsel %vm3003, %v3125, %v3101
      %v3127 = vsel %vm3002, %v992, %v3124
      %v3128 = vsel %vm3002, 0, %v3126
      %v3129 = vmul.f32 %v3127, %v3127
      %v3130 = vmul.f32 %v3129, -0.001358992
      %v3131 = vadd.f32 %v3130, 0.041655596
      %v3132 = vmul.f32 %v3129, %v3131
      %v3133 = vadd.f32 %v3132, -0.4999988
      %v3134 = vmul.f32 %v3129, %v3133
      %v3135 = vadd.f32 1.0, %v3134
      %v3136 = vmul.f32 %v3127, %v3127
      %v3137 = vmul.f32 %v3136, -0.00019511016
      %v3138 = vadd.f32 %v3137, 0.008332121
      %v3139 = vmul.f32 %v3136, %v3138
      %v3140 = vadd.f32 %v3139, -0.16666654
      %v3141 = vmul.f32 %v3136, %v3140
      %v3142 = vadd.f32 %v3141, 1.0
      %v3143 = vmul.f32 %v3142, %v3127
      %vm3144 = vweird.f32 %v992
      %v3145 = vadd.s32 %v3128, 3
      %v3146 = vand.u32 %v3145, 3
      %vm3147 = vcmp.lt.s32.totalorder %v3146, 2
      %vm3148 = vcmp.eq.s32.totalorder %v3146, 0
      %v3149 = vxor.u32 %v3143, 2147483648
      %v3150 = vsel %vm3148, %v3135, %v3149
      %vm3151 = vcmp.eq.s32.totalorder %v3146, 2
      %v3152 = vxor.u32 %v3135, 2147483648
      %v3153 = vsel %vm3151, %v3152, %v3143
      %v3154 = vsel %vm3147, %v3150, %v3153
      %v3155 = vsel %vm3144, nan, %v3154
      %v3156 = vld [vmem:[%s6] sm:$0xf]
      %v3157 = vld [vmem:[%s6 + $0x4] sm:$0xf]
      %v3158 = vld [vmem:[%s6 + $0x8] sm:$0xf]
      %v3159 = vld [vmem:[%s6 + $0xc] sm:$0xf]
      %v3160 = vld [vmem:[%s6 + $0x10] sm:$0xf]
      %v3161 = vld [vmem:[%s6 + $0x14] sm:$0xf]
      %v3162 = vld [vmem:[%s6 + $0x18] sm:$0x7]
      %v3163 = vld [vmem:[%s7] sm:$0xf]
      %v3164 = vld [vmem:[%s7 + $0x4] sm:$0xf]
      %v3165 = vld [vmem:[%s7 + $0x8] sm:$0xf]
      %v3166 = vld [vmem:[%s7 + $0xc] sm:$0xf]
      %v3167 = vld [vmem:[%s7 + $0x10] sm:$0xf]
      %v3168 = vld [vmem:[%s7 + $0x14] sm:$0xf]
      %v3169 = vld [vmem:[%s7 + $0x18] sm:$0x7]
      %v3170 = vunpack.c.l.bf16 %v3156
      %v3171 = vunpack.c.l.bf16 %v3157
      %v3172 = vunpack.c.l.bf16 %v3158
      %v3173 = vunpack.c.l.bf16 %v3159
      %v3174 = vunpack.c.l.bf16 %v3160
      %v3175 = vunpack.c.l.bf16 %v3161
      %v3176 = vunpack.c.l.bf16 %v3162
      %3178 = vset.pattern.permute.xlu0 0
      %3179 = vperm.xlu0 %3178, %v1146
      %v3180 = vpop.permute.xlu0 %3179
      %3183 = vset.pattern.permute.xlu0 0
      %3184 = vperm.xlu0 %3183, %v1300
      %v3185 = vpop.permute.xlu0 %3184
      %3188 = vset.pattern.permute.xlu0 0
      %3189 = vperm.xlu0 %3188, %v1454
      %v3190 = vpop.permute.xlu0 %3189
      %3193 = vset.pattern.permute.xlu0 0
      %3194 = vperm.xlu0 %3193, %v1608
      %v3195 = vpop.permute.xlu0 %3194
      %3198 = vset.pattern.permute.xlu0 0
      %3199 = vperm.xlu0 %3198, %v1762
      %v3200 = vpop.permute.xlu0 %3199
      %3203 = vset.pattern.permute.xlu0 0
      %3204 = vperm.xlu0 %3203, %v1916
      %v3205 = vpop.permute.xlu0 %3204
      %3208 = vset.pattern.permute.xlu0 0
      %3209 = vperm.xlu0 %3208, %v2070
      %v3210 = vpop.permute.xlu0 %3209
      %v3212 = vmul.f32 %v3180, %v3170
      %v3213 = vmul.f32 %v3185, %v3171
      %v3214 = vmul.f32 %v3190, %v3172
      %v3215 = vmul.f32 %v3195, %v3173
      %v3216 = vmul.f32 %v3200, %v3174
      %v3217 = vmul.f32 %v3205, %v3175
      %v3218 = vmul.f32 %v3210, %v3176
      %v3219 = vunpack.c.l.bf16 %v3163
      %v3220 = vunpack.c.l.bf16 %v3164
      %v3221 = vunpack.c.l.bf16 %v3165
      %v3222 = vunpack.c.l.bf16 %v3166
      %v3223 = vunpack.c.l.bf16 %v3167
      %v3224 = vunpack.c.l.bf16 %v3168
      %v3225 = vunpack.c.l.bf16 %v3169
      %3227 = vset.pattern.permute.xlu0 0
      %3228 = vperm.xlu0 %3227, %v2225
      %v3229 = vpop.permute.xlu0 %3228
      %3232 = vset.pattern.permute.xlu0 0
      %3233 = vperm.xlu0 %3232, %v2380
      %v3234 = vpop.permute.xlu0 %3233
      %3237 = vset.pattern.permute.xlu0 0
      %3238 = vperm.xlu0 %3237, %v2535
      %v3239 = vpop.permute.xlu0 %3238
      %3242 = vset.pattern.permute.xlu0 0
      %3243 = vperm.xlu0 %3242, %v2690
      %v3244 = vpop.permute.xlu0 %3243
      %3247 = vset.pattern.permute.xlu0 0
      %3248 = vperm.xlu0 %3247, %v2845
      %v3249 = vpop.permute.xlu0 %3248
      %3252 = vset.pattern.permute.xlu0 0
      %3253 = vperm.xlu0 %3252, %v3000
      %v3254 = vpop.permute.xlu0 %3253
      %3257 = vset.pattern.permute.xlu0 0
      %3258 = vperm.xlu0 %3257, %v3155
      %v3259 = vpop.permute.xlu0 %3258
      %v3261 = vmul.f32 %v3229, %v3219
      %v3262 = vmul.f32 %v3234, %v3220
      %v3263 = vmul.f32 %v3239, %v3221
      %v3264 = vmul.f32 %v3244, %v3222
      %v3265 = vmul.f32 %v3249, %v3223
      %v3266 = vmul.f32 %v3254, %v3224
      %v3267 = vmul.f32 %v3259, %v3225
      %v3268 = vadd.f32 %v3212, %v3261
      %v3269 = vadd.f32 %v3213, %v3262
      %v3270 = vadd.f32 %v3214, %v3263
      %v3271 = vadd.f32 %v3215, %v3264
      %v3272 = vadd.f32 %v3216, %v3265
      %v3273 = vadd.f32 %v3217, %v3266
      %v3274 = vadd.f32 %v3218, %v3267
      %v3275 = vld [vmem:[%s8] sm:$0xf]
      %v3276 = vld [vmem:[%s8 + $0x4] sm:$0xf]
      %v3277 = vld [vmem:[%s8 + $0x8] sm:$0xf]
      %v3278 = vld [vmem:[%s8 + $0xc] sm:$0xf]
      %v3279 = vpack.c.bf16 %v3269, %v3268
      %v3280 = vpack.c.bf16 %v3271, %v3270
      %v3281 = vpack.c.bf16 %v3273, %v3272
      %v3282 = vpack.c.bf16 %v3274, %v3274
      %v3287 = vunpack.c.l.b16 %v3275
      %v3288 = vunpack.c.l.b16 %v3276
      %v3289 = vunpack.c.l.b16 %v3277
      %v3290 = vunpack.c.l.b16 %v3278
      %v3291 = vpack.c.b16 %v3288, %v3287
      %v3292 = vpack.c.b16 %v3290, %v3289
      %vm3293 = vcmask 441344
      %v3295 = vsel %vm3293, %v3291, 0
      %v3298 = vsel %vm3293, %v3292, 0
      %vm3300 = vcmask 1042432
      %v3302 = vsel %vm3300, %v3282, 0
      %3304 = vmatpush.bf16.msra.mxu0 0
      %3305 = vmatpush.bf16.msra.mxu0 0
      %3306 = vmatpush.bf16.msra.mxu0 0
      %3307 = vmatpush.bf16.msra.mxu0 0
      %3308 = vmatpush.bf16.msra.mxu0 %v3302
      %3309 = vmatpush.bf16.msra.mxu0 %v3281
      %3310 = vmatpush.bf16.msra.mxu0 %v3280
      %3311 = vmatpush.bf16.msra.mxu0 %v3279
      %3312 = vmatmul.bf16.gmra.mxu0 %v3295
      %v3313 = vpop.f32.mrf.mxu0
      %v3314 = vadd.f32 0.0, %v3313
      %v3315 = vpop.f32.mrf.mxu0
      %v3316 = vadd.f32 0.0, %v3315
      %3317 = vmatmul.bf16.gmra.mxu0 %v3298
      %v3318 = vpop.f32.mrf.mxu0
      %v3319 = vadd.f32 0.0, %v3318
      %v3320 = vpop.f32.mrf.mxu0
      %v3321 = vadd.f32 0.0, %v3320
      %3322 = vdwg.mxu0
      %vm3323 = vcmask 220160
      %3324 = vst.msk [vmem:[%s334] sm:$0xff] %vm3323, %v3314
      %3325 = vst.msk [vmem:[%s334 + $0x8] sm:$0xff] %vm3323, %v3316
      %3326 = vst.msk [vmem:[%s334 + $0x10] sm:$0xff] %vm3323, %v3319
      %3327 = vst.msk [vmem:[%s334 + $0x18] sm:$0xff] %vm3323, %v3321
      %p3328 = scmp.lt.s32.totalorder %s20, 1
      %s3329 = scalar_select %p3328, %s20, 1
      %s3330 = smul.addr %s3329, 4
      %s3331 = smul.addr %s3330, 8
      %s3332 = scalar_lea.vmem %s9, %s3331
      // Predicated region
      $region57: #{cross_d_conv_forward.1} parent=55 // pred_check
        %p3333 = pneg %p232
      $region58: #{cross_d_conv_forward.1} parent=55 // pred_check_branch
        %3335 = sbr.rel (%p3333) target = $region60
      $region59: #{cross_d_conv_forward.1} parent=55 // pred_region
        _
      $region60: #{cross_d_conv_forward.1} parent=55 // pred_fallthru
        _
    $region56: #{cross_d_conv_forward.1} parent=5 // pred_fallthru
      _
    %p3336 = scmp.le.s32.totalorder 2, %s15
    // Predicated region
    $region61: #{cross_d_conv_forward.1} parent=5 // pred_check
      %p3337 = pneg %p3336
    $region62: #{cross_d_conv_forward.1} parent=5 // pred_check_branch
      %3339 = sbr.rel (%p3337) target = $region64
    $region63: #{cross_d_conv_forward.1} parent=5 // pred_region
      %s3340 = ssub.s32 %s15, 2
      // Predicated region
      $region65: #{cross_d_conv_forward.1} parent=63 // pred_check
        %p3341 = pneg %p238
      $region66: #{cross_d_conv_forward.1} parent=63 // pred_check_branch
        %3343 = sbr.rel (%p3341) target = $region68
      $region67: #{cross_d_conv_forward.1} parent=63 // pred_region
        %p3344 = scmp.lt.s32.totalorder %s21, 1
        %s3345 = scalar_select %p3344, %s21, 1
        %s3346 = smul.addr %s3345, 4
        %s3347 = smul.addr %s3346, 8
        %s3348 = scalar_lea.vmem %s9, %s3347
      $region68: #{cross_d_conv_forward.1} parent=63 // pred_fallthru
        _
    $region64: #{cross_d_conv_forward.1} parent=5 // pred_fallthru
      _
  $region6: #{cross_d_conv_forward.1} parent=0 // loop_footer
    %s19 = sadd.s32 1, %s15
  $region7: #{cross_d_conv_forward.1} parent=0 // loop_footer_branch
    %14 = sbr.rel target = $region3
  $region8: #{cross_d_conv_forward.1} parent=0 // loop_exit
    _

</llo_original>
